<compile_context>
chip_gen: v7x
topology: tpu7x:2x2x1
jax: 0.10.0
libtpu: 0.0.40
codegen_flags: <defaults>
</compile_context>

<pallas_src>
import functools

import jax
import jax.numpy as jnp
from jax.experimental import pallas as pl
from jax.experimental.pallas import tpu as pltpu

POOL_SIZE = 7          # num_bins per spatial axis (hard-coded 7 in the module)
CROP_DIM = 14          # hard-coded crop dim in the module
CROP = CROP_DIM // POOL_SIZE   # = 2 : per-bin crop resolution (2x2)


def _psroi_kernel(w_ref, img_ref, o_ref, *, num_rois, n_pts, num_bins, alpha):
    # w_ref:   (G, n_pts*R, H*W)  bf16  bilinear sampling weights (HW lane-dense)
    # img_ref: (G, alpha,   H*W)  bf16  per-bin channel slab      (HW lane-dense)
    # o_ref:   (R, G*alpha)       f32   lane-dense output slab
    #
    # One unrolled iteration per position-sensitive bin; the MXU stays fed
    # back-to-back with no grid-step drain between bins.
    for g in range(num_bins):
        w = w_ref[g]                                  # (n_pts*R, HW)
        xt = img_ref[g]                               # (alpha, HW)
        s = jax.lax.dot_general(
            w, xt,
            dimension_numbers=(((1,), (1,)), ((), ())),
            preferred_element_type=jnp.float32,
        )                                             # (n_pts*R, alpha) f32
        # max over the 2x2 crop points: single reshape-and-reduce.
        m = s.reshape(n_pts, num_rois, alpha).max(axis=0)   # (R, alpha)
        # place bin g's alpha channels at lane offset g*alpha (4-lane slices never
        # cross a 128-lane tile boundary since 128 % alpha == 0 here).
        o_ref[:, g * alpha:(g + 1) * alpha] = m


def _build_bilinear_weights(rois, H, W, pool_size, crop):
    """Return (G, crop*crop*R, H*W) weights; G = pool_size**2, bin g = bx*P + by.

    Row ordering inside a bin is point-major: row = (py*crop + px) * R + r.
    Implements TF crop_and_resize bilinear sampling with extrapolation_value=0.
    (crop is assumed > 1, as in the module where crop == 2.)
    """
    rois = rois.astype(jnp.float32)
    xmin, ymin, xmax, ymax = rois[:, 0], rois[:, 1], rois[:, 2], rois[:, 3]
    step_y = (ymax - ymin) / pool_size
    step_x = (xmax - xmin) / pool_size
    R = rois.shape[0]

    BX, BY = jnp.meshgrid(jnp.arange(pool_size), jnp.arange(pool_size), indexing="ij")
    BX = BX.reshape(-1).astype(jnp.float32)   # (G,)
    BY = BY.reshape(-1).astype(jnp.float32)   # (G,)

    y1 = ymin[None, :] + BY[:, None] * step_y[None, :]          # (G, R)
    y2 = ymin[None, :] + (BY[:, None] + 1.0) * step_y[None, :]
    x1 = xmin[None, :] + BX[:, None] * step_x[None, :]
    x2 = xmin[None, :] + (BX[:, None] + 1.0) * step_x[None, :]

    pts = jnp.arange(crop).astype(jnp.float32)                  # (crop,)
    # in_y[g, r, py] , in_x[g, r, px]  (crop > 1 branch of crop_and_resize)
    in_y = (y1[..., None] + pts[None, None, :] * (y2 - y1)[..., None] / (crop - 1)) * (H - 1)
    in_x = (x1[..., None] + pts[None, None, :] * (x2 - x1)[..., None] / (crop - 1)) * (W - 1)

    def axis_weights(coord, size):
        valid = (coord >= 0.0) & (coord <= size - 1.0)
        top = jnp.floor(coord)
        bot = jnp.ceil(coord)
        lerp = coord - top
        w_top = jax.nn.one_hot(top.astype(jnp.int32), size, dtype=jnp.float32) * (1.0 - lerp)[..., None]
        w_bot = jax.nn.one_hot(bot.astype(jnp.int32), size, dtype=jnp.float32) * lerp[..., None]
        return (w_top + w_bot) * valid[..., None].astype(jnp.float32)   # (G, R, crop, size)

    wy = axis_weights(in_y, H)   # (G, R, crop, H)
    wx = axis_weights(in_x, W)   # (G, R, crop, W)

    # full[g, r, py, px, h, w] = wy[g,r,py,h] * wx[g,r,px,w]
    full = wy[:, :, :, None, :, None] * wx[:, :, None, :, None, :]
    # -> (G, py, px, R, H, W) -> (G, crop*crop*R, H*W)
    full = full.transpose(0, 2, 3, 1, 4, 5)
    G = pool_size * pool_size
    return full.reshape(G, crop * crop * R, H * W)


@functools.partial(jax.jit, static_argnames="pool_size")
def ps_roi_align_pool(img, rois, pool_size=POOL_SIZE):
    """img: (1, H, W, C) NHWC, C = pool_size**2 * alpha ; rois: (1, R, 4)."""
    _, H, W, C = img.shape
    R = rois.shape[1]
    G = pool_size * pool_size
    assert C % G == 0, "channels must be pool_size**2 * alpha"
    alpha = C // G
    n_pts = CROP * CROP

    # bf16 operands (f32 accumulation in-kernel): halves HBM->VMEM DMA bytes.
    w_bf = _build_bilinear_weights(rois[0], H, W, pool_size, CROP).astype(jnp.bfloat16)
    # image as (G, alpha, HW): HW = lane dim (dense 256 lanes) instead of alpha=4.
    img_t = (img[0].astype(jnp.float32)
             .reshape(H * W, G, alpha)
             .transpose(1, 2, 0)
             .astype(jnp.bfloat16))                               # (G, alpha, HW)

    out_dense = pl.pallas_call(
        functools.partial(_psroi_kernel, num_rois=R, n_pts=n_pts,
                          num_bins=G, alpha=alpha),
        out_shape=jax.ShapeDtypeStruct((R, G * alpha), jnp.float32),
        grid_spec=pltpu.PrefetchScalarGridSpec(
            num_scalar_prefetch=0,
            grid=(1,),                       # single invocation: no per-bin grid overhead
            in_specs=[
                pl.BlockSpec((G, n_pts * R, H * W), lambda i: (0, 0, 0)),
                pl.BlockSpec((G, alpha, H * W), lambda i: (0, 0, 0)),
            ],
            out_specs=pl.BlockSpec((R, G * alpha), lambda i: (0, 0)),
        ),
        compiler_params=pltpu.CompilerParams(dimension_semantics=("arbitrary",)),
    )(w_bf, img_t)

    # out_dense[r, g*alpha + a] with bin g = bx*pool_size + by
    return out_dense.reshape(1, R, pool_size, pool_size, alpha)


def _reference(img, rois, pool_size=POOL_SIZE):
    """Pure-JAX reference of the same PS-ROI-Align semantics (bf16 operands,
    f32 accumulation) for validation."""
    _, H, W, C = img.shape
    R = rois.shape[1]
    G = pool_size * pool_size
    alpha = C // G
    n_pts = CROP * CROP
    w = (_build_bilinear_weights(rois[0], H, W, pool_size, CROP)
         .astype(jnp.bfloat16).astype(jnp.float32))               # (G, n_pts*R, HW)
    xt = (img[0].astype(jnp.float32)
          .reshape(H * W, G, alpha)
          .transpose(1, 2, 0)
          .astype(jnp.bfloat16).astype(jnp.float32))              # (G, alpha, HW)
    s = jnp.einsum("gqh,gah->gqa", w, xt)                         # (G, n_pts*R, alpha)
    m = s.reshape(G, n_pts, R, alpha).max(axis=1)                 # (G, R, alpha)
    return m.transpose(1, 0, 2).reshape(1, R, pool_size, pool_size, alpha)


if __name__ == "__main__":
    key = jax.random.PRNGKey(0)
    k_img, k_xy, k_wh = jax.random.split(key, 3)

    num_rois = 8
    alpha = 4
    H = W = 16
    C = POOL_SIZE * POOL_SIZE * alpha  # 196

    img = jax.random.normal(k_img, (1, H, W, C), dtype=jnp.float32)

    xy = jax.random.uniform(k_xy, (num_rois, 2), minval=0.0, maxval=0.55)
    wh = jax.random.uniform(k_wh, (num_rois, 2), minval=0.25, maxval=0.45)
    xmin, ymin = xy[:, 0], xy[:, 1]
    xmax = jnp.minimum(xmin + wh[:, 0], 1.0)
    ymax = jnp.minimum(ymin + wh[:, 1], 1.0)
    rois = jnp.stack([xmin, ymin, xmax, ymax], axis=1)[None]     # (1, R, 4)

    out = jax.block_until_ready(ps_roi_align_pool(img, rois))

    ref = _reference(img, rois)
    assert out.shape == (1, num_rois, POOL_SIZE, POOL_SIZE, alpha)
    assert jnp.allclose(out, ref, atol=2e-3, rtol=2e-3), float(jnp.max(jnp.abs(out - ref)))

    print("KERNEL_OK")
</pallas_src>

<mosaic_0001>
module attributes {stable_mosaic.version = 11 : i64} {
  func.func @_psroi_kernel(%arg0: i32, %arg1: memref<49x32x256xbf16, #tpu.memory_space<vmem>>, %arg2: memref<49x4x256xbf16, #tpu.memory_space<vmem>>, %arg3: memref<8x196xf32, #tpu.memory_space<vmem>>) attributes {dimension_semantics = [#tpu.dimension_semantics<arbitrary>], iteration_bounds = array<i64: 1>, scalar_prefetch = 0 : i64, scratch_operands = 0 : i64, tpu.core_type = #tpu.core_type<tc>, window_params = [{pipeline_mode = #tpu.pipeline_mode<synchronous>, transform_indices = @transform_0, window_bounds = array<i64: 49, 32, 256>}, {pipeline_mode = #tpu.pipeline_mode<synchronous>, transform_indices = @transform_1, window_bounds = array<i64: 49, 4, 256>}, {pipeline_mode = #tpu.pipeline_mode<synchronous>, transform_indices = @transform_2, window_bounds = array<i64: 8, 196>}]} {
    %c0 = arith.constant 0 : index
    %c0_0 = arith.constant 0 : index
    %c0_1 = arith.constant 0 : index
    %0 = vector.load %arg1[%c0, %c0_0, %c0_1] : memref<49x32x256xbf16, #tpu.memory_space<vmem>>, vector<1x32x256xbf16>
    %1 = vector.shape_cast %0 : vector<1x32x256xbf16> to vector<32x256xbf16>
    %c0_2 = arith.constant 0 : index
    %c0_3 = arith.constant 0 : index
    %c0_4 = arith.constant 0 : index
    %2 = vector.load %arg2[%c0_2, %c0_3, %c0_4] : memref<49x4x256xbf16, #tpu.memory_space<vmem>>, vector<1x4x256xbf16>
    %3 = vector.shape_cast %2 : vector<1x4x256xbf16> to vector<4x256xbf16>
    %cst = arith.constant dense<0.000000e+00> : vector<32x4xf32>
    %4 = tpu.matmul %1, %3, %cst {dimension_numbers = #tpu.dot_dimension_numbers<[1], [1], [0], [0], [0, 0, 1, 0], [], []>} : vector<32x256xbf16>, vector<4x256xbf16>, vector<32x4xf32> -> vector<32x4xf32>
    %5 = vector.shape_cast %4 : vector<32x4xf32> to vector<4x8x4xf32>
    %cst_5 = arith.constant dense<0xFF800000> : vector<8x4xf32>
    %6 = vector.multi_reduction <maximumf>, %5, %cst_5 [0] : vector<4x8x4xf32> to vector<8x4xf32>
    %c0_6 = arith.constant 0 : index
    %c0_7 = arith.constant 0 : index
    %7 = vector.load %arg3[%c0_6, %c0_7] : memref<8x196xf32, #tpu.memory_space<vmem>>, vector<8x4xf32>
    tpu.vector_store %arg3[%c0_6, %c0_7], %6 {strides = array<i32>} : memref<8x196xf32, #tpu.memory_space<vmem>>, vector<8x4xf32>,
    %c1 = arith.constant 1 : index
    %c0_8 = arith.constant 0 : index
    %c0_9 = arith.constant 0 : index
    %8 = vector.load %arg1[%c1, %c0_8, %c0_9] : memref<49x32x256xbf16, #tpu.memory_space<vmem>>, vector<1x32x256xbf16>
    %9 = vector.shape_cast %8 : vector<1x32x256xbf16> to vector<32x256xbf16>
    %c1_10 = arith.constant 1 : index
    %c0_11 = arith.constant 0 : index
    %c0_12 = arith.constant 0 : index
    %10 = vector.load %arg2[%c1_10, %c0_11, %c0_12] : memref<49x4x256xbf16, #tpu.memory_space<vmem>>, vector<1x4x256xbf16>
    %11 = vector.shape_cast %10 : vector<1x4x256xbf16> to vector<4x256xbf16>
    %cst_13 = arith.constant dense<0.000000e+00> : vector<32x4xf32>
    %12 = tpu.matmul %9, %11, %cst_13 {dimension_numbers = #tpu.dot_dimension_numbers<[1], [1], [0], [0], [0, 0, 1, 0], [], []>} : vector<32x256xbf16>, vector<4x256xbf16>, vector<32x4xf32> -> vector<32x4xf32>
    %13 = vector.shape_cast %12 : vector<32x4xf32> to vector<4x8x4xf32>
    %cst_14 = arith.constant dense<0xFF800000> : vector<8x4xf32>
    %14 = vector.multi_reduction <maximumf>, %13, %cst_14 [0] : vector<4x8x4xf32> to vector<8x4xf32>
    %c0_15 = arith.constant 0 : index
    %c4 = arith.constant 4 : index
    %15 = vector.load %arg3[%c0_15, %c4] : memref<8x196xf32, #tpu.memory_space<vmem>>, vector<8x4xf32>
    tpu.vector_store %arg3[%c0_15, %c4], %14 {strides = array<i32>} : memref<8x196xf32, #tpu.memory_space<vmem>>, vector<8x4xf32>,
    %c2 = arith.constant 2 : index
    %c0_16 = arith.constant 0 : index
    %c0_17 = arith.constant 0 : index
    %16 = vector.load %arg1[%c2, %c0_16, %c0_17] : memref<49x32x256xbf16, #tpu.memory_space<vmem>>, vector<1x32x256xbf16>
    %17 = vector.shape_cast %16 : vector<1x32x256xbf16> to vector<32x256xbf16>
    %c2_18 = arith.constant 2 : index
    %c0_19 = arith.constant 0 : index
    %c0_20 = arith.constant 0 : index
    %18 = vector.load %arg2[%c2_18, %c0_19, %c0_20] : memref<49x4x256xbf16, #tpu.memory_space<vmem>>, vector<1x4x256xbf16>
    %19 = vector.shape_cast %18 : vector<1x4x256xbf16> to vector<4x256xbf16>
    %cst_21 = arith.constant dense<0.000000e+00> : vector<32x4xf32>
    %20 = tpu.matmul %17, %19, %cst_21 {dimension_numbers = #tpu.dot_dimension_numbers<[1], [1], [0], [0], [0, 0, 1, 0], [], []>} : vector<32x256xbf16>, vector<4x256xbf16>, vector<32x4xf32> -> vector<32x4xf32>
    %21 = vector.shape_cast %20 : vector<32x4xf32> to vector<4x8x4xf32>
    %cst_22 = arith.constant dense<0xFF800000> : vector<8x4xf32>
    %22 = vector.multi_reduction <maximumf>, %21, %cst_22 [0] : vector<4x8x4xf32> to vector<8x4xf32>
    %c0_23 = arith.constant 0 : index
    %c8 = arith.constant 8 : index
    %23 = vector.load %arg3[%c0_23, %c8] : memref<8x196xf32, #tpu.memory_space<vmem>>, vector<8x4xf32>
    tpu.vector_store %arg3[%c0_23, %c8], %22 {strides = array<i32>} : memref<8x196xf32, #tpu.memory_space<vmem>>, vector<8x4xf32>,
    %c3 = arith.constant 3 : index
    %c0_24 = arith.constant 0 : index
    %c0_25 = arith.constant 0 : index
    %24 = vector.load %arg1[%c3, %c0_24, %c0_25] : memref<49x32x256xbf16, #tpu.memory_space<vmem>>, vector<1x32x256xbf16>
    %25 = vector.shape_cast %24 : vector<1x32x256xbf16> to vector<32x256xbf16>
    %c3_26 = arith.constant 3 : index
    %c0_27 = arith.constant 0 : index
    %c0_28 = arith.constant 0 : index
    %26 = vector.load %arg2[%c3_26, %c0_27, %c0_28] : memref<49x4x256xbf16, #tpu.memory_space<vmem>>, vector<1x4x256xbf16>
    %27 = vector.shape_cast %26 : vector<1x4x256xbf16> to vector<4x256xbf16>
    %cst_29 = arith.constant dense<0.000000e+00> : vector<32x4xf32>
    %28 = tpu.matmul %25, %27, %cst_29 {dimension_numbers = #tpu.dot_dimension_numbers<[1], [1], [0], [0], [0, 0, 1, 0], [], []>} : vector<32x256xbf16>, vector<4x256xbf16>, vector<32x4xf32> -> vector<32x4xf32>
    %29 = vector.shape_cast %28 : vector<32x4xf32> to vector<4x8x4xf32>
    %cst_30 = arith.constant dense<0xFF800000> : vector<8x4xf32>
    %30 = vector.multi_reduction <maximumf>, %29, %cst_30 [0] : vector<4x8x4xf32> to vector<8x4xf32>
    %c0_31 = arith.constant 0 : index
    %c12 = arith.constant 12 : index
    %31 = vector.load %arg3[%c0_31, %c12] : memref<8x196xf32, #tpu.memory_space<vmem>>, vector<8x4xf32>
    tpu.vector_store %arg3[%c0_31, %c12], %30 {strides = array<i32>} : memref<8x196xf32, #tpu.memory_space<vmem>>, vector<8x4xf32>,
    %c4_32 = arith.constant 4 : index
    %c0_33 = arith.constant 0 : index
    %c0_34 = arith.constant 0 : index
    %32 = vector.load %arg1[%c4_32, %c0_33, %c0_34] : memref<49x32x256xbf16, #tpu.memory_space<vmem>>, vector<1x32x256xbf16>
    %33 = vector.shape_cast %32 : vector<1x32x256xbf16> to vector<32x256xbf16>
    %c4_35 = arith.constant 4 : index
    %c0_36 = arith.constant 0 : index
    %c0_37 = arith.constant 0 : index
    %34 = vector.load %arg2[%c4_35, %c0_36, %c0_37] : memref<49x4x256xbf16, #tpu.memory_space<vmem>>, vector<1x4x256xbf16>
    %35 = vector.shape_cast %34 : vector<1x4x256xbf16> to vector<4x256xbf16>
    %cst_38 = arith.constant dense<0.000000e+00> : vector<32x4xf32>
    %36 = tpu.matmul %33, %35, %cst_38 {dimension_numbers = #tpu.dot_dimension_numbers<[1], [1], [0], [0], [0, 0, 1, 0], [], []>} : vector<32x256xbf16>, vector<4x256xbf16>, vector<32x4xf32> -> vector<32x4xf32>
    %37 = vector.shape_cast %36 : vector<32x4xf32> to vector<4x8x4xf32>
    %cst_39 = arith.constant dense<0xFF800000> : vector<8x4xf32>
    %38 = vector.multi_reduction <maximumf>, %37, %cst_39 [0] : vector<4x8x4xf32> to vector<8x4xf32>
    %c0_40 = arith.constant 0 : index
    %c16 = arith.constant 16 : index
    %39 = vector.load %arg3[%c0_40, %c16] : memref<8x196xf32, #tpu.memory_space<vmem>>, vector<8x4xf32>
    tpu.vector_store %arg3[%c0_40, %c16], %38 {strides = array<i32>} : memref<8x196xf32, #tpu.memory_space<vmem>>, vector<8x4xf32>,
    %c5 = arith.constant 5 : index
    %c0_41 = arith.constant 0 : index
    %c0_42 = arith.constant 0 : index
    %40 = vector.load %arg1[%c5, %c0_41, %c0_42] : memref<49x32x256xbf16, #tpu.memory_space<vmem>>, vector<1x32x256xbf16>
    %41 = vector.shape_cast %40 : vector<1x32x256xbf16> to vector<32x256xbf16>
    %c5_43 = arith.constant 5 : index
    %c0_44 = arith.constant 0 : index
    %c0_45 = arith.constant 0 : index
    %42 = vector.load %arg2[%c5_43, %c0_44, %c0_45] : memref<49x4x256xbf16, #tpu.memory_space<vmem>>, vector<1x4x256xbf16>
    %43 = vector.shape_cast %42 : vector<1x4x256xbf16> to vector<4x256xbf16>
    %cst_46 = arith.constant dense<0.000000e+00> : vector<32x4xf32>
    %44 = tpu.matmul %41, %43, %cst_46 {dimension_numbers = #tpu.dot_dimension_numbers<[1], [1], [0], [0], [0, 0, 1, 0], [], []>} : vector<32x256xbf16>, vector<4x256xbf16>, vector<32x4xf32> -> vector<32x4xf32>
    %45 = vector.shape_cast %44 : vector<32x4xf32> to vector<4x8x4xf32>
    %cst_47 = arith.constant dense<0xFF800000> : vector<8x4xf32>
    %46 = vector.multi_reduction <maximumf>, %45, %cst_47 [0] : vector<4x8x4xf32> to vector<8x4xf32>
    %c0_48 = arith.constant 0 : index
    %c20 = arith.constant 20 : index
    %47 = vector.load %arg3[%c0_48, %c20] : memref<8x196xf32, #tpu.memory_space<vmem>>, vector<8x4xf32>
    tpu.vector_store %arg3[%c0_48, %c20], %46 {strides = array<i32>} : memref<8x196xf32, #tpu.memory_space<vmem>>, vector<8x4xf32>,
    %c6 = arith.constant 6 : index
    %c0_49 = arith.constant 0 : index
    %c0_50 = arith.constant 0 : index
    %48 = vector.load %arg1[%c6, %c0_49, %c0_50] : memref<49x32x256xbf16, #tpu.memory_space<vmem>>, vector<1x32x256xbf16>
    %49 = vector.shape_cast %48 : vector<1x32x256xbf16> to vector<32x256xbf16>
    %c6_51 = arith.constant 6 : index
    %c0_52 = arith.constant 0 : index
    %c0_53 = arith.constant 0 : index
    %50 = vector.load %arg2[%c6_51, %c0_52, %c0_53] : memref<49x4x256xbf16, #tpu.memory_space<vmem>>, vector<1x4x256xbf16>
    %51 = vector.shape_cast %50 : vector<1x4x256xbf16> to vector<4x256xbf16>
    %cst_54 = arith.constant dense<0.000000e+00> : vector<32x4xf32>
    %52 = tpu.matmul %49, %51, %cst_54 {dimension_numbers = #tpu.dot_dimension_numbers<[1], [1], [0], [0], [0, 0, 1, 0], [], []>} : vector<32x256xbf16>, vector<4x256xbf16>, vector<32x4xf32> -> vector<32x4xf32>
    %53 = vector.shape_cast %52 : vector<32x4xf32> to vector<4x8x4xf32>
    %cst_55 = arith.constant dense<0xFF800000> : vector<8x4xf32>
    %54 = vector.multi_reduction <maximumf>, %53, %cst_55 [0] : vector<4x8x4xf32> to vector<8x4xf32>
    %c0_56 = arith.constant 0 : index
    %c24 = arith.constant 24 : index
    %55 = vector.load %arg3[%c0_56, %c24] : memref<8x196xf32, #tpu.memory_space<vmem>>, vector<8x4xf32>
    tpu.vector_store %arg3[%c0_56, %c24], %54 {strides = array<i32>} : memref<8x196xf32, #tpu.memory_space<vmem>>, vector<8x4xf32>,
    %c7 = arith.constant 7 : index
    %c0_57 = arith.constant 0 : index
    %c0_58 = arith.constant 0 : index
    %56 = vector.load %arg1[%c7, %c0_57, %c0_58] : memref<49x32x256xbf16, #tpu.memory_space<vmem>>, vector<1x32x256xbf16>
    %57 = vector.shape_cast %56 : vector<1x32x256xbf16> to vector<32x256xbf16>
    %c7_59 = arith.constant 7 : index
    %c0_60 = arith.constant 0 : index
    %c0_61 = arith.constant 0 : index
    %58 = vector.load %arg2[%c7_59, %c0_60, %c0_61] : memref<49x4x256xbf16, #tpu.memory_space<vmem>>, vector<1x4x256xbf16>
    %59 = vector.shape_cast %58 : vector<1x4x256xbf16> to vector<4x256xbf16>
    %cst_62 = arith.constant dense<0.000000e+00> : vector<32x4xf32>
    %60 = tpu.matmul %57, %59, %cst_62 {dimension_numbers = #tpu.dot_dimension_numbers<[1], [1], [0], [0], [0, 0, 1, 0], [], []>} : vector<32x256xbf16>, vector<4x256xbf16>, vector<32x4xf32> -> vector<32x4xf32>
    %61 = vector.shape_cast %60 : vector<32x4xf32> to vector<4x8x4xf32>
    %cst_63 = arith.constant dense<0xFF800000> : vector<8x4xf32>
    %62 = vector.multi_reduction <maximumf>, %61, %cst_63 [0] : vector<4x8x4xf32> to vector<8x4xf32>
    %c0_64 = arith.constant 0 : index
    %c28 = arith.constant 28 : index
    %63 = vector.load %arg3[%c0_64, %c28] : memref<8x196xf32, #tpu.memory_space<vmem>>, vector<8x4xf32>
    tpu.vector_store %arg3[%c0_64, %c28], %62 {strides = array<i32>} : memref<8x196xf32, #tpu.memory_space<vmem>>, vector<8x4xf32>,
    %c8_65 = arith.constant 8 : index
    %c0_66 = arith.constant 0 : index
    %c0_67 = arith.constant 0 : index
    %64 = vector.load %arg1[%c8_65, %c0_66, %c0_67] : memref<49x32x256xbf16, #tpu.memory_space<vmem>>, vector<1x32x256xbf16>
    %65 = vector.shape_cast %64 : vector<1x32x256xbf16> to vector<32x256xbf16>
    %c8_68 = arith.constant 8 : index
    %c0_69 = arith.constant 0 : index
    %c0_70 = arith.constant 0 : index
    %66 = vector.load %arg2[%c8_68, %c0_69, %c0_70] : memref<49x4x256xbf16, #tpu.memory_space<vmem>>, vector<1x4x256xbf16>
    %67 = vector.shape_cast %66 : vector<1x4x256xbf16> to vector<4x256xbf16>
    %cst_71 = arith.constant dense<0.000000e+00> : vector<32x4xf32>
    %68 = tpu.matmul %65, %67, %cst_71 {dimension_numbers = #tpu.dot_dimension_numbers<[1], [1], [0], [0], [0, 0, 1, 0], [], []>} : vector<32x256xbf16>, vector<4x256xbf16>, vector<32x4xf32> -> vector<32x4xf32>
    %69 = vector.shape_cast %68 : vector<32x4xf32> to vector<4x8x4xf32>
    %cst_72 = arith.constant dense<0xFF800000> : vector<8x4xf32>
    %70 = vector.multi_reduction <maximumf>, %69, %cst_72 [0] : vector<4x8x4xf32> to vector<8x4xf32>
    %c0_73 = arith.constant 0 : index
    %c32 = arith.constant 32 : index
    %71 = vector.load %arg3[%c0_73, %c32] : memref<8x196xf32, #tpu.memory_space<vmem>>, vector<8x4xf32>
    tpu.vector_store %arg3[%c0_73, %c32], %70 {strides = array<i32>} : memref<8x196xf32, #tpu.memory_space<vmem>>, vector<8x4xf32>,
    %c9 = arith.constant 9 : index
    %c0_74 = arith.constant 0 : index
    %c0_75 = arith.constant 0 : index
    %72 = vector.load %arg1[%c9, %c0_74, %c0_75] : memref<49x32x256xbf16, #tpu.memory_space<vmem>>, vector<1x32x256xbf16>
    %73 = vector.shape_cast %72 : vector<1x32x256xbf16> to vector<32x256xbf16>
    %c9_76 = arith.constant 9 : index
    %c0_77 = arith.constant 0 : index
    %c0_78 = arith.constant 0 : index
    %74 = vector.load %arg2[%c9_76, %c0_77, %c0_78] : memref<49x4x256xbf16, #tpu.memory_space<vmem>>, vector<1x4x256xbf16>
    %75 = vector.shape_cast %74 : vector<1x4x256xbf16> to vector<4x256xbf16>
    %cst_79 = arith.constant dense<0.000000e+00> : vector<32x4xf32>
    %76 = tpu.matmul %73, %75, %cst_79 {dimension_numbers = #tpu.dot_dimension_numbers<[1], [1], [0], [0], [0, 0, 1, 0], [], []>} : vector<32x256xbf16>, vector<4x256xbf16>, vector<32x4xf32> -> vector<32x4xf32>
    %77 = vector.shape_cast %76 : vector<32x4xf32> to vector<4x8x4xf32>
    %cst_80 = arith.constant dense<0xFF800000> : vector<8x4xf32>
    %78 = vector.multi_reduction <maximumf>, %77, %cst_80 [0] : vector<4x8x4xf32> to vector<8x4xf32>
    %c0_81 = arith.constant 0 : index
    %c36 = arith.constant 36 : index
    %79 = vector.load %arg3[%c0_81, %c36] : memref<8x196xf32, #tpu.memory_space<vmem>>, vector<8x4xf32>
    tpu.vector_store %arg3[%c0_81, %c36], %78 {strides = array<i32>} : memref<8x196xf32, #tpu.memory_space<vmem>>, vector<8x4xf32>,
    %c10 = arith.constant 10 : index
    %c0_82 = arith.constant 0 : index
    %c0_83 = arith.constant 0 : index
    %80 = vector.load %arg1[%c10, %c0_82, %c0_83] : memref<49x32x256xbf16, #tpu.memory_space<vmem>>, vector<1x32x256xbf16>
    %81 = vector.shape_cast %80 : vector<1x32x256xbf16> to vector<32x256xbf16>
    %c10_84 = arith.constant 10 : index
    %c0_85 = arith.constant 0 : index
    %c0_86 = arith.constant 0 : index
    %82 = vector.load %arg2[%c10_84, %c0_85, %c0_86] : memref<49x4x256xbf16, #tpu.memory_space<vmem>>, vector<1x4x256xbf16>
    %83 = vector.shape_cast %82 : vector<1x4x256xbf16> to vector<4x256xbf16>
    %cst_87 = arith.constant dense<0.000000e+00> : vector<32x4xf32>
    %84 = tpu.matmul %81, %83, %cst_87 {dimension_numbers = #tpu.dot_dimension_numbers<[1], [1], [0], [0], [0, 0, 1, 0], [], []>} : vector<32x256xbf16>, vector<4x256xbf16>, vector<32x4xf32> -> vector<32x4xf32>
    %85 = vector.shape_cast %84 : vector<32x4xf32> to vector<4x8x4xf32>
    %cst_88 = arith.constant dense<0xFF800000> : vector<8x4xf32>
    %86 = vector.multi_reduction <maximumf>, %85, %cst_88 [0] : vector<4x8x4xf32> to vector<8x4xf32>
    %c0_89 = arith.constant 0 : index
    %c40 = arith.constant 40 : index
    %87 = vector.load %arg3[%c0_89, %c40] : memref<8x196xf32, #tpu.memory_space<vmem>>, vector<8x4xf32>
    tpu.vector_store %arg3[%c0_89, %c40], %86 {strides = array<i32>} : memref<8x196xf32, #tpu.memory_space<vmem>>, vector<8x4xf32>,
    %c11 = arith.constant 11 : index
    %c0_90 = arith.constant 0 : index
    %c0_91 = arith.constant 0 : index
    %88 = vector.load %arg1[%c11, %c0_90, %c0_91] : memref<49x32x256xbf16, #tpu.memory_space<vmem>>, vector<1x32x256xbf16>
    %89 = vector.shape_cast %88 : vector<1x32x256xbf16> to vector<32x256xbf16>
    %c11_92 = arith.constant 11 : index
    %c0_93 = arith.constant 0 : index
    %c0_94 = arith.constant 0 : index
    %90 = vector.load %arg2[%c11_92, %c0_93, %c0_94] : memref<49x4x256xbf16, #tpu.memory_space<vmem>>, vector<1x4x256xbf16>
    %91 = vector.shape_cast %90 : vector<1x4x256xbf16> to vector<4x256xbf16>
    %cst_95 = arith.constant dense<0.000000e+00> : vector<32x4xf32>
    %92 = tpu.matmul %89, %91, %cst_95 {dimension_numbers = #tpu.dot_dimension_numbers<[1], [1], [0], [0], [0, 0, 1, 0], [], []>} : vector<32x256xbf16>, vector<4x256xbf16>, vector<32x4xf32> -> vector<32x4xf32>
    %93 = vector.shape_cast %92 : vector<32x4xf32> to vector<4x8x4xf32>
    %cst_96 = arith.constant dense<0xFF800000> : vector<8x4xf32>
    %94 = vector.multi_reduction <maximumf>, %93, %cst_96 [0] : vector<4x8x4xf32> to vector<8x4xf32>
    %c0_97 = arith.constant 0 : index
    %c44 = arith.constant 44 : index
    %95 = vector.load %arg3[%c0_97, %c44] : memref<8x196xf32, #tpu.memory_space<vmem>>, vector<8x4xf32>
    tpu.vector_store %arg3[%c0_97, %c44], %94 {strides = array<i32>} : memref<8x196xf32, #tpu.memory_space<vmem>>, vector<8x4xf32>,
    %c12_98 = arith.constant 12 : index
    %c0_99 = arith.constant 0 : index
    %c0_100 = arith.constant 0 : index
    %96 = vector.load %arg1[%c12_98, %c0_99, %c0_100] : memref<49x32x256xbf16, #tpu.memory_space<vmem>>, vector<1x32x256xbf16>
    %97 = vector.shape_cast %96 : vector<1x32x256xbf16> to vector<32x256xbf16>
    %c12_101 = arith.constant 12 : index
    %c0_102 = arith.constant 0 : index
    %c0_103 = arith.constant 0 : index
    %98 = vector.load %arg2[%c12_101, %c0_102, %c0_103] : memref<49x4x256xbf16, #tpu.memory_space<vmem>>, vector<1x4x256xbf16>
    %99 = vector.shape_cast %98 : vector<1x4x256xbf16> to vector<4x256xbf16>
    %cst_104 = arith.constant dense<0.000000e+00> : vector<32x4xf32>
    %100 = tpu.matmul %97, %99, %cst_104 {dimension_numbers = #tpu.dot_dimension_numbers<[1], [1], [0], [0], [0, 0, 1, 0], [], []>} : vector<32x256xbf16>, vector<4x256xbf16>, vector<32x4xf32> -> vector<32x4xf32>
    %101 = vector.shape_cast %100 : vector<32x4xf32> to vector<4x8x4xf32>
    %cst_105 = arith.constant dense<0xFF800000> : vector<8x4xf32>
    %102 = vector.multi_reduction <maximumf>, %101, %cst_105 [0] : vector<4x8x4xf32> to vector<8x4xf32>
    %c0_106 = arith.constant 0 : index
    %c48 = arith.constant 48 : index
    %103 = vector.load %arg3[%c0_106, %c48] : memref<8x196xf32, #tpu.memory_space<vmem>>, vector<8x4xf32>
    tpu.vector_store %arg3[%c0_106, %c48], %102 {strides = array<i32>} : memref<8x196xf32, #tpu.memory_space<vmem>>, vector<8x4xf32>,
    %c13 = arith.constant 13 : index
    %c0_107 = arith.constant 0 : index
    %c0_108 = arith.constant 0 : index
    %104 = vector.load %arg1[%c13, %c0_107, %c0_108] : memref<49x32x256xbf16, #tpu.memory_space<vmem>>, vector<1x32x256xbf16>
    %105 = vector.shape_cast %104 : vector<1x32x256xbf16> to vector<32x256xbf16>
    %c13_109 = arith.constant 13 : index
    %c0_110 = arith.constant 0 : index
    %c0_111 = arith.constant 0 : index
    %106 = vector.load %arg2[%c13_109, %c0_110, %c0_111] : memref<49x4x256xbf16, #tpu.memory_space<vmem>>, vector<1x4x256xbf16>
    %107 = vector.shape_cast %106 : vector<1x4x256xbf16> to vector<4x256xbf16>
    %cst_112 = arith.constant dense<0.000000e+00> : vector<32x4xf32>
    %108 = tpu.matmul %105, %107, %cst_112 {dimension_numbers = #tpu.dot_dimension_numbers<[1], [1], [0], [0], [0, 0, 1, 0], [], []>} : vector<32x256xbf16>, vector<4x256xbf16>, vector<32x4xf32> -> vector<32x4xf32>
    %109 = vector.shape_cast %108 : vector<32x4xf32> to vector<4x8x4xf32>
    %cst_113 = arith.constant dense<0xFF800000> : vector<8x4xf32>
    %110 = vector.multi_reduction <maximumf>, %109, %cst_113 [0] : vector<4x8x4xf32> to vector<8x4xf32>
    %c0_114 = arith.constant 0 : index
    %c52 = arith.constant 52 : index
    %111 = vector.load %arg3[%c0_114, %c52] : memref<8x196xf32, #tpu.memory_space<vmem>>, vector<8x4xf32>
    tpu.vector_store %arg3[%c0_114, %c52], %110 {strides = array<i32>} : memref<8x196xf32, #tpu.memory_space<vmem>>, vector<8x4xf32>,
    %c14 = arith.constant 14 : index
    %c0_115 = arith.constant 0 : index
    %c0_116 = arith.constant 0 : index
    %112 = vector.load %arg1[%c14, %c0_115, %c0_116] : memref<49x32x256xbf16, #tpu.memory_space<vmem>>, vector<1x32x256xbf16>
    %113 = vector.shape_cast %112 : vector<1x32x256xbf16> to vector<32x256xbf16>
    %c14_117 = arith.constant 14 : index
    %c0_118 = arith.constant 0 : index
    %c0_119 = arith.constant 0 : index
    %114 = vector.load %arg2[%c14_117, %c0_118, %c0_119] : memref<49x4x256xbf16, #tpu.memory_space<vmem>>, vector<1x4x256xbf16>
    %115 = vector.shape_cast %114 : vector<1x4x256xbf16> to vector<4x256xbf16>
    %cst_120 = arith.constant dense<0.000000e+00> : vector<32x4xf32>
    %116 = tpu.matmul %113, %115, %cst_120 {dimension_numbers = #tpu.dot_dimension_numbers<[1], [1], [0], [0], [0, 0, 1, 0], [], []>} : vector<32x256xbf16>, vector<4x256xbf16>, vector<32x4xf32> -> vector<32x4xf32>
    %117 = vector.shape_cast %116 : vector<32x4xf32> to vector<4x8x4xf32>
    %cst_121 = arith.constant dense<0xFF800000> : vector<8x4xf32>
    %118 = vector.multi_reduction <maximumf>, %117, %cst_121 [0] : vector<4x8x4xf32> to vector<8x4xf32>
    %c0_122 = arith.constant 0 : index
    %c56 = arith.constant 56 : index
    %119 = vector.load %arg3[%c0_122, %c56] : memref<8x196xf32, #tpu.memory_space<vmem>>, vector<8x4xf32>
    tpu.vector_store %arg3[%c0_122, %c56], %118 {strides = array<i32>} : memref<8x196xf32, #tpu.memory_space<vmem>>, vector<8x4xf32>,
    %c15 = arith.constant 15 : index
    %c0_123 = arith.constant 0 : index
    %c0_124 = arith.constant 0 : index
    %120 = vector.load %arg1[%c15, %c0_123, %c0_124] : memref<49x32x256xbf16, #tpu.memory_space<vmem>>, vector<1x32x256xbf16>
    %121 = vector.shape_cast %120 : vector<1x32x256xbf16> to vector<32x256xbf16>
    %c15_125 = arith.constant 15 : index
    %c0_126 = arith.constant 0 : index
    %c0_127 = arith.constant 0 : index
    %122 = vector.load %arg2[%c15_125, %c0_126, %c0_127] : memref<49x4x256xbf16, #tpu.memory_space<vmem>>, vector<1x4x256xbf16>
    %123 = vector.shape_cast %122 : vector<1x4x256xbf16> to vector<4x256xbf16>
    %cst_128 = arith.constant dense<0.000000e+00> : vector<32x4xf32>
    %124 = tpu.matmul %121, %123, %cst_128 {dimension_numbers = #tpu.dot_dimension_numbers<[1], [1], [0], [0], [0, 0, 1, 0], [], []>} : vector<32x256xbf16>, vector<4x256xbf16>, vector<32x4xf32> -> vector<32x4xf32>
    %125 = vector.shape_cast %124 : vector<32x4xf32> to vector<4x8x4xf32>
    %cst_129 = arith.constant dense<0xFF800000> : vector<8x4xf32>
    %126 = vector.multi_reduction <maximumf>, %125, %cst_129 [0] : vector<4x8x4xf32> to vector<8x4xf32>
    %c0_130 = arith.constant 0 : index
    %c60 = arith.constant 60 : index
    %127 = vector.load %arg3[%c0_130, %c60] : memref<8x196xf32, #tpu.memory_space<vmem>>, vector<8x4xf32>
    tpu.vector_store %arg3[%c0_130, %c60], %126 {strides = array<i32>} : memref<8x196xf32, #tpu.memory_space<vmem>>, vector<8x4xf32>,
    %c16_131 = arith.constant 16 : index
    %c0_132 = arith.constant 0 : index
    %c0_133 = arith.constant 0 : index
    %128 = vector.load %arg1[%c16_131, %c0_132, %c0_133] : memref<49x32x256xbf16, #tpu.memory_space<vmem>>, vector<1x32x256xbf16>
    %129 = vector.shape_cast %128 : vector<1x32x256xbf16> to vector<32x256xbf16>
    %c16_134 = arith.constant 16 : index
    %c0_135 = arith.constant 0 : index
    %c0_136 = arith.constant 0 : index
    %130 = vector.load %arg2[%c16_134, %c0_135, %c0_136] : memref<49x4x256xbf16, #tpu.memory_space<vmem>>, vector<1x4x256xbf16>
    %131 = vector.shape_cast %130 : vector<1x4x256xbf16> to vector<4x256xbf16>
    %cst_137 = arith.constant dense<0.000000e+00> : vector<32x4xf32>
    %132 = tpu.matmul %129, %131, %cst_137 {dimension_numbers = #tpu.dot_dimension_numbers<[1], [1], [0], [0], [0, 0, 1, 0], [], []>} : vector<32x256xbf16>, vector<4x256xbf16>, vector<32x4xf32> -> vector<32x4xf32>
    %133 = vector.shape_cast %132 : vector<32x4xf32> to vector<4x8x4xf32>
    %cst_138 = arith.constant dense<0xFF800000> : vector<8x4xf32>
    %134 = vector.multi_reduction <maximumf>, %133, %cst_138 [0] : vector<4x8x4xf32> to vector<8x4xf32>
    %c0_139 = arith.constant 0 : index
    %c64 = arith.constant 64 : index
    %135 = vector.load %arg3[%c0_139, %c64] : memref<8x196xf32, #tpu.memory_space<vmem>>, vector<8x4xf32>
    tpu.vector_store %arg3[%c0_139, %c64], %134 {strides = array<i32>} : memref<8x196xf32, #tpu.memory_space<vmem>>, vector<8x4xf32>,
    %c17 = arith.constant 17 : index
    %c0_140 = arith.constant 0 : index
    %c0_141 = arith.constant 0 : index
    %136 = vector.load %arg1[%c17, %c0_140, %c0_141] : memref<49x32x256xbf16, #tpu.memory_space<vmem>>, vector<1x32x256xbf16>
    %137 = vector.shape_cast %136 : vector<1x32x256xbf16> to vector<32x256xbf16>
    %c17_142 = arith.constant 17 : index
    %c0_143 = arith.constant 0 : index
    %c0_144 = arith.constant 0 : index
    %138 = vector.load %arg2[%c17_142, %c0_143, %c0_144] : memref<49x4x256xbf16, #tpu.memory_space<vmem>>, vector<1x4x256xbf16>
    %139 = vector.shape_cast %138 : vector<1x4x256xbf16> to vector<4x256xbf16>
    %cst_145 = arith.constant dense<0.000000e+00> : vector<32x4xf32>
    %140 = tpu.matmul %137, %139, %cst_145 {dimension_numbers = #tpu.dot_dimension_numbers<[1], [1], [0], [0], [0, 0, 1, 0], [], []>} : vector<32x256xbf16>, vector<4x256xbf16>, vector<32x4xf32> -> vector<32x4xf32>
    %141 = vector.shape_cast %140 : vector<32x4xf32> to vector<4x8x4xf32>
    %cst_146 = arith.constant dense<0xFF800000> : vector<8x4xf32>
    %142 = vector.multi_reduction <maximumf>, %141, %cst_146 [0] : vector<4x8x4xf32> to vector<8x4xf32>
    %c0_147 = arith.constant 0 : index
    %c68 = arith.constant 68 : index
    %143 = vector.load %arg3[%c0_147, %c68] : memref<8x196xf32, #tpu.memory_space<vmem>>, vector<8x4xf32>
    tpu.vector_store %arg3[%c0_147, %c68], %142 {strides = array<i32>} : memref<8x196xf32, #tpu.memory_space<vmem>>, vector<8x4xf32>,
    %c18 = arith.constant 18 : index
    %c0_148 = arith.constant 0 : index
    %c0_149 = arith.constant 0 : index
    %144 = vector.load %arg1[%c18, %c0_148, %c0_149] : memref<49x32x256xbf16, #tpu.memory_space<vmem>>, vector<1x32x256xbf16>
    %145 = vector.shape_cast %144 : vector<1x32x256xbf16> to vector<32x256xbf16>
    %c18_150 = arith.constant 18 : index
    %c0_151 = arith.constant 0 : index
    %c0_152 = arith.constant 0 : index
    %146 = vector.load %arg2[%c18_150, %c0_151, %c0_152] : memref<49x4x256xbf16, #tpu.memory_space<vmem>>, vector<1x4x256xbf16>
    %147 = vector.shape_cast %146 : vector<1x4x256xbf16> to vector<4x256xbf16>
    %cst_153 = arith.constant dense<0.000000e+00> : vector<32x4xf32>
    %148 = tpu.matmul %145, %147, %cst_153 {dimension_numbers = #tpu.dot_dimension_numbers<[1], [1], [0], [0], [0, 0, 1, 0], [], []>} : vector<32x256xbf16>, vector<4x256xbf16>, vector<32x4xf32> -> vector<32x4xf32>
    %149 = vector.shape_cast %148 : vector<32x4xf32> to vector<4x8x4xf32>
    %cst_154 = arith.constant dense<0xFF800000> : vector<8x4xf32>
    %150 = vector.multi_reduction <maximumf>, %149, %cst_154 [0] : vector<4x8x4xf32> to vector<8x4xf32>
    %c0_155 = arith.constant 0 : index
    %c72 = arith.constant 72 : index
    %151 = vector.load %arg3[%c0_155, %c72] : memref<8x196xf32, #tpu.memory_space<vmem>>, vector<8x4xf32>
    tpu.vector_store %arg3[%c0_155, %c72], %150 {strides = array<i32>} : memref<8x196xf32, #tpu.memory_space<vmem>>, vector<8x4xf32>,
    %c19 = arith.constant 19 : index
    %c0_156 = arith.constant 0 : index
    %c0_157 = arith.constant 0 : index
    %152 = vector.load %arg1[%c19, %c0_156, %c0_157] : memref<49x32x256xbf16, #tpu.memory_space<vmem>>, vector<1x32x256xbf16>
    %153 = vector.shape_cast %152 : vector<1x32x256xbf16> to vector<32x256xbf16>
    %c19_158 = arith.constant 19 : index
    %c0_159 = arith.constant 0 : index
    %c0_160 = arith.constant 0 : index
    %154 = vector.load %arg2[%c19_158, %c0_159, %c0_160] : memref<49x4x256xbf16, #tpu.memory_space<vmem>>, vector<1x4x256xbf16>
    %155 = vector.shape_cast %154 : vector<1x4x256xbf16> to vector<4x256xbf16>
    %cst_161 = arith.constant dense<0.000000e+00> : vector<32x4xf32>
    %156 = tpu.matmul %153, %155, %cst_161 {dimension_numbers = #tpu.dot_dimension_numbers<[1], [1], [0], [0], [0, 0, 1, 0], [], []>} : vector<32x256xbf16>, vector<4x256xbf16>, vector<32x4xf32> -> vector<32x4xf32>
    %157 = vector.shape_cast %156 : vector<32x4xf32> to vector<4x8x4xf32>
    %cst_162 = arith.constant dense<0xFF800000> : vector<8x4xf32>
    %158 = vector.multi_reduction <maximumf>, %157, %cst_162 [0] : vector<4x8x4xf32> to vector<8x4xf32>
    %c0_163 = arith.constant 0 : index
    %c76 = arith.constant 76 : index
    %159 = vector.load %arg3[%c0_163, %c76] : memref<8x196xf32, #tpu.memory_space<vmem>>, vector<8x4xf32>
    tpu.vector_store %arg3[%c0_163, %c76], %158 {strides = array<i32>} : memref<8x196xf32, #tpu.memory_space<vmem>>, vector<8x4xf32>,
    %c20_164 = arith.constant 20 : index
    %c0_165 = arith.constant 0 : index
    %c0_166 = arith.constant 0 : index
    %160 = vector.load %arg1[%c20_164, %c0_165, %c0_166] : memref<49x32x256xbf16, #tpu.memory_space<vmem>>, vector<1x32x256xbf16>
    %161 = vector.shape_cast %160 : vector<1x32x256xbf16> to vector<32x256xbf16>
    %c20_167 = arith.constant 20 : index
    %c0_168 = arith.constant 0 : index
    %c0_169 = arith.constant 0 : index
    %162 = vector.load %arg2[%c20_167, %c0_168, %c0_169] : memref<49x4x256xbf16, #tpu.memory_space<vmem>>, vector<1x4x256xbf16>
    %163 = vector.shape_cast %162 : vector<1x4x256xbf16> to vector<4x256xbf16>
    %cst_170 = arith.constant dense<0.000000e+00> : vector<32x4xf32>
    %164 = tpu.matmul %161, %163, %cst_170 {dimension_numbers = #tpu.dot_dimension_numbers<[1], [1], [0], [0], [0, 0, 1, 0], [], []>} : vector<32x256xbf16>, vector<4x256xbf16>, vector<32x4xf32> -> vector<32x4xf32>
    %165 = vector.shape_cast %164 : vector<32x4xf32> to vector<4x8x4xf32>
    %cst_171 = arith.constant dense<0xFF800000> : vector<8x4xf32>
    %166 = vector.multi_reduction <maximumf>, %165, %cst_171 [0] : vector<4x8x4xf32> to vector<8x4xf32>
    %c0_172 = arith.constant 0 : index
    %c80 = arith.constant 80 : index
    %167 = vector.load %arg3[%c0_172, %c80] : memref<8x196xf32, #tpu.memory_space<vmem>>, vector<8x4xf32>
    tpu.vector_store %arg3[%c0_172, %c80], %166 {strides = array<i32>} : memref<8x196xf32, #tpu.memory_space<vmem>>, vector<8x4xf32>,
    %c21 = arith.constant 21 : index
    %c0_173 = arith.constant 0 : index
    %c0_174 = arith.constant 0 : index
    %168 = vector.load %arg1[%c21, %c0_173, %c0_174] : memref<49x32x256xbf16, #tpu.memory_space<vmem>>, vector<1x32x256xbf16>
    %169 = vector.shape_cast %168 : vector<1x32x256xbf16> to vector<32x256xbf16>
    %c21_175 = arith.constant 21 : index
    %c0_176 = arith.constant 0 : index
    %c0_177 = arith.constant 0 : index
    %170 = vector.load %arg2[%c21_175, %c0_176, %c0_177] : memref<49x4x256xbf16, #tpu.memory_space<vmem>>, vector<1x4x256xbf16>
    %171 = vector.shape_cast %170 : vector<1x4x256xbf16> to vector<4x256xbf16>
    %cst_178 = arith.constant dense<0.000000e+00> : vector<32x4xf32>
    %172 = tpu.matmul %169, %171, %cst_178 {dimension_numbers = #tpu.dot_dimension_numbers<[1], [1], [0], [0], [0, 0, 1, 0], [], []>} : vector<32x256xbf16>, vector<4x256xbf16>, vector<32x4xf32> -> vector<32x4xf32>
    %173 = vector.shape_cast %172 : vector<32x4xf32> to vector<4x8x4xf32>
    %cst_179 = arith.constant dense<0xFF800000> : vector<8x4xf32>
    %174 = vector.multi_reduction <maximumf>, %173, %cst_179 [0] : vector<4x8x4xf32> to vector<8x4xf32>
    %c0_180 = arith.constant 0 : index
    %c84 = arith.constant 84 : index
    %175 = vector.load %arg3[%c0_180, %c84] : memref<8x196xf32, #tpu.memory_space<vmem>>, vector<8x4xf32>
    tpu.vector_store %arg3[%c0_180, %c84], %174 {strides = array<i32>} : memref<8x196xf32, #tpu.memory_space<vmem>>, vector<8x4xf32>,
    %c22 = arith.constant 22 : index
    %c0_181 = arith.constant 0 : index
    %c0_182 = arith.constant 0 : index
    %176 = vector.load %arg1[%c22, %c0_181, %c0_182] : memref<49x32x256xbf16, #tpu.memory_space<vmem>>, vector<1x32x256xbf16>
    %177 = vector.shape_cast %176 : vector<1x32x256xbf16> to vector<32x256xbf16>
    %c22_183 = arith.constant 22 : index
    %c0_184 = arith.constant 0 : index
    %c0_185 = arith.constant 0 : index
    %178 = vector.load %arg2[%c22_183, %c0_184, %c0_185] : memref<49x4x256xbf16, #tpu.memory_space<vmem>>, vector<1x4x256xbf16>
    %179 = vector.shape_cast %178 : vector<1x4x256xbf16> to vector<4x256xbf16>
    %cst_186 = arith.constant dense<0.000000e+00> : vector<32x4xf32>
    %180 = tpu.matmul %177, %179, %cst_186 {dimension_numbers = #tpu.dot_dimension_numbers<[1], [1], [0], [0], [0, 0, 1, 0], [], []>} : vector<32x256xbf16>, vector<4x256xbf16>, vector<32x4xf32> -> vector<32x4xf32>
    %181 = vector.shape_cast %180 : vector<32x4xf32> to vector<4x8x4xf32>
    %cst_187 = arith.constant dense<0xFF800000> : vector<8x4xf32>
    %182 = vector.multi_reduction <maximumf>, %181, %cst_187 [0] : vector<4x8x4xf32> to vector<8x4xf32>
    %c0_188 = arith.constant 0 : index
    %c88 = arith.constant 88 : index
    %183 = vector.load %arg3[%c0_188, %c88] : memref<8x196xf32, #tpu.memory_space<vmem>>, vector<8x4xf32>
    tpu.vector_store %arg3[%c0_188, %c88], %182 {strides = array<i32>} : memref<8x196xf32, #tpu.memory_space<vmem>>, vector<8x4xf32>,
    %c23 = arith.constant 23 : index
    %c0_189 = arith.constant 0 : index
    %c0_190 = arith.constant 0 : index
    %184 = vector.load %arg1[%c23, %c0_189, %c0_190] : memref<49x32x256xbf16, #tpu.memory_space<vmem>>, vector<1x32x256xbf16>
    %185 = vector.shape_cast %184 : vector<1x32x256xbf16> to vector<32x256xbf16>
    %c23_191 = arith.constant 23 : index
    %c0_192 = arith.constant 0 : index
    %c0_193 = arith.constant 0 : index
    %186 = vector.load %arg2[%c23_191, %c0_192, %c0_193] : memref<49x4x256xbf16, #tpu.memory_space<vmem>>, vector<1x4x256xbf16>
    %187 = vector.shape_cast %186 : vector<1x4x256xbf16> to vector<4x256xbf16>
    %cst_194 = arith.constant dense<0.000000e+00> : vector<32x4xf32>
    %188 = tpu.matmul %185, %187, %cst_194 {dimension_numbers = #tpu.dot_dimension_numbers<[1], [1], [0], [0], [0, 0, 1, 0], [], []>} : vector<32x256xbf16>, vector<4x256xbf16>, vector<32x4xf32> -> vector<32x4xf32>
    %189 = vector.shape_cast %188 : vector<32x4xf32> to vector<4x8x4xf32>
    %cst_195 = arith.constant dense<0xFF800000> : vector<8x4xf32>
    %190 = vector.multi_reduction <maximumf>, %189, %cst_195 [0] : vector<4x8x4xf32> to vector<8x4xf32>
    %c0_196 = arith.constant 0 : index
    %c92 = arith.constant 92 : index
    %191 = vector.load %arg3[%c0_196, %c92] : memref<8x196xf32, #tpu.memory_space<vmem>>, vector<8x4xf32>
    tpu.vector_store %arg3[%c0_196, %c92], %190 {strides = array<i32>} : memref<8x196xf32, #tpu.memory_space<vmem>>, vector<8x4xf32>,
    %c24_197 = arith.constant 24 : index
    %c0_198 = arith.constant 0 : index
    %c0_199 = arith.constant 0 : index
    %192 = vector.load %arg1[%c24_197, %c0_198, %c0_199] : memref<49x32x256xbf16, #tpu.memory_space<vmem>>, vector<1x32x256xbf16>
    %193 = vector.shape_cast %192 : vector<1x32x256xbf16> to vector<32x256xbf16>
    %c24_200 = arith.constant 24 : index
    %c0_201 = arith.constant 0 : index
    %c0_202 = arith.constant 0 : index
    %194 = vector.load %arg2[%c24_200, %c0_201, %c0_202] : memref<49x4x256xbf16, #tpu.memory_space<vmem>>, vector<1x4x256xbf16>
    %195 = vector.shape_cast %194 : vector<1x4x256xbf16> to vector<4x256xbf16>
    %cst_203 = arith.constant dense<0.000000e+00> : vector<32x4xf32>
    %196 = tpu.matmul %193, %195, %cst_203 {dimension_numbers = #tpu.dot_dimension_numbers<[1], [1], [0], [0], [0, 0, 1, 0], [], []>} : vector<32x256xbf16>, vector<4x256xbf16>, vector<32x4xf32> -> vector<32x4xf32>
    %197 = vector.shape_cast %196 : vector<32x4xf32> to vector<4x8x4xf32>
    %cst_204 = arith.constant dense<0xFF800000> : vector<8x4xf32>
    %198 = vector.multi_reduction <maximumf>, %197, %cst_204 [0] : vector<4x8x4xf32> to vector<8x4xf32>
    %c0_205 = arith.constant 0 : index
    %c96 = arith.constant 96 : index
    %199 = vector.load %arg3[%c0_205, %c96] : memref<8x196xf32, #tpu.memory_space<vmem>>, vector<8x4xf32>
    tpu.vector_store %arg3[%c0_205, %c96], %198 {strides = array<i32>} : memref<8x196xf32, #tpu.memory_space<vmem>>, vector<8x4xf32>,
    %c25 = arith.constant 25 : index
    %c0_206 = arith.constant 0 : index
    %c0_207 = arith.constant 0 : index
    %200 = vector.load %arg1[%c25, %c0_206, %c0_207] : memref<49x32x256xbf16, #tpu.memory_space<vmem>>, vector<1x32x256xbf16>
    %201 = vector.shape_cast %200 : vector<1x32x256xbf16> to vector<32x256xbf16>
    %c25_208 = arith.constant 25 : index
    %c0_209 = arith.constant 0 : index
    %c0_210 = arith.constant 0 : index
    %202 = vector.load %arg2[%c25_208, %c0_209, %c0_210] : memref<49x4x256xbf16, #tpu.memory_space<vmem>>, vector<1x4x256xbf16>
    %203 = vector.shape_cast %202 : vector<1x4x256xbf16> to vector<4x256xbf16>
    %cst_211 = arith.constant dense<0.000000e+00> : vector<32x4xf32>
    %204 = tpu.matmul %201, %203, %cst_211 {dimension_numbers = #tpu.dot_dimension_numbers<[1], [1], [0], [0], [0, 0, 1, 0], [], []>} : vector<32x256xbf16>, vector<4x256xbf16>, vector<32x4xf32> -> vector<32x4xf32>
    %205 = vector.shape_cast %204 : vector<32x4xf32> to vector<4x8x4xf32>
    %cst_212 = arith.constant dense<0xFF800000> : vector<8x4xf32>
    %206 = vector.multi_reduction <maximumf>, %205, %cst_212 [0] : vector<4x8x4xf32> to vector<8x4xf32>
    %c0_213 = arith.constant 0 : index
    %c100 = arith.constant 100 : index
    %207 = vector.load %arg3[%c0_213, %c100] : memref<8x196xf32, #tpu.memory_space<vmem>>, vector<8x4xf32>
    tpu.vector_store %arg3[%c0_213, %c100], %206 {strides = array<i32>} : memref<8x196xf32, #tpu.memory_space<vmem>>, vector<8x4xf32>,
    %c26 = arith.constant 26 : index
    %c0_214 = arith.constant 0 : index
    %c0_215 = arith.constant 0 : index
    %208 = vector.load %arg1[%c26, %c0_214, %c0_215] : memref<49x32x256xbf16, #tpu.memory_space<vmem>>, vector<1x32x256xbf16>
    %209 = vector.shape_cast %208 : vector<1x32x256xbf16> to vector<32x256xbf16>
    %c26_216 = arith.constant 26 : index
    %c0_217 = arith.constant 0 : index
    %c0_218 = arith.constant 0 : index
    %210 = vector.load %arg2[%c26_216, %c0_217, %c0_218] : memref<49x4x256xbf16, #tpu.memory_space<vmem>>, vector<1x4x256xbf16>
    %211 = vector.shape_cast %210 : vector<1x4x256xbf16> to vector<4x256xbf16>
    %cst_219 = arith.constant dense<0.000000e+00> : vector<32x4xf32>
    %212 = tpu.matmul %209, %211, %cst_219 {dimension_numbers = #tpu.dot_dimension_numbers<[1], [1], [0], [0], [0, 0, 1, 0], [], []>} : vector<32x256xbf16>, vector<4x256xbf16>, vector<32x4xf32> -> vector<32x4xf32>
    %213 = vector.shape_cast %212 : vector<32x4xf32> to vector<4x8x4xf32>
    %cst_220 = arith.constant dense<0xFF800000> : vector<8x4xf32>
    %214 = vector.multi_reduction <maximumf>, %213, %cst_220 [0] : vector<4x8x4xf32> to vector<8x4xf32>
    %c0_221 = arith.constant 0 : index
    %c104 = arith.constant 104 : index
    %215 = vector.load %arg3[%c0_221, %c104] : memref<8x196xf32, #tpu.memory_space<vmem>>, vector<8x4xf32>
    tpu.vector_store %arg3[%c0_221, %c104], %214 {strides = array<i32>} : memref<8x196xf32, #tpu.memory_space<vmem>>, vector<8x4xf32>,
    %c27 = arith.constant 27 : index
    %c0_222 = arith.constant 0 : index
    %c0_223 = arith.constant 0 : index
    %216 = vector.load %arg1[%c27, %c0_222, %c0_223] : memref<49x32x256xbf16, #tpu.memory_space<vmem>>, vector<1x32x256xbf16>
    %217 = vector.shape_cast %216 : vector<1x32x256xbf16> to vector<32x256xbf16>
    %c27_224 = arith.constant 27 : index
    %c0_225 = arith.constant 0 : index
    %c0_226 = arith.constant 0 : index
    %218 = vector.load %arg2[%c27_224, %c0_225, %c0_226] : memref<49x4x256xbf16, #tpu.memory_space<vmem>>, vector<1x4x256xbf16>
    %219 = vector.shape_cast %218 : vector<1x4x256xbf16> to vector<4x256xbf16>
    %cst_227 = arith.constant dense<0.000000e+00> : vector<32x4xf32>
    %220 = tpu.matmul %217, %219, %cst_227 {dimension_numbers = #tpu.dot_dimension_numbers<[1], [1], [0], [0], [0, 0, 1, 0], [], []>} : vector<32x256xbf16>, vector<4x256xbf16>, vector<32x4xf32> -> vector<32x4xf32>
    %221 = vector.shape_cast %220 : vector<32x4xf32> to vector<4x8x4xf32>
    %cst_228 = arith.constant dense<0xFF800000> : vector<8x4xf32>
    %222 = vector.multi_reduction <maximumf>, %221, %cst_228 [0] : vector<4x8x4xf32> to vector<8x4xf32>
    %c0_229 = arith.constant 0 : index
    %c108 = arith.constant 108 : index
    %223 = vector.load %arg3[%c0_229, %c108] : memref<8x196xf32, #tpu.memory_space<vmem>>, vector<8x4xf32>
    tpu.vector_store %arg3[%c0_229, %c108], %222 {strides = array<i32>} : memref<8x196xf32, #tpu.memory_space<vmem>>, vector<8x4xf32>,
    %c28_230 = arith.constant 28 : index
    %c0_231 = arith.constant 0 : index
    %c0_232 = arith.constant 0 : index
    %224 = vector.load %arg1[%c28_230, %c0_231, %c0_232] : memref<49x32x256xbf16, #tpu.memory_space<vmem>>, vector<1x32x256xbf16>
    %225 = vector.shape_cast %224 : vector<1x32x256xbf16> to vector<32x256xbf16>
    %c28_233 = arith.constant 28 : index
    %c0_234 = arith.constant 0 : index
    %c0_235 = arith.constant 0 : index
    %226 = vector.load %arg2[%c28_233, %c0_234, %c0_235] : memref<49x4x256xbf16, #tpu.memory_space<vmem>>, vector<1x4x256xbf16>
    %227 = vector.shape_cast %226 : vector<1x4x256xbf16> to vector<4x256xbf16>
    %cst_236 = arith.constant dense<0.000000e+00> : vector<32x4xf32>
    %228 = tpu.matmul %225, %227, %cst_236 {dimension_numbers = #tpu.dot_dimension_numbers<[1], [1], [0], [0], [0, 0, 1, 0], [], []>} : vector<32x256xbf16>, vector<4x256xbf16>, vector<32x4xf32> -> vector<32x4xf32>
    %229 = vector.shape_cast %228 : vector<32x4xf32> to vector<4x8x4xf32>
    %cst_237 = arith.constant dense<0xFF800000> : vector<8x4xf32>
    %230 = vector.multi_reduction <maximumf>, %229, %cst_237 [0] : vector<4x8x4xf32> to vector<8x4xf32>
    %c0_238 = arith.constant 0 : index
    %c112 = arith.constant 112 : index
    %231 = vector.load %arg3[%c0_238, %c112] : memref<8x196xf32, #tpu.memory_space<vmem>>, vector<8x4xf32>
    tpu.vector_store %arg3[%c0_238, %c112], %230 {strides = array<i32>} : memref<8x196xf32, #tpu.memory_space<vmem>>, vector<8x4xf32>,
    %c29 = arith.constant 29 : index
    %c0_239 = arith.constant 0 : index
    %c0_240 = arith.constant 0 : index
    %232 = vector.load %arg1[%c29, %c0_239, %c0_240] : memref<49x32x256xbf16, #tpu.memory_space<vmem>>, vector<1x32x256xbf16>
    %233 = vector.shape_cast %232 : vector<1x32x256xbf16> to vector<32x256xbf16>
    %c29_241 = arith.constant 29 : index
    %c0_242 = arith.constant 0 : index
    %c0_243 = arith.constant 0 : index
    %234 = vector.load %arg2[%c29_241, %c0_242, %c0_243] : memref<49x4x256xbf16, #tpu.memory_space<vmem>>, vector<1x4x256xbf16>
    %235 = vector.shape_cast %234 : vector<1x4x256xbf16> to vector<4x256xbf16>
    %cst_244 = arith.constant dense<0.000000e+00> : vector<32x4xf32>
    %236 = tpu.matmul %233, %235, %cst_244 {dimension_numbers = #tpu.dot_dimension_numbers<[1], [1], [0], [0], [0, 0, 1, 0], [], []>} : vector<32x256xbf16>, vector<4x256xbf16>, vector<32x4xf32> -> vector<32x4xf32>
    %237 = vector.shape_cast %236 : vector<32x4xf32> to vector<4x8x4xf32>
    %cst_245 = arith.constant dense<0xFF800000> : vector<8x4xf32>
    %238 = vector.multi_reduction <maximumf>, %237, %cst_245 [0] : vector<4x8x4xf32> to vector<8x4xf32>
    %c0_246 = arith.constant 0 : index
    %c116 = arith.constant 116 : index
    %239 = vector.load %arg3[%c0_246, %c116] : memref<8x196xf32, #tpu.memory_space<vmem>>, vector<8x4xf32>
    tpu.vector_store %arg3[%c0_246, %c116], %238 {strides = array<i32>} : memref<8x196xf32, #tpu.memory_space<vmem>>, vector<8x4xf32>,
    %c30 = arith.constant 30 : index
    %c0_247 = arith.constant 0 : index
    %c0_248 = arith.constant 0 : index
    %240 = vector.load %arg1[%c30, %c0_247, %c0_248] : memref<49x32x256xbf16, #tpu.memory_space<vmem>>, vector<1x32x256xbf16>
    %241 = vector.shape_cast %240 : vector<1x32x256xbf16> to vector<32x256xbf16>
    %c30_249 = arith.constant 30 : index
    %c0_250 = arith.constant 0 : index
    %c0_251 = arith.constant 0 : index
    %242 = vector.load %arg2[%c30_249, %c0_250, %c0_251] : memref<49x4x256xbf16, #tpu.memory_space<vmem>>, vector<1x4x256xbf16>
    %243 = vector.shape_cast %242 : vector<1x4x256xbf16> to vector<4x256xbf16>
    %cst_252 = arith.constant dense<0.000000e+00> : vector<32x4xf32>
    %244 = tpu.matmul %241, %243, %cst_252 {dimension_numbers = #tpu.dot_dimension_numbers<[1], [1], [0], [0], [0, 0, 1, 0], [], []>} : vector<32x256xbf16>, vector<4x256xbf16>, vector<32x4xf32> -> vector<32x4xf32>
    %245 = vector.shape_cast %244 : vector<32x4xf32> to vector<4x8x4xf32>
    %cst_253 = arith.constant dense<0xFF800000> : vector<8x4xf32>
    %246 = vector.multi_reduction <maximumf>, %245, %cst_253 [0] : vector<4x8x4xf32> to vector<8x4xf32>
    %c0_254 = arith.constant 0 : index
    %c120 = arith.constant 120 : index
    %247 = vector.load %arg3[%c0_254, %c120] : memref<8x196xf32, #tpu.memory_space<vmem>>, vector<8x4xf32>
    tpu.vector_store %arg3[%c0_254, %c120], %246 {strides = array<i32>} : memref<8x196xf32, #tpu.memory_space<vmem>>, vector<8x4xf32>,
    %c31 = arith.constant 31 : index
    %c0_255 = arith.constant 0 : index
    %c0_256 = arith.constant 0 : index
    %248 = vector.load %arg1[%c31, %c0_255, %c0_256] : memref<49x32x256xbf16, #tpu.memory_space<vmem>>, vector<1x32x256xbf16>
    %249 = vector.shape_cast %248 : vector<1x32x256xbf16> to vector<32x256xbf16>
    %c31_257 = arith.constant 31 : index
    %c0_258 = arith.constant 0 : index
    %c0_259 = arith.constant 0 : index
    %250 = vector.load %arg2[%c31_257, %c0_258, %c0_259] : memref<49x4x256xbf16, #tpu.memory_space<vmem>>, vector<1x4x256xbf16>
    %251 = vector.shape_cast %250 : vector<1x4x256xbf16> to vector<4x256xbf16>
    %cst_260 = arith.constant dense<0.000000e+00> : vector<32x4xf32>
    %252 = tpu.matmul %249, %251, %cst_260 {dimension_numbers = #tpu.dot_dimension_numbers<[1], [1], [0], [0], [0, 0, 1, 0], [], []>} : vector<32x256xbf16>, vector<4x256xbf16>, vector<32x4xf32> -> vector<32x4xf32>
    %253 = vector.shape_cast %252 : vector<32x4xf32> to vector<4x8x4xf32>
    %cst_261 = arith.constant dense<0xFF800000> : vector<8x4xf32>
    %254 = vector.multi_reduction <maximumf>, %253, %cst_261 [0] : vector<4x8x4xf32> to vector<8x4xf32>
    %c0_262 = arith.constant 0 : index
    %c124 = arith.constant 124 : index
    %255 = vector.load %arg3[%c0_262, %c124] : memref<8x196xf32, #tpu.memory_space<vmem>>, vector<8x4xf32>
    tpu.vector_store %arg3[%c0_262, %c124], %254 {strides = array<i32>} : memref<8x196xf32, #tpu.memory_space<vmem>>, vector<8x4xf32>,
    %c32_263 = arith.constant 32 : index
    %c0_264 = arith.constant 0 : index
    %c0_265 = arith.constant 0 : index
    %256 = vector.load %arg1[%c32_263, %c0_264, %c0_265] : memref<49x32x256xbf16, #tpu.memory_space<vmem>>, vector<1x32x256xbf16>
    %257 = vector.shape_cast %256 : vector<1x32x256xbf16> to vector<32x256xbf16>
    %c32_266 = arith.constant 32 : index
    %c0_267 = arith.constant 0 : index
    %c0_268 = arith.constant 0 : index
    %258 = vector.load %arg2[%c32_266, %c0_267, %c0_268] : memref<49x4x256xbf16, #tpu.memory_space<vmem>>, vector<1x4x256xbf16>
    %259 = vector.shape_cast %258 : vector<1x4x256xbf16> to vector<4x256xbf16>
    %cst_269 = arith.constant dense<0.000000e+00> : vector<32x4xf32>
    %260 = tpu.matmul %257, %259, %cst_269 {dimension_numbers = #tpu.dot_dimension_numbers<[1], [1], [0], [0], [0, 0, 1, 0], [], []>} : vector<32x256xbf16>, vector<4x256xbf16>, vector<32x4xf32> -> vector<32x4xf32>
    %261 = vector.shape_cast %260 : vector<32x4xf32> to vector<4x8x4xf32>
    %cst_270 = arith.constant dense<0xFF800000> : vector<8x4xf32>
    %262 = vector.multi_reduction <maximumf>, %261, %cst_270 [0] : vector<4x8x4xf32> to vector<8x4xf32>
    %c0_271 = arith.constant 0 : index
    %c128 = arith.constant 128 : index
    %263 = vector.load %arg3[%c0_271, %c128] : memref<8x196xf32, #tpu.memory_space<vmem>>, vector<8x4xf32>
    tpu.vector_store %arg3[%c0_271, %c128], %262 {strides = array<i32>} : memref<8x196xf32, #tpu.memory_space<vmem>>, vector<8x4xf32>,
    %c33 = arith.constant 33 : index
    %c0_272 = arith.constant 0 : index
    %c0_273 = arith.constant 0 : index
    %264 = vector.load %arg1[%c33, %c0_272, %c0_273] : memref<49x32x256xbf16, #tpu.memory_space<vmem>>, vector<1x32x256xbf16>
    %265 = vector.shape_cast %264 : vector<1x32x256xbf16> to vector<32x256xbf16>
    %c33_274 = arith.constant 33 : index
    %c0_275 = arith.constant 0 : index
    %c0_276 = arith.constant 0 : index
    %266 = vector.load %arg2[%c33_274, %c0_275, %c0_276] : memref<49x4x256xbf16, #tpu.memory_space<vmem>>, vector<1x4x256xbf16>
    %267 = vector.shape_cast %266 : vector<1x4x256xbf16> to vector<4x256xbf16>
    %cst_277 = arith.constant dense<0.000000e+00> : vector<32x4xf32>
    %268 = tpu.matmul %265, %267, %cst_277 {dimension_numbers = #tpu.dot_dimension_numbers<[1], [1], [0], [0], [0, 0, 1, 0], [], []>} : vector<32x256xbf16>, vector<4x256xbf16>, vector<32x4xf32> -> vector<32x4xf32>
    %269 = vector.shape_cast %268 : vector<32x4xf32> to vector<4x8x4xf32>
    %cst_278 = arith.constant dense<0xFF800000> : vector<8x4xf32>
    %270 = vector.multi_reduction <maximumf>, %269, %cst_278 [0] : vector<4x8x4xf32> to vector<8x4xf32>
    %c0_279 = arith.constant 0 : index
    %c132 = arith.constant 132 : index
    %271 = vector.load %arg3[%c0_279, %c132] : memref<8x196xf32, #tpu.memory_space<vmem>>, vector<8x4xf32>
    tpu.vector_store %arg3[%c0_279, %c132], %270 {strides = array<i32>} : memref<8x196xf32, #tpu.memory_space<vmem>>, vector<8x4xf32>,
    %c34 = arith.constant 34 : index
    %c0_280 = arith.constant 0 : index
    %c0_281 = arith.constant 0 : index
    %272 = vector.load %arg1[%c34, %c0_280, %c0_281] : memref<49x32x256xbf16, #tpu.memory_space<vmem>>, vector<1x32x256xbf16>
    %273 = vector.shape_cast %272 : vector<1x32x256xbf16> to vector<32x256xbf16>
    %c34_282 = arith.constant 34 : index
    %c0_283 = arith.constant 0 : index
    %c0_284 = arith.constant 0 : index
    %274 = vector.load %arg2[%c34_282, %c0_283, %c0_284] : memref<49x4x256xbf16, #tpu.memory_space<vmem>>, vector<1x4x256xbf16>
    %275 = vector.shape_cast %274 : vector<1x4x256xbf16> to vector<4x256xbf16>
    %cst_285 = arith.constant dense<0.000000e+00> : vector<32x4xf32>
    %276 = tpu.matmul %273, %275, %cst_285 {dimension_numbers = #tpu.dot_dimension_numbers<[1], [1], [0], [0], [0, 0, 1, 0], [], []>} : vector<32x256xbf16>, vector<4x256xbf16>, vector<32x4xf32> -> vector<32x4xf32>
    %277 = vector.shape_cast %276 : vector<32x4xf32> to vector<4x8x4xf32>
    %cst_286 = arith.constant dense<0xFF800000> : vector<8x4xf32>
    %278 = vector.multi_reduction <maximumf>, %277, %cst_286 [0] : vector<4x8x4xf32> to vector<8x4xf32>
    %c0_287 = arith.constant 0 : index
    %c136 = arith.constant 136 : index
    %279 = vector.load %arg3[%c0_287, %c136] : memref<8x196xf32, #tpu.memory_space<vmem>>, vector<8x4xf32>
    tpu.vector_store %arg3[%c0_287, %c136], %278 {strides = array<i32>} : memref<8x196xf32, #tpu.memory_space<vmem>>, vector<8x4xf32>,
    %c35 = arith.constant 35 : index
    %c0_288 = arith.constant 0 : index
    %c0_289 = arith.constant 0 : index
    %280 = vector.load %arg1[%c35, %c0_288, %c0_289] : memref<49x32x256xbf16, #tpu.memory_space<vmem>>, vector<1x32x256xbf16>
    %281 = vector.shape_cast %280 : vector<1x32x256xbf16> to vector<32x256xbf16>
    %c35_290 = arith.constant 35 : index
    %c0_291 = arith.constant 0 : index
    %c0_292 = arith.constant 0 : index
    %282 = vector.load %arg2[%c35_290, %c0_291, %c0_292] : memref<49x4x256xbf16, #tpu.memory_space<vmem>>, vector<1x4x256xbf16>
    %283 = vector.shape_cast %282 : vector<1x4x256xbf16> to vector<4x256xbf16>
    %cst_293 = arith.constant dense<0.000000e+00> : vector<32x4xf32>
    %284 = tpu.matmul %281, %283, %cst_293 {dimension_numbers = #tpu.dot_dimension_numbers<[1], [1], [0], [0], [0, 0, 1, 0], [], []>} : vector<32x256xbf16>, vector<4x256xbf16>, vector<32x4xf32> -> vector<32x4xf32>
    %285 = vector.shape_cast %284 : vector<32x4xf32> to vector<4x8x4xf32>
    %cst_294 = arith.constant dense<0xFF800000> : vector<8x4xf32>
    %286 = vector.multi_reduction <maximumf>, %285, %cst_294 [0] : vector<4x8x4xf32> to vector<8x4xf32>
    %c0_295 = arith.constant 0 : index
    %c140 = arith.constant 140 : index
    %287 = vector.load %arg3[%c0_295, %c140] : memref<8x196xf32, #tpu.memory_space<vmem>>, vector<8x4xf32>
    tpu.vector_store %arg3[%c0_295, %c140], %286 {strides = array<i32>} : memref<8x196xf32, #tpu.memory_space<vmem>>, vector<8x4xf32>,
    %c36_296 = arith.constant 36 : index
    %c0_297 = arith.constant 0 : index
    %c0_298 = arith.constant 0 : index
    %288 = vector.load %arg1[%c36_296, %c0_297, %c0_298] : memref<49x32x256xbf16, #tpu.memory_space<vmem>>, vector<1x32x256xbf16>
    %289 = vector.shape_cast %288 : vector<1x32x256xbf16> to vector<32x256xbf16>
    %c36_299 = arith.constant 36 : index
    %c0_300 = arith.constant 0 : index
    %c0_301 = arith.constant 0 : index
    %290 = vector.load %arg2[%c36_299, %c0_300, %c0_301] : memref<49x4x256xbf16, #tpu.memory_space<vmem>>, vector<1x4x256xbf16>
    %291 = vector.shape_cast %290 : vector<1x4x256xbf16> to vector<4x256xbf16>
    %cst_302 = arith.constant dense<0.000000e+00> : vector<32x4xf32>
    %292 = tpu.matmul %289, %291, %cst_302 {dimension_numbers = #tpu.dot_dimension_numbers<[1], [1], [0], [0], [0, 0, 1, 0], [], []>} : vector<32x256xbf16>, vector<4x256xbf16>, vector<32x4xf32> -> vector<32x4xf32>
    %293 = vector.shape_cast %292 : vector<32x4xf32> to vector<4x8x4xf32>
    %cst_303 = arith.constant dense<0xFF800000> : vector<8x4xf32>
    %294 = vector.multi_reduction <maximumf>, %293, %cst_303 [0] : vector<4x8x4xf32> to vector<8x4xf32>
    %c0_304 = arith.constant 0 : index
    %c144 = arith.constant 144 : index
    %295 = vector.load %arg3[%c0_304, %c144] : memref<8x196xf32, #tpu.memory_space<vmem>>, vector<8x4xf32>
    tpu.vector_store %arg3[%c0_304, %c144], %294 {strides = array<i32>} : memref<8x196xf32, #tpu.memory_space<vmem>>, vector<8x4xf32>,
    %c37 = arith.constant 37 : index
    %c0_305 = arith.constant 0 : index
    %c0_306 = arith.constant 0 : index
    %296 = vector.load %arg1[%c37, %c0_305, %c0_306] : memref<49x32x256xbf16, #tpu.memory_space<vmem>>, vector<1x32x256xbf16>
    %297 = vector.shape_cast %296 : vector<1x32x256xbf16> to vector<32x256xbf16>
    %c37_307 = arith.constant 37 : index
    %c0_308 = arith.constant 0 : index
    %c0_309 = arith.constant 0 : index
    %298 = vector.load %arg2[%c37_307, %c0_308, %c0_309] : memref<49x4x256xbf16, #tpu.memory_space<vmem>>, vector<1x4x256xbf16>
    %299 = vector.shape_cast %298 : vector<1x4x256xbf16> to vector<4x256xbf16>
    %cst_310 = arith.constant dense<0.000000e+00> : vector<32x4xf32>
    %300 = tpu.matmul %297, %299, %cst_310 {dimension_numbers = #tpu.dot_dimension_numbers<[1], [1], [0], [0], [0, 0, 1, 0], [], []>} : vector<32x256xbf16>, vector<4x256xbf16>, vector<32x4xf32> -> vector<32x4xf32>
    %301 = vector.shape_cast %300 : vector<32x4xf32> to vector<4x8x4xf32>
    %cst_311 = arith.constant dense<0xFF800000> : vector<8x4xf32>
    %302 = vector.multi_reduction <maximumf>, %301, %cst_311 [0] : vector<4x8x4xf32> to vector<8x4xf32>
    %c0_312 = arith.constant 0 : index
    %c148 = arith.constant 148 : index
    %303 = vector.load %arg3[%c0_312, %c148] : memref<8x196xf32, #tpu.memory_space<vmem>>, vector<8x4xf32>
    tpu.vector_store %arg3[%c0_312, %c148], %302 {strides = array<i32>} : memref<8x196xf32, #tpu.memory_space<vmem>>, vector<8x4xf32>,
    %c38 = arith.constant 38 : index
    %c0_313 = arith.constant 0 : index
    %c0_314 = arith.constant 0 : index
    %304 = vector.load %arg1[%c38, %c0_313, %c0_314] : memref<49x32x256xbf16, #tpu.memory_space<vmem>>, vector<1x32x256xbf16>
    %305 = vector.shape_cast %304 : vector<1x32x256xbf16> to vector<32x256xbf16>
    %c38_315 = arith.constant 38 : index
    %c0_316 = arith.constant 0 : index
    %c0_317 = arith.constant 0 : index
    %306 = vector.load %arg2[%c38_315, %c0_316, %c0_317] : memref<49x4x256xbf16, #tpu.memory_space<vmem>>, vector<1x4x256xbf16>
    %307 = vector.shape_cast %306 : vector<1x4x256xbf16> to vector<4x256xbf16>
    %cst_318 = arith.constant dense<0.000000e+00> : vector<32x4xf32>
    %308 = tpu.matmul %305, %307, %cst_318 {dimension_numbers = #tpu.dot_dimension_numbers<[1], [1], [0], [0], [0, 0, 1, 0], [], []>} : vector<32x256xbf16>, vector<4x256xbf16>, vector<32x4xf32> -> vector<32x4xf32>
    %309 = vector.shape_cast %308 : vector<32x4xf32> to vector<4x8x4xf32>
    %cst_319 = arith.constant dense<0xFF800000> : vector<8x4xf32>
    %310 = vector.multi_reduction <maximumf>, %309, %cst_319 [0] : vector<4x8x4xf32> to vector<8x4xf32>
    %c0_320 = arith.constant 0 : index
    %c152 = arith.constant 152 : index
    %311 = vector.load %arg3[%c0_320, %c152] : memref<8x196xf32, #tpu.memory_space<vmem>>, vector<8x4xf32>
    tpu.vector_store %arg3[%c0_320, %c152], %310 {strides = array<i32>} : memref<8x196xf32, #tpu.memory_space<vmem>>, vector<8x4xf32>,
    %c39 = arith.constant 39 : index
    %c0_321 = arith.constant 0 : index
    %c0_322 = arith.constant 0 : index
    %312 = vector.load %arg1[%c39, %c0_321, %c0_322] : memref<49x32x256xbf16, #tpu.memory_space<vmem>>, vector<1x32x256xbf16>
    %313 = vector.shape_cast %312 : vector<1x32x256xbf16> to vector<32x256xbf16>
    %c39_323 = arith.constant 39 : index
    %c0_324 = arith.constant 0 : index
    %c0_325 = arith.constant 0 : index
    %314 = vector.load %arg2[%c39_323, %c0_324, %c0_325] : memref<49x4x256xbf16, #tpu.memory_space<vmem>>, vector<1x4x256xbf16>
    %315 = vector.shape_cast %314 : vector<1x4x256xbf16> to vector<4x256xbf16>
    %cst_326 = arith.constant dense<0.000000e+00> : vector<32x4xf32>
    %316 = tpu.matmul %313, %315, %cst_326 {dimension_numbers = #tpu.dot_dimension_numbers<[1], [1], [0], [0], [0, 0, 1, 0], [], []>} : vector<32x256xbf16>, vector<4x256xbf16>, vector<32x4xf32> -> vector<32x4xf32>
    %317 = vector.shape_cast %316 : vector<32x4xf32> to vector<4x8x4xf32>
    %cst_327 = arith.constant dense<0xFF800000> : vector<8x4xf32>
    %318 = vector.multi_reduction <maximumf>, %317, %cst_327 [0] : vector<4x8x4xf32> to vector<8x4xf32>
    %c0_328 = arith.constant 0 : index
    %c156 = arith.constant 156 : index
    %319 = vector.load %arg3[%c0_328, %c156] : memref<8x196xf32, #tpu.memory_space<vmem>>, vector<8x4xf32>
    tpu.vector_store %arg3[%c0_328, %c156], %318 {strides = array<i32>} : memref<8x196xf32, #tpu.memory_space<vmem>>, vector<8x4xf32>,
    %c40_329 = arith.constant 40 : index
    %c0_330 = arith.constant 0 : index
    %c0_331 = arith.constant 0 : index
    %320 = vector.load %arg1[%c40_329, %c0_330, %c0_331] : memref<49x32x256xbf16, #tpu.memory_space<vmem>>, vector<1x32x256xbf16>
    %321 = vector.shape_cast %320 : vector<1x32x256xbf16> to vector<32x256xbf16>
    %c40_332 = arith.constant 40 : index
    %c0_333 = arith.constant 0 : index
    %c0_334 = arith.constant 0 : index
    %322 = vector.load %arg2[%c40_332, %c0_333, %c0_334] : memref<49x4x256xbf16, #tpu.memory_space<vmem>>, vector<1x4x256xbf16>
    %323 = vector.shape_cast %322 : vector<1x4x256xbf16> to vector<4x256xbf16>
    %cst_335 = arith.constant dense<0.000000e+00> : vector<32x4xf32>
    %324 = tpu.matmul %321, %323, %cst_335 {dimension_numbers = #tpu.dot_dimension_numbers<[1], [1], [0], [0], [0, 0, 1, 0], [], []>} : vector<32x256xbf16>, vector<4x256xbf16>, vector<32x4xf32> -> vector<32x4xf32>
    %325 = vector.shape_cast %324 : vector<32x4xf32> to vector<4x8x4xf32>
    %cst_336 = arith.constant dense<0xFF800000> : vector<8x4xf32>
    %326 = vector.multi_reduction <maximumf>, %325, %cst_336 [0] : vector<4x8x4xf32> to vector<8x4xf32>
    %c0_337 = arith.constant 0 : index
    %c160 = arith.constant 160 : index
    %327 = vector.load %arg3[%c0_337, %c160] : memref<8x196xf32, #tpu.memory_space<vmem>>, vector<8x4xf32>
    tpu.vector_store %arg3[%c0_337, %c160], %326 {strides = array<i32>} : memref<8x196xf32, #tpu.memory_space<vmem>>, vector<8x4xf32>,
    %c41 = arith.constant 41 : index
    %c0_338 = arith.constant 0 : index
    %c0_339 = arith.constant 0 : index
    %328 = vector.load %arg1[%c41, %c0_338, %c0_339] : memref<49x32x256xbf16, #tpu.memory_space<vmem>>, vector<1x32x256xbf16>
    %329 = vector.shape_cast %328 : vector<1x32x256xbf16> to vector<32x256xbf16>
    %c41_340 = arith.constant 41 : index
    %c0_341 = arith.constant 0 : index
    %c0_342 = arith.constant 0 : index
    %330 = vector.load %arg2[%c41_340, %c0_341, %c0_342] : memref<49x4x256xbf16, #tpu.memory_space<vmem>>, vector<1x4x256xbf16>
    %331 = vector.shape_cast %330 : vector<1x4x256xbf16> to vector<4x256xbf16>
    %cst_343 = arith.constant dense<0.000000e+00> : vector<32x4xf32>
    %332 = tpu.matmul %329, %331, %cst_343 {dimension_numbers = #tpu.dot_dimension_numbers<[1], [1], [0], [0], [0, 0, 1, 0], [], []>} : vector<32x256xbf16>, vector<4x256xbf16>, vector<32x4xf32> -> vector<32x4xf32>
    %333 = vector.shape_cast %332 : vector<32x4xf32> to vector<4x8x4xf32>
    %cst_344 = arith.constant dense<0xFF800000> : vector<8x4xf32>
    %334 = vector.multi_reduction <maximumf>, %333, %cst_344 [0] : vector<4x8x4xf32> to vector<8x4xf32>
    %c0_345 = arith.constant 0 : index
    %c164 = arith.constant 164 : index
    %335 = vector.load %arg3[%c0_345, %c164] : memref<8x196xf32, #tpu.memory_space<vmem>>, vector<8x4xf32>
    tpu.vector_store %arg3[%c0_345, %c164], %334 {strides = array<i32>} : memref<8x196xf32, #tpu.memory_space<vmem>>, vector<8x4xf32>,
    %c42 = arith.constant 42 : index
    %c0_346 = arith.constant 0 : index
    %c0_347 = arith.constant 0 : index
    %336 = vector.load %arg1[%c42, %c0_346, %c0_347] : memref<49x32x256xbf16, #tpu.memory_space<vmem>>, vector<1x32x256xbf16>
    %337 = vector.shape_cast %336 : vector<1x32x256xbf16> to vector<32x256xbf16>
    %c42_348 = arith.constant 42 : index
    %c0_349 = arith.constant 0 : index
    %c0_350 = arith.constant 0 : index
    %338 = vector.load %arg2[%c42_348, %c0_349, %c0_350] : memref<49x4x256xbf16, #tpu.memory_space<vmem>>, vector<1x4x256xbf16>
    %339 = vector.shape_cast %338 : vector<1x4x256xbf16> to vector<4x256xbf16>
    %cst_351 = arith.constant dense<0.000000e+00> : vector<32x4xf32>
    %340 = tpu.matmul %337, %339, %cst_351 {dimension_numbers = #tpu.dot_dimension_numbers<[1], [1], [0], [0], [0, 0, 1, 0], [], []>} : vector<32x256xbf16>, vector<4x256xbf16>, vector<32x4xf32> -> vector<32x4xf32>
    %341 = vector.shape_cast %340 : vector<32x4xf32> to vector<4x8x4xf32>
    %cst_352 = arith.constant dense<0xFF800000> : vector<8x4xf32>
    %342 = vector.multi_reduction <maximumf>, %341, %cst_352 [0] : vector<4x8x4xf32> to vector<8x4xf32>
    %c0_353 = arith.constant 0 : index
    %c168 = arith.constant 168 : index
    %343 = vector.load %arg3[%c0_353, %c168] : memref<8x196xf32, #tpu.memory_space<vmem>>, vector<8x4xf32>
    tpu.vector_store %arg3[%c0_353, %c168], %342 {strides = array<i32>} : memref<8x196xf32, #tpu.memory_space<vmem>>, vector<8x4xf32>,
    %c43 = arith.constant 43 : index
    %c0_354 = arith.constant 0 : index
    %c0_355 = arith.constant 0 : index
    %344 = vector.load %arg1[%c43, %c0_354, %c0_355] : memref<49x32x256xbf16, #tpu.memory_space<vmem>>, vector<1x32x256xbf16>
    %345 = vector.shape_cast %344 : vector<1x32x256xbf16> to vector<32x256xbf16>
    %c43_356 = arith.constant 43 : index
    %c0_357 = arith.constant 0 : index
    %c0_358 = arith.constant 0 : index
    %346 = vector.load %arg2[%c43_356, %c0_357, %c0_358] : memref<49x4x256xbf16, #tpu.memory_space<vmem>>, vector<1x4x256xbf16>
    %347 = vector.shape_cast %346 : vector<1x4x256xbf16> to vector<4x256xbf16>
    %cst_359 = arith.constant dense<0.000000e+00> : vector<32x4xf32>
    %348 = tpu.matmul %345, %347, %cst_359 {dimension_numbers = #tpu.dot_dimension_numbers<[1], [1], [0], [0], [0, 0, 1, 0], [], []>} : vector<32x256xbf16>, vector<4x256xbf16>, vector<32x4xf32> -> vector<32x4xf32>
    %349 = vector.shape_cast %348 : vector<32x4xf32> to vector<4x8x4xf32>
    %cst_360 = arith.constant dense<0xFF800000> : vector<8x4xf32>
    %350 = vector.multi_reduction <maximumf>, %349, %cst_360 [0] : vector<4x8x4xf32> to vector<8x4xf32>
    %c0_361 = arith.constant 0 : index
    %c172 = arith.constant 172 : index
    %351 = vector.load %arg3[%c0_361, %c172] : memref<8x196xf32, #tpu.memory_space<vmem>>, vector<8x4xf32>
    tpu.vector_store %arg3[%c0_361, %c172], %350 {strides = array<i32>} : memref<8x196xf32, #tpu.memory_space<vmem>>, vector<8x4xf32>,
    %c44_362 = arith.constant 44 : index
    %c0_363 = arith.constant 0 : index
    %c0_364 = arith.constant 0 : index
    %352 = vector.load %arg1[%c44_362, %c0_363, %c0_364] : memref<49x32x256xbf16, #tpu.memory_space<vmem>>, vector<1x32x256xbf16>
    %353 = vector.shape_cast %352 : vector<1x32x256xbf16> to vector<32x256xbf16>
    %c44_365 = arith.constant 44 : index
    %c0_366 = arith.constant 0 : index
    %c0_367 = arith.constant 0 : index
    %354 = vector.load %arg2[%c44_365, %c0_366, %c0_367] : memref<49x4x256xbf16, #tpu.memory_space<vmem>>, vector<1x4x256xbf16>
    %355 = vector.shape_cast %354 : vector<1x4x256xbf16> to vector<4x256xbf16>
    %cst_368 = arith.constant dense<0.000000e+00> : vector<32x4xf32>
    %356 = tpu.matmul %353, %355, %cst_368 {dimension_numbers = #tpu.dot_dimension_numbers<[1], [1], [0], [0], [0, 0, 1, 0], [], []>} : vector<32x256xbf16>, vector<4x256xbf16>, vector<32x4xf32> -> vector<32x4xf32>
    %357 = vector.shape_cast %356 : vector<32x4xf32> to vector<4x8x4xf32>
    %cst_369 = arith.constant dense<0xFF800000> : vector<8x4xf32>
    %358 = vector.multi_reduction <maximumf>, %357, %cst_369 [0] : vector<4x8x4xf32> to vector<8x4xf32>
    %c0_370 = arith.constant 0 : index
    %c176 = arith.constant 176 : index
    %359 = vector.load %arg3[%c0_370, %c176] : memref<8x196xf32, #tpu.memory_space<vmem>>, vector<8x4xf32>
    tpu.vector_store %arg3[%c0_370, %c176], %358 {strides = array<i32>} : memref<8x196xf32, #tpu.memory_space<vmem>>, vector<8x4xf32>,
    %c45 = arith.constant 45 : index
    %c0_371 = arith.constant 0 : index
    %c0_372 = arith.constant 0 : index
    %360 = vector.load %arg1[%c45, %c0_371, %c0_372] : memref<49x32x256xbf16, #tpu.memory_space<vmem>>, vector<1x32x256xbf16>
    %361 = vector.shape_cast %360 : vector<1x32x256xbf16> to vector<32x256xbf16>
    %c45_373 = arith.constant 45 : index
    %c0_374 = arith.constant 0 : index
    %c0_375 = arith.constant 0 : index
    %362 = vector.load %arg2[%c45_373, %c0_374, %c0_375] : memref<49x4x256xbf16, #tpu.memory_space<vmem>>, vector<1x4x256xbf16>
    %363 = vector.shape_cast %362 : vector<1x4x256xbf16> to vector<4x256xbf16>
    %cst_376 = arith.constant dense<0.000000e+00> : vector<32x4xf32>
    %364 = tpu.matmul %361, %363, %cst_376 {dimension_numbers = #tpu.dot_dimension_numbers<[1], [1], [0], [0], [0, 0, 1, 0], [], []>} : vector<32x256xbf16>, vector<4x256xbf16>, vector<32x4xf32> -> vector<32x4xf32>
    %365 = vector.shape_cast %364 : vector<32x4xf32> to vector<4x8x4xf32>
    %cst_377 = arith.constant dense<0xFF800000> : vector<8x4xf32>
    %366 = vector.multi_reduction <maximumf>, %365, %cst_377 [0] : vector<4x8x4xf32> to vector<8x4xf32>
    %c0_378 = arith.constant 0 : index
    %c180 = arith.constant 180 : index
    %367 = vector.load %arg3[%c0_378, %c180] : memref<8x196xf32, #tpu.memory_space<vmem>>, vector<8x4xf32>
    tpu.vector_store %arg3[%c0_378, %c180], %366 {strides = array<i32>} : memref<8x196xf32, #tpu.memory_space<vmem>>, vector<8x4xf32>,
    %c46 = arith.constant 46 : index
    %c0_379 = arith.constant 0 : index
    %c0_380 = arith.constant 0 : index
    %368 = vector.load %arg1[%c46, %c0_379, %c0_380] : memref<49x32x256xbf16, #tpu.memory_space<vmem>>, vector<1x32x256xbf16>
    %369 = vector.shape_cast %368 : vector<1x32x256xbf16> to vector<32x256xbf16>
    %c46_381 = arith.constant 46 : index
    %c0_382 = arith.constant 0 : index
    %c0_383 = arith.constant 0 : index
    %370 = vector.load %arg2[%c46_381, %c0_382, %c0_383] : memref<49x4x256xbf16, #tpu.memory_space<vmem>>, vector<1x4x256xbf16>
    %371 = vector.shape_cast %370 : vector<1x4x256xbf16> to vector<4x256xbf16>
    %cst_384 = arith.constant dense<0.000000e+00> : vector<32x4xf32>
    %372 = tpu.matmul %369, %371, %cst_384 {dimension_numbers = #tpu.dot_dimension_numbers<[1], [1], [0], [0], [0, 0, 1, 0], [], []>} : vector<32x256xbf16>, vector<4x256xbf16>, vector<32x4xf32> -> vector<32x4xf32>
    %373 = vector.shape_cast %372 : vector<32x4xf32> to vector<4x8x4xf32>
    %cst_385 = arith.constant dense<0xFF800000> : vector<8x4xf32>
    %374 = vector.multi_reduction <maximumf>, %373, %cst_385 [0] : vector<4x8x4xf32> to vector<8x4xf32>
    %c0_386 = arith.constant 0 : index
    %c184 = arith.constant 184 : index
    %375 = vector.load %arg3[%c0_386, %c184] : memref<8x196xf32, #tpu.memory_space<vmem>>, vector<8x4xf32>
    tpu.vector_store %arg3[%c0_386, %c184], %374 {strides = array<i32>} : memref<8x196xf32, #tpu.memory_space<vmem>>, vector<8x4xf32>,
    %c47 = arith.constant 47 : index
    %c0_387 = arith.constant 0 : index
    %c0_388 = arith.constant 0 : index
    %376 = vector.load %arg1[%c47, %c0_387, %c0_388] : memref<49x32x256xbf16, #tpu.memory_space<vmem>>, vector<1x32x256xbf16>
    %377 = vector.shape_cast %376 : vector<1x32x256xbf16> to vector<32x256xbf16>
    %c47_389 = arith.constant 47 : index
    %c0_390 = arith.constant 0 : index
    %c0_391 = arith.constant 0 : index
    %378 = vector.load %arg2[%c47_389, %c0_390, %c0_391] : memref<49x4x256xbf16, #tpu.memory_space<vmem>>, vector<1x4x256xbf16>
    %379 = vector.shape_cast %378 : vector<1x4x256xbf16> to vector<4x256xbf16>
    %cst_392 = arith.constant dense<0.000000e+00> : vector<32x4xf32>
    %380 = tpu.matmul %377, %379, %cst_392 {dimension_numbers = #tpu.dot_dimension_numbers<[1], [1], [0], [0], [0, 0, 1, 0], [], []>} : vector<32x256xbf16>, vector<4x256xbf16>, vector<32x4xf32> -> vector<32x4xf32>
    %381 = vector.shape_cast %380 : vector<32x4xf32> to vector<4x8x4xf32>
    %cst_393 = arith.constant dense<0xFF800000> : vector<8x4xf32>
    %382 = vector.multi_reduction <maximumf>, %381, %cst_393 [0] : vector<4x8x4xf32> to vector<8x4xf32>
    %c0_394 = arith.constant 0 : index
    %c188 = arith.constant 188 : index
    %383 = vector.load %arg3[%c0_394, %c188] : memref<8x196xf32, #tpu.memory_space<vmem>>, vector<8x4xf32>
    tpu.vector_store %arg3[%c0_394, %c188], %382 {strides = array<i32>} : memref<8x196xf32, #tpu.memory_space<vmem>>, vector<8x4xf32>,
    %c48_395 = arith.constant 48 : index
    %c0_396 = arith.constant 0 : index
    %c0_397 = arith.constant 0 : index
    %384 = vector.load %arg1[%c48_395, %c0_396, %c0_397] : memref<49x32x256xbf16, #tpu.memory_space<vmem>>, vector<1x32x256xbf16>
    %385 = vector.shape_cast %384 : vector<1x32x256xbf16> to vector<32x256xbf16>
    %c48_398 = arith.constant 48 : index
    %c0_399 = arith.constant 0 : index
    %c0_400 = arith.constant 0 : index
    %386 = vector.load %arg2[%c48_398, %c0_399, %c0_400] : memref<49x4x256xbf16, #tpu.memory_space<vmem>>, vector<1x4x256xbf16>
    %387 = vector.shape_cast %386 : vector<1x4x256xbf16> to vector<4x256xbf16>
    %cst_401 = arith.constant dense<0.000000e+00> : vector<32x4xf32>
    %388 = tpu.matmul %385, %387, %cst_401 {dimension_numbers = #tpu.dot_dimension_numbers<[1], [1], [0], [0], [0, 0, 1, 0], [], []>} : vector<32x256xbf16>, vector<4x256xbf16>, vector<32x4xf32> -> vector<32x4xf32>
    %389 = vector.shape_cast %388 : vector<32x4xf32> to vector<4x8x4xf32>
    %cst_402 = arith.constant dense<0xFF800000> : vector<8x4xf32>
    %390 = vector.multi_reduction <maximumf>, %389, %cst_402 [0] : vector<4x8x4xf32> to vector<8x4xf32>
    %c0_403 = arith.constant 0 : index
    %c192 = arith.constant 192 : index
    %391 = vector.load %arg3[%c0_403, %c192] : memref<8x196xf32, #tpu.memory_space<vmem>>, vector<8x4xf32>
    tpu.vector_store %arg3[%c0_403, %c192], %390 {strides = array<i32>} : memref<8x196xf32, #tpu.memory_space<vmem>>, vector<8x4xf32>,
    return
  }
  func.func @transform_0(%arg0: i32) -> (i32, i32, i32) {
    %c0_i32 = arith.constant 0 : i32
    %c0_i32_0 = arith.constant 0 : i32
    %c0_i32_1 = arith.constant 0 : i32
    %c0_i32_2 = arith.constant 0 : i32
    return %c0_i32, %c0_i32_0, %c0_i32_1 : i32, i32, i32
  }
  func.func @transform_1(%arg0: i32) -> (i32, i32, i32) {
    %c0_i32 = arith.constant 0 : i32
    %c0_i32_0 = arith.constant 0 : i32
    %c0_i32_1 = arith.constant 0 : i32
    %c0_i32_2 = arith.constant 0 : i32
    return %c0_i32, %c0_i32_0, %c0_i32_1 : i32, i32, i32
  }
  func.func @transform_2(%arg0: i32) -> (i32, i32) {
    %c0_i32 = arith.constant 0 : i32
    %c0_i32_0 = arith.constant 0 : i32
    %c0_i32_1 = arith.constant 0 : i32
    return %c0_i32, %c0_i32_0 : i32, i32
  }
}

</mosaic_0001>

<llo_original>
// kernel: ps_roi_align_pool.1
$region0: #{ps_roi_align_pool.1}
  #allocation0 [shape = 'u32[]', space=smem, size = 0x4, offset = 0x4, fixed_abs, tag = 'smem constant byte address 0x4 - core index']
  #allocation1 [shape = 'u32[144,128]{1,0:T(1,128)}', space=vmem, size = 0x12000, scoped, tag = 'internal scratch']
  %s0 = inlined_call_operand.vmem [shape: bf16[49,32,256], index: 0, kind: input, shape index: {}]
  %s1 = inlined_call_operand.vmem [shape: bf16[49,4,256], index: 1, kind: input, shape index: {}]
  %s2 = inlined_call_operand.vmem [shape: f32[8,196], index: 2, kind: output, shape index: {}]
  %s3 = sld [smem:[#allocation0]]
  $region18: #{ps_roi_align_pool.1} parent=0
    _
  %s5 = ssub.s32 1, %s3
  %s6 = scalar_select 0, %s5, %s3
  // Predicated region
  $region2: #{ps_roi_align_pool.1} parent=0 // pred_check
    _
  $region3: #{ps_roi_align_pool.1} parent=0 // pred_check_branch
    %8 = sbr.rel (0) target = $region5
  $region4: #{ps_roi_align_pool.1} parent=0 // pred_region
    _
  $region5: #{ps_roi_align_pool.1} parent=0 // pred_fallthru
    _
  // Predicated region
  $region6: #{ps_roi_align_pool.1} parent=0 // pred_check
    _
  $region7: #{ps_roi_align_pool.1} parent=0 // pred_check_branch
    %10 = sbr.rel (0) target = $region9
  $region8: #{ps_roi_align_pool.1} parent=0 // pred_region
    _
  $region9: #{ps_roi_align_pool.1} parent=0 // pred_fallthru
    _
  %v12 = vld [vmem:[%s0] sm:$0xff]
  %v13 = vld [vmem:[%s0 + $0x8] sm:$0xff]
  %v14 = vld [vmem:[%s0 + $0x10] sm:$0xff]
  %v15 = vld [vmem:[%s0 + $0x18] sm:$0xff]
  %v16 = vld [vmem:[%s1] sm:$0xf]
  %v21 = vunpack.c.l.b16 %v12
  %v22 = vunpack.c.h.b16 %v12
  %v23 = vunpack.c.l.b16 %v13
  %v24 = vunpack.c.h.b16 %v13
  %v25 = vunpack.c.l.b16 %v14
  %v26 = vunpack.c.h.b16 %v14
  %v27 = vunpack.c.l.b16 %v15
  %v28 = vunpack.c.h.b16 %v15
  %v29 = vpack.c.b16 %v23, %v21
  %v30 = vpack.c.b16 %v24, %v22
  %v31 = vpack.c.b16 %v27, %v25
  %v32 = vpack.c.b16 %v28, %v26
  %v39 = vunpack.c.l.s4 1983009808
  %v40 = vunpack.c.0.s8 %v39
  %v41 = vlaneseq
  %v42 = vshrl.u32 %v41, 7
  %v43 = vsub.s32 %v40, %v42
  %v44 = vrot.slane %v16, %v43
  %v45 = vcombine.high %v44, %v44
  %48 = vmatprep.subr.bf16.mxu0 %v45
  %49 = vmatpush1.bf16.xpose.msra.mxu0 %v44
  %50 = vmatprep.subr.bf16.mxu0 0
  %51 = vmatpush1.bf16.xpose.msra.mxu0 0
  %52 = vmatprep.subr.bf16.mxu0 0
  %53 = vmatpush1.bf16.xpose.msra.mxu0 0
  %54 = vmatprep.subr.bf16.mxu0 0
  %55 = vmatpush1.bf16.xpose.msra.mxu0 0
  %56 = vmatprep.subr.bf16.mxu0 0
  %57 = vmatpush1.bf16.xpose.msra.mxu0 0
  %58 = vmatprep.subr.bf16.mxu0 0
  %59 = vmatpush1.bf16.xpose.msra.mxu0 0
  %60 = vmatprep.subr.bf16.mxu0 0
  %61 = vmatpush1.bf16.xpose.msra.mxu0 0
  %62 = vmatprep.subr.bf16.mxu0 0
  %63 = vmatpush1.bf16.xpose.msra.mxu0 0
  %64 = vmatprep.subr.bf16.mxu0 0
  %65 = vmatpush1.bf16.xpose.msra.mxu0 0
  %66 = vmatprep.subr.bf16.mxu0 0
  %67 = vmatpush1.bf16.xpose.msra.mxu0 0
  %68 = vmatprep.subr.bf16.mxu0 0
  %69 = vmatpush1.bf16.xpose.msra.mxu0 0
  %70 = vmatprep.subr.bf16.mxu0 0
  %71 = vmatpush1.bf16.xpose.msra.mxu0 0
  %72 = vmatprep.subr.bf16.mxu0 0
  %73 = vmatpush1.bf16.xpose.msra.mxu0 0
  %74 = vmatprep.subr.bf16.mxu0 0
  %75 = vmatpush1.bf16.xpose.msra.mxu0 0
  %76 = vmatprep.subr.bf16.mxu0 0
  %77 = vmatpush1.bf16.xpose.msra.mxu0 0
  %78 = vmatprep.subr.bf16.mxu0 0
  %79 = vmatpush1.bf16.xpose.msra.mxu0 0
  %80 = vmatprep.mubr.bf16.mxu0 %v30
  %81 = vmatmul.mubr.bf16.gmra.mrb[0].mxu0 %v29
  %v82 = vpop.f32.mrb[0].mxu0
  %v83 = vadd.f32 0.0, %v82
  %v84 = vpop.f32.mrb[0].mxu0
  %v85 = vpop.f32.mrb[0].mxu0
  %v86 = vadd.f32 0.0, %v85
  %v87 = vpop.f32.mrb[0].mxu0
  %88 = vmatprep.mubr.bf16.mxu0 %v32
  %89 = vmatmul.mubr.bf16.gmra.mrb[0].mxu0 %v31
  %v90 = vpop.f32.mrb[0].mxu0
  %v91 = vadd.f32 0.0, %v90
  %v92 = vpop.f32.mrb[0].mxu0
  %v93 = vpop.f32.mrb[0].mxu0
  %v94 = vadd.f32 0.0, %v93
  %v95 = vpop.f32.mrb[0].mxu0
  %96 = vdwg.mxu0
  %vm97 = vcmask 31744
  %v98 = vsel %vm97, %v83, -inf
  %v99 = vsel %vm97, %v86, -inf
  %v100 = vsel %vm97, %v91, -inf
  %v101 = vsel %vm97, %v94, -inf
  %v102 = vmax.f32 %v98, %v99
  %v103 = vmax.f32 %v100, %v101
  %v104 = vmax.f32 %v102, %v103
  %105 = vst.msk [vmem:[%s2] sm:$0xff] %vm97, %v104
  %s106 = scalar_lea.vmem %s0, 32
  %v107 = vld [vmem:[%s106] sm:$0xff]
  %v108 = vld [vmem:[%s106 + $0x8] sm:$0xff]
  %v109 = vld [vmem:[%s106 + $0x10] sm:$0xff]
  %v110 = vld [vmem:[%s106 + $0x18] sm:$0xff]
  %s111 = scalar_lea.vmem %s1, 4
  %v112 = vld [vmem:[%s111] sm:$0xf]
  %v117 = vunpack.c.l.b16 %v107
  %v118 = vunpack.c.h.b16 %v107
  %v119 = vunpack.c.l.b16 %v108
  %v120 = vunpack.c.h.b16 %v108
  %v121 = vunpack.c.l.b16 %v109
  %v122 = vunpack.c.h.b16 %v109
  %v123 = vunpack.c.l.b16 %v110
  %v124 = vunpack.c.h.b16 %v110
  %v125 = vpack.c.b16 %v119, %v117
  %v126 = vpack.c.b16 %v120, %v118
  %v127 = vpack.c.b16 %v123, %v121
  %v128 = vpack.c.b16 %v124, %v122
  %v135 = vunpack.c.l.s4 1983009808
  %v136 = vunpack.c.0.s8 %v135
  %v137 = vlaneseq
  %v138 = vshrl.u32 %v137, 7
  %v139 = vsub.s32 %v136, %v138
  %v140 = vrot.slane %v112, %v139
  %v141 = vcombine.high %v140, %v140
  %144 = vmatprep.subr.bf16.mxu0 %v141
  %145 = vmatpush1.bf16.xpose.msra.mxu0 %v140
  %146 = vmatprep.subr.bf16.mxu0 0
  %147 = vmatpush1.bf16.xpose.msra.mxu0 0
  %148 = vmatprep.subr.bf16.mxu0 0
  %149 = vmatpush1.bf16.xpose.msra.mxu0 0
  %150 = vmatprep.subr.bf16.mxu0 0
  %151 = vmatpush1.bf16.xpose.msra.mxu0 0
  %152 = vmatprep.subr.bf16.mxu0 0
  %153 = vmatpush1.bf16.xpose.msra.mxu0 0
  %154 = vmatprep.subr.bf16.mxu0 0
  %155 = vmatpush1.bf16.xpose.msra.mxu0 0
  %156 = vmatprep.subr.bf16.mxu0 0
  %157 = vmatpush1.bf16.xpose.msra.mxu0 0
  %158 = vmatprep.subr.bf16.mxu0 0
  %159 = vmatpush1.bf16.xpose.msra.mxu0 0
  %160 = vmatprep.subr.bf16.mxu0 0
  %161 = vmatpush1.bf16.xpose.msra.mxu0 0
  %162 = vmatprep.subr.bf16.mxu0 0
  %163 = vmatpush1.bf16.xpose.msra.mxu0 0
  %164 = vmatprep.subr.bf16.mxu0 0
  %165 = vmatpush1.bf16.xpose.msra.mxu0 0
  %166 = vmatprep.subr.bf16.mxu0 0
  %167 = vmatpush1.bf16.xpose.msra.mxu0 0
  %168 = vmatprep.subr.bf16.mxu0 0
  %169 = vmatpush1.bf16.xpose.msra.mxu0 0
  %170 = vmatprep.subr.bf16.mxu0 0
  %171 = vmatpush1.bf16.xpose.msra.mxu0 0
  %172 = vmatprep.subr.bf16.mxu0 0
  %173 = vmatpush1.bf16.xpose.msra.mxu0 0
  %174 = vmatprep.subr.bf16.mxu0 0
  %175 = vmatpush1.bf16.xpose.msra.mxu0 0
  %176 = vmatprep.mubr.bf16.mxu0 %v126
  %177 = vmatmul.mubr.bf16.gmra.mrb[0].mxu0 %v125
  %v178 = vpop.f32.mrb[0].mxu0
  %v179 = vadd.f32 0.0, %v178
  %v180 = vpop.f32.mrb[0].mxu0
  %v181 = vpop.f32.mrb[0].mxu0
  %v182 = vadd.f32 0.0, %v181
  %v183 = vpop.f32.mrb[0].mxu0
  %184 = vmatprep.mubr.bf16.mxu0 %v128
  %185 = vmatmul.mubr.bf16.gmra.mrb[0].mxu0 %v127
  %v186 = vpop.f32.mrb[0].mxu0
  %v187 = vadd.f32 0.0, %v186
  %v188 = vpop.f32.mrb[0].mxu0
  %v189 = vpop.f32.mrb[0].mxu0
  %v190 = vadd.f32 0.0, %v189
  %v191 = vpop.f32.mrb[0].mxu0
  %192 = vdwg.mxu0
  %v193 = vsel %vm97, %v179, -inf
  %v194 = vsel %vm97, %v182, -inf
  %v195 = vsel %vm97, %v187, -inf
  %v196 = vsel %vm97, %v190, -inf
  %v197 = vmax.f32 %v193, %v194
  %v198 = vmax.f32 %v195, %v196
  %v199 = vmax.f32 %v197, %v198
  %201 = vrot.lane.b32.xlu0 %v199, 4
  %v202 = vpop.permute.xlu0 %201
  %vm204 = vcmask 64544
  %205 = vst.msk [vmem:[%s2] sm:$0xff] %vm204, %v202
  %s206 = scalar_lea.vmem %s0, 64
  %v207 = vld [vmem:[%s206] sm:$0xff]
  %v208 = vld [vmem:[%s206 + $0x8] sm:$0xff]
  %v209 = vld [vmem:[%s206 + $0x10] sm:$0xff]
  %v210 = vld [vmem:[%s206 + $0x18] sm:$0xff]
  %s211 = scalar_lea.vmem %s1, 8
  %v212 = vld [vmem:[%s211] sm:$0xf]
  %v217 = vunpack.c.l.b16 %v207
  %v218 = vunpack.c.h.b16 %v207
  %v219 = vunpack.c.l.b16 %v208
  %v220 = vunpack.c.h.b16 %v208
  %v221 = vunpack.c.l.b16 %v209
  %v222 = vunpack.c.h.b16 %v209
  %v223 = vunpack.c.l.b16 %v210
  %v224 = vunpack.c.h.b16 %v210
  %v225 = vpack.c.b16 %v219, %v217
  %v226 = vpack.c.b16 %v220, %v218
  %v227 = vpack.c.b16 %v223, %v221
  %v228 = vpack.c.b16 %v224, %v222
  %v235 = vunpack.c.l.s4 1983009808
  %v236 = vunpack.c.0.s8 %v235
  %v237 = vlaneseq
  %v238 = vshrl.u32 %v237, 7
  %v239 = vsub.s32 %v236, %v238
  %v240 = vrot.slane %v212, %v239
  %v241 = vcombine.high %v240, %v240
  %244 = vmatprep.subr.bf16.mxu0 %v241
  %245 = vmatpush1.bf16.xpose.msra.mxu0 %v240
  %246 = vmatprep.subr.bf16.mxu0 0
  %247 = vmatpush1.bf16.xpose.msra.mxu0 0
  %248 = vmatprep.subr.bf16.mxu0 0
  %249 = vmatpush1.bf16.xpose.msra.mxu0 0
  %250 = vmatprep.subr.bf16.mxu0 0
  %251 = vmatpush1.bf16.xpose.msra.mxu0 0
  %252 = vmatprep.subr.bf16.mxu0 0
  %253 = vmatpush1.bf16.xpose.msra.mxu0 0
  %254 = vmatprep.subr.bf16.mxu0 0
  %255 = vmatpush1.bf16.xpose.msra.mxu0 0
  %256 = vmatprep.subr.bf16.mxu0 0
  %257 = vmatpush1.bf16.xpose.msra.mxu0 0
  %258 = vmatprep.subr.bf16.mxu0 0
  %259 = vmatpush1.bf16.xpose.msra.mxu0 0
  %260 = vmatprep.subr.bf16.mxu0 0
  %261 = vmatpush1.bf16.xpose.msra.mxu0 0
  %262 = vmatprep.subr.bf16.mxu0 0
  %263 = vmatpush1.bf16.xpose.msra.mxu0 0
  %264 = vmatprep.subr.bf16.mxu0 0
  %265 = vmatpush1.bf16.xpose.msra.mxu0 0
  %266 = vmatprep.subr.bf16.mxu0 0
  %267 = vmatpush1.bf16.xpose.msra.mxu0 0
  %268 = vmatprep.subr.bf16.mxu0 0
  %269 = vmatpush1.bf16.xpose.msra.mxu0 0
  %270 = vmatprep.subr.bf16.mxu0 0
  %271 = vmatpush1.bf16.xpose.msra.mxu0 0
  %272 = vmatprep.subr.bf16.mxu0 0
  %273 = vmatpush1.bf16.xpose.msra.mxu0 0
  %274 = vmatprep.subr.bf16.mxu0 0
  %275 = vmatpush1.bf16.xpose.msra.mxu0 0
  %276 = vmatprep.mubr.bf16.mxu0 %v226
  %277 = vmatmul.mubr.bf16.gmra.mrb[0].mxu0 %v225
  %v278 = vpop.f32.mrb[0].mxu0
  %v279 = vadd.f32 0.0, %v278
  %v280 = vpop.f32.mrb[0].mxu0
  %v281 = vpop.f32.mrb[0].mxu0
  %v282 = vadd.f32 0.0, %v281
  %v283 = vpop.f32.mrb[0].mxu0
  %284 = vmatprep.mubr.bf16.mxu0 %v228
  %285 = vmatmul.mubr.bf16.gmra.mrb[0].mxu0 %v227
  %v286 = vpop.f32.mrb[0].mxu0
  %v287 = vadd.f32 0.0, %v286
  %v288 = vpop.f32.mrb[0].mxu0
  %v289 = vpop.f32.mrb[0].mxu0
  %v290 = vadd.f32 0.0, %v289
  %v291 = vpop.f32.mrb[0].mxu0
  %292 = vdwg.mxu0
  %v293 = vsel %vm97, %v279, -inf
  %v294 = vsel %vm97, %v282, -inf
  %v295 = vsel %vm97, %v287, -inf
  %v296 = vsel %vm97, %v290, -inf
  %v297 = vmax.f32 %v293, %v294
  %v298 = vmax.f32 %v295, %v296
  %v299 = vmax.f32 %v297, %v298
  %301 = vrot.lane.b32.xlu0 %v299, 8
  %v302 = vpop.permute.xlu0 %301
  %vm304 = vcmask 97344
  %305 = vst.msk [vmem:[%s2] sm:$0xff] %vm304, %v302
  %s306 = scalar_lea.vmem %s0, 96
  %v307 = vld [vmem:[%s306] sm:$0xff]
  %v308 = vld [vmem:[%s306 + $0x8] sm:$0xff]
  %v309 = vld [vmem:[%s306 + $0x10] sm:$0xff]
  %v310 = vld [vmem:[%s306 + $0x18] sm:$0xff]
  %s311 = scalar_lea.vmem %s1, 12
  %v312 = vld [vmem:[%s311] sm:$0xf]
  %v317 = vunpack.c.l.b16 %v307
  %v318 = vunpack.c.h.b16 %v307
  %v319 = vunpack.c.l.b16 %v308
  %v320 = vunpack.c.h.b16 %v308
  %v321 = vunpack.c.l.b16 %v309
  %v322 = vunpack.c.h.b16 %v309
  %v323 = vunpack.c.l.b16 %v310
  %v324 = vunpack.c.h.b16 %v310
  %v325 = vpack.c.b16 %v319, %v317
  %v326 = vpack.c.b16 %v320, %v318
  %v327 = vpack.c.b16 %v323, %v321
  %v328 = vpack.c.b16 %v324, %v322
  %v335 = vunpack.c.l.s4 1983009808
  %v336 = vunpack.c.0.s8 %v335
  %v337 = vlaneseq
  %v338 = vshrl.u32 %v337, 7
  %v339 = vsub.s32 %v336, %v338
  %v340 = vrot.slane %v312, %v339
  %v341 = vcombine.high %v340, %v340
  %344 = vmatprep.subr.bf16.mxu0 %v341
  %345 = vmatpush1.bf16.xpose.msra.mxu0 %v340
  %346 = vmatprep.subr.bf16.mxu0 0
  %347 = vmatpush1.bf16.xpose.msra.mxu0 0
  %348 = vmatprep.subr.bf16.mxu0 0
  %349 = vmatpush1.bf16.xpose.msra.mxu0 0
  %350 = vmatprep.subr.bf16.mxu0 0
  %351 = vmatpush1.bf16.xpose.msra.mxu0 0
  %352 = vmatprep.subr.bf16.mxu0 0
  %353 = vmatpush1.bf16.xpose.msra.mxu0 0
  %354 = vmatprep.subr.bf16.mxu0 0
  %355 = vmatpush1.bf16.xpose.msra.mxu0 0
  %356 = vmatprep.subr.bf16.mxu0 0
  %357 = vmatpush1.bf16.xpose.msra.mxu0 0
  %358 = vmatprep.subr.bf16.mxu0 0
  %359 = vmatpush1.bf16.xpose.msra.mxu0 0
  %360 = vmatprep.subr.bf16.mxu0 0
  %361 = vmatpush1.bf16.xpose.msra.mxu0 0
  %362 = vmatprep.subr.bf16.mxu0 0
  %363 = vmatpush1.bf16.xpose.msra.mxu0 0
  %364 = vmatprep.subr.bf16.mxu0 0
  %365 = vmatpush1.bf16.xpose.msra.mxu0 0
  %366 = vmatprep.subr.bf16.mxu0 0
  %367 = vmatpush1.bf16.xpose.msra.mxu0 0
  %368 = vmatprep.subr.bf16.mxu0 0
  %369 = vmatpush1.bf16.xpose.msra.mxu0 0
  %370 = vmatprep.subr.bf16.mxu0 0
  %371 = vmatpush1.bf16.xpose.msra.mxu0 0
  %372 = vmatprep.subr.bf16.mxu0 0
  %373 = vmatpush1.bf16.xpose.msra.mxu0 0
  %374 = vmatprep.subr.bf16.mxu0 0
  %375 = vmatpush1.bf16.xpose.msra.mxu0 0
  %376 = vmatprep.mubr.bf16.mxu0 %v326
  %377 = vmatmul.mubr.bf16.gmra.mrb[0].mxu0 %v325
  %v378 = vpop.f32.mrb[0].mxu0
  %v379 = vadd.f32 0.0, %v378
  %v380 = vpop.f32.mrb[0].mxu0
  %v381 = vpop.f32.mrb[0].mxu0
  %v382 = vadd.f32 0.0, %v381
  %v383 = vpop.f32.mrb[0].mxu0
  %384 = vmatprep.mubr.bf16.mxu0 %v328
  %385 = vmatmul.mubr.bf16.gmra.mrb[0].mxu0 %v327
  %v386 = vpop.f32.mrb[0].mxu0
  %v387 = vadd.f32 0.0, %v386
  %v388 = vpop.f32.mrb[0].mxu0
  %v389 = vpop.f32.mrb[0].mxu0
  %v390 = vadd.f32 0.0, %v389
  %v391 = vpop.f32.mrb[0].mxu0
  %392 = vdwg.mxu0
  %v393 = vsel %vm97, %v379, -inf
  %v394 = vsel %vm97, %v382, -inf
  %v395 = vsel %vm97, %v387, -inf
  %v396 = vsel %vm97, %v390, -inf
  %v397 = vmax.f32 %v393, %v394
  %v398 = vmax.f32 %v395, %v396
  %v399 = vmax.f32 %v397, %v398
  %401 = vrot.lane.b32.xlu0 %v399, 12
  %v402 = vpop.permute.xlu0 %401
  %vm404 = vcmask 130144
  %405 = vst.msk [vmem:[%s2] sm:$0xff] %vm404, %v402
  %s406 = scalar_lea.vmem %s0, 128
  %v407 = vld [vmem:[%s406] sm:$0xff]
  %v408 = vld [vmem:[%s406 + $0x8] sm:$0xff]
  %v409 = vld [vmem:[%s406 + $0x10] sm:$0xff]
  %v410 = vld [vmem:[%s406 + $0x18] sm:$0xff]
  %s411 = scalar_lea.vmem %s1, 16
  %v412 = vld [vmem:[%s411] sm:$0xf]
  %v417 = vunpack.c.l.b16 %v407
  %v418 = vunpack.c.h.b16 %v407
  %v419 = vunpack.c.l.b16 %v408
  %v420 = vunpack.c.h.b16 %v408
  %v421 = vunpack.c.l.b16 %v409
  %v422 = vunpack.c.h.b16 %v409
  %v423 = vunpack.c.l.b16 %v410
  %v424 = vunpack.c.h.b16 %v410
  %v425 = vpack.c.b16 %v419, %v417
  %v426 = vpack.c.b16 %v420, %v418
  %v427 = vpack.c.b16 %v423, %v421
  %v428 = vpack.c.b16 %v424, %v422
  %v435 = vunpack.c.l.s4 1983009808
  %v436 = vunpack.c.0.s8 %v435
  %v437 = vlaneseq
  %v438 = vshrl.u32 %v437, 7
  %v439 = vsub.s32 %v436, %v438
  %v440 = vrot.slane %v412, %v439
  %v441 = vcombine.high %v440, %v440
  %444 = vmatprep.subr.bf16.mxu0 %v441
  %445 = vmatpush1.bf16.xpose.msra.mxu0 %v440
  %446 = vmatprep.subr.bf16.mxu0 0
  %447 = vmatpush1.bf16.xpose.msra.mxu0 0
  %448 = vmatprep.subr.bf16.mxu0 0
  %449 = vmatpush1.bf16.xpose.msra.mxu0 0
  %450 = vmatprep.subr.bf16.mxu0 0
  %451 = vmatpush1.bf16.xpose.msra.mxu0 0
  %452 = vmatprep.subr.bf16.mxu0 0
  %453 = vmatpush1.bf16.xpose.msra.mxu0 0
  %454 = vmatprep.subr.bf16.mxu0 0
  %455 = vmatpush1.bf16.xpose.msra.mxu0 0
  %456 = vmatprep.subr.bf16.mxu0 0
  %457 = vmatpush1.bf16.xpose.msra.mxu0 0
  %458 = vmatprep.subr.bf16.mxu0 0
  %459 = vmatpush1.bf16.xpose.msra.mxu0 0
  %460 = vmatprep.subr.bf16.mxu0 0
  %461 = vmatpush1.bf16.xpose.msra.mxu0 0
  %462 = vmatprep.subr.bf16.mxu0 0
  %463 = vmatpush1.bf16.xpose.msra.mxu0 0
  %464 = vmatprep.subr.bf16.mxu0 0
  %465 = vmatpush1.bf16.xpose.msra.mxu0 0
  %466 = vmatprep.subr.bf16.mxu0 0
  %467 = vmatpush1.bf16.xpose.msra.mxu0 0
  %468 = vmatprep.subr.bf16.mxu0 0
  %469 = vmatpush1.bf16.xpose.msra.mxu0 0
  %470 = vmatprep.subr.bf16.mxu0 0
  %471 = vmatpush1.bf16.xpose.msra.mxu0 0
  %472 = vmatprep.subr.bf16.mxu0 0
  %473 = vmatpush1.bf16.xpose.msra.mxu0 0
  %474 = vmatprep.subr.bf16.mxu0 0
  %475 = vmatpush1.bf16.xpose.msra.mxu0 0
  %476 = vmatprep.mubr.bf16.mxu0 %v426
  %477 = vmatmul.mubr.bf16.gmra.mrb[0].mxu0 %v425
  %v478 = vpop.f32.mrb[0].mxu0
  %v479 = vadd.f32 0.0, %v478
  %v480 = vpop.f32.mrb[0].mxu0
  %v481 = vpop.f32.mrb[0].mxu0
  %v482 = vadd.f32 0.0, %v481
  %v483 = vpop.f32.mrb[0].mxu0
  %484 = vmatprep.mubr.bf16.mxu0 %v428
  %485 = vmatmul.mubr.bf16.gmra.mrb[0].mxu0 %v427
  %v486 = vpop.f32.mrb[0].mxu0
  %v487 = vadd.f32 0.0, %v486
  %v488 = vpop.f32.mrb[0].mxu0
  %v489 = vpop.f32.mrb[0].mxu0
  %v490 = vadd.f32 0.0, %v489
  %v491 = vpop.f32.mrb[0].mxu0
  %492 = vdwg.mxu0
  %v493 = vsel %vm97, %v479, -inf
  %v494 = vsel %vm97, %v482, -inf
  %v495 = vsel %vm97, %v487, -inf
  %v496 = vsel %vm97, %v490, -inf
  %v497 = vmax.f32 %v493, %v494
  %v498 = vmax.f32 %v495, %v496
  %v499 = vmax.f32 %v497, %v498
  %501 = vrot.lane.b32.xlu0 %v499, 16
  %v502 = vpop.permute.xlu0 %501
  %vm504 = vcmask 162944
  %505 = vst.msk [vmem:[%s2] sm:$0xff] %vm504, %v502
  %s506 = scalar_lea.vmem %s0, 160
  %v507 = vld [vmem:[%s506] sm:$0xff]
  %v508 = vld [vmem:[%s506 + $0x8] sm:$0xff]
  %v509 = vld [vmem:[%s506 + $0x10] sm:$0xff]
  %v510 = vld [vmem:[%s506 + $0x18] sm:$0xff]
  %s511 = scalar_lea.vmem %s1, 20
  %v512 = vld [vmem:[%s511] sm:$0xf]
  %v517 = vunpack.c.l.b16 %v507
  %v518 = vunpack.c.h.b16 %v507
  %v519 = vunpack.c.l.b16 %v508
  %v520 = vunpack.c.h.b16 %v508
  %v521 = vunpack.c.l.b16 %v509
  %v522 = vunpack.c.h.b16 %v509
  %v523 = vunpack.c.l.b16 %v510
  %v524 = vunpack.c.h.b16 %v510
  %v525 = vpack.c.b16 %v519, %v517
  %v526 = vpack.c.b16 %v520, %v518
  %v527 = vpack.c.b16 %v523, %v521
  %v528 = vpack.c.b16 %v524, %v522
  %v535 = vunpack.c.l.s4 1983009808
  %v536 = vunpack.c.0.s8 %v535
  %v537 = vlaneseq
  %v538 = vshrl.u32 %v537, 7
  %v539 = vsub.s32 %v536, %v538
  %v540 = vrot.slane %v512, %v539
  %v541 = vcombine.high %v540, %v540
  %544 = vmatprep.subr.bf16.mxu0 %v541
  %545 = vmatpush1.bf16.xpose.msra.mxu0 %v540
  %546 = vmatprep.subr.bf16.mxu0 0
  %547 = vmatpush1.bf16.xpose.msra.mxu0 0
  %548 = vmatprep.subr.bf16.mxu0 0
  %549 = vmatpush1.bf16.xpose.msra.mxu0 0
  %550 = vmatprep.subr.bf16.mxu0 0
  %551 = vmatpush1.bf16.xpose.msra.mxu0 0
  %552 = vmatprep.subr.bf16.mxu0 0
  %553 = vmatpush1.bf16.xpose.msra.mxu0 0
  %554 = vmatprep.subr.bf16.mxu0 0
  %555 = vmatpush1.bf16.xpose.msra.mxu0 0
  %556 = vmatprep.subr.bf16.mxu0 0
  %557 = vmatpush1.bf16.xpose.msra.mxu0 0
  %558 = vmatprep.subr.bf16.mxu0 0
  %559 = vmatpush1.bf16.xpose.msra.mxu0 0
  %560 = vmatprep.subr.bf16.mxu0 0
  %561 = vmatpush1.bf16.xpose.msra.mxu0 0
  %562 = vmatprep.subr.bf16.mxu0 0
  %563 = vmatpush1.bf16.xpose.msra.mxu0 0
  %564 = vmatprep.subr.bf16.mxu0 0
  %565 = vmatpush1.bf16.xpose.msra.mxu0 0
  %566 = vmatprep.subr.bf16.mxu0 0
  %567 = vmatpush1.bf16.xpose.msra.mxu0 0
  %568 = vmatprep.subr.bf16.mxu0 0
  %569 = vmatpush1.bf16.xpose.msra.mxu0 0
  %570 = vmatprep.subr.bf16.mxu0 0
  %571 = vmatpush1.bf16.xpose.msra.mxu0 0
  %572 = vmatprep.subr.bf16.mxu0 0
  %573 = vmatpush1.bf16.xpose.msra.mxu0 0
  %574 = vmatprep.subr.bf16.mxu0 0
  %575 = vmatpush1.bf16.xpose.msra.mxu0 0
  %576 = vmatprep.mubr.bf16.mxu0 %v526
  %577 = vmatmul.mubr.bf16.gmra.mrb[0].mxu0 %v525
  %v578 = vpop.f32.mrb[0].mxu0
  %v579 = vadd.f32 0.0, %v578
  %v580 = vpop.f32.mrb[0].mxu0
  %v581 = vpop.f32.mrb[0].mxu0
  %v582 = vadd.f32 0.0, %v581
  %v583 = vpop.f32.mrb[0].mxu0
  %584 = vmatprep.mubr.bf16.mxu0 %v528
  %585 = vmatmul.mubr.bf16.gmra.mrb[0].mxu0 %v527
  %v586 = vpop.f32.mrb[0].mxu0
  %v587 = vadd.f32 0.0, %v586
  %v588 = vpop.f32.mrb[0].mxu0
  %v589 = vpop.f32.mrb[0].mxu0
  %v590 = vadd.f32 0.0, %v589
  %v591 = vpop.f32.mrb[0].mxu0
  %592 = vdwg.mxu0
  %v593 = vsel %vm97, %v579, -inf
  %v594 = vsel %vm97, %v582, -inf
  %v595 = vsel %vm97, %v587, -inf
  %v596 = vsel %vm97, %v590, -inf
  %v597 = vmax.f32 %v593, %v594
  %v598 = vmax.f32 %v595, %v596
  %v599 = vmax.f32 %v597, %v598
  %601 = vrot.lane.b32.xlu0 %v599, 20
  %v602 = vpop.permute.xlu0 %601
  %vm604 = vcmask 195744
  %605 = vst.msk [vmem:[%s2] sm:$0xff] %vm604, %v602
  %s606 = scalar_lea.vmem %s0, 192
  %v607 = vld [vmem:[%s606] sm:$0xff]
  %v608 = vld [vmem:[%s606 + $0x8] sm:$0xff]
  %v609 = vld [vmem:[%s606 + $0x10] sm:$0xff]
  %v610 = vld [vmem:[%s606 + $0x18] sm:$0xff]
  %s611 = scalar_lea.vmem %s1, 24
  %v612 = vld [vmem:[%s611] sm:$0xf]
  %v617 = vunpack.c.l.b16 %v607
  %v618 = vunpack.c.h.b16 %v607
  %v619 = vunpack.c.l.b16 %v608
  %v620 = vunpack.c.h.b16 %v608
  %v621 = vunpack.c.l.b16 %v609
  %v622 = vunpack.c.h.b16 %v609
  %v623 = vunpack.c.l.b16 %v610
  %v624 = vunpack.c.h.b16 %v610
  %v625 = vpack.c.b16 %v619, %v617
  %v626 = vpack.c.b16 %v620, %v618
  %v627 = vpack.c.b16 %v623, %v621
  %v628 = vpack.c.b16 %v624, %v622
  %v635 = vunpack.c.l.s4 1983009808
  %v636 = vunpack.c.0.s8 %v635
  %v637 = vlaneseq
  %v638 = vshrl.u32 %v637, 7
  %v639 = vsub.s32 %v636, %v638
  %v640 = vrot.slane %v612, %v639
  %v641 = vcombine.high %v640, %v640
  %644 = vmatprep.subr.bf16.mxu0 %v641
  %645 = vmatpush1.bf16.xpose.msra.mxu0 %v640
  %646 = vmatprep.subr.bf16.mxu0 0
  %647 = vmatpush1.bf16.xpose.msra.mxu0 0
  %648 = vmatprep.subr.bf16.mxu0 0
  %649 = vmatpush1.bf16.xpose.msra.mxu0 0
  %650 = vmatprep.subr.bf16.mxu0 0
  %651 = vmatpush1.bf16.xpose.msra.mxu0 0
  %652 = vmatprep.subr.bf16.mxu0 0
  %653 = vmatpush1.bf16.xpose.msra.mxu0 0
  %654 = vmatprep.subr.bf16.mxu0 0
  %655 = vmatpush1.bf16.xpose.msra.mxu0 0
  %656 = vmatprep.subr.bf16.mxu0 0
  %657 = vmatpush1.bf16.xpose.msra.mxu0 0
  %658 = vmatprep.subr.bf16.mxu0 0
  %659 = vmatpush1.bf16.xpose.msra.mxu0 0
  %660 = vmatprep.subr.bf16.mxu0 0
  %661 = vmatpush1.bf16.xpose.msra.mxu0 0
  %662 = vmatprep.subr.bf16.mxu0 0
  %663 = vmatpush1.bf16.xpose.msra.mxu0 0
  %664 = vmatprep.subr.bf16.mxu0 0
  %665 = vmatpush1.bf16.xpose.msra.mxu0 0
  %666 = vmatprep.subr.bf16.mxu0 0
  %667 = vmatpush1.bf16.xpose.msra.mxu0 0
  %668 = vmatprep.subr.bf16.mxu0 0
  %669 = vmatpush1.bf16.xpose.msra.mxu0 0
  %670 = vmatprep.subr.bf16.mxu0 0
  %671 = vmatpush1.bf16.xpose.msra.mxu0 0
  %672 = vmatprep.subr.bf16.mxu0 0
  %673 = vmatpush1.bf16.xpose.msra.mxu0 0
  %674 = vmatprep.subr.bf16.mxu0 0
  %675 = vmatpush1.bf16.xpose.msra.mxu0 0
  %676 = vmatprep.mubr.bf16.mxu0 %v626
  %677 = vmatmul.mubr.bf16.gmra.mrb[0].mxu0 %v625
  %v678 = vpop.f32.mrb[0].mxu0
  %v679 = vadd.f32 0.0, %v678
  %v680 = vpop.f32.mrb[0].mxu0
  %v681 = vpop.f32.mrb[0].mxu0
  %v682 = vadd.f32 0.0, %v681
  %v683 = vpop.f32.mrb[0].mxu0
  %684 = vmatprep.mubr.bf16.mxu0 %v628
  %685 = vmatmul.mubr.bf16.gmra.mrb[0].mxu0 %v627
  %v686 = vpop.f32.mrb[0].mxu0
  %v687 = vadd.f32 0.0, %v686
  %v688 = vpop.f32.mrb[0].mxu0
  %v689 = vpop.f32.mrb[0].mxu0
  %v690 = vadd.f32 0.0, %v689
  %v691 = vpop.f32.mrb[0].mxu0
  %692 = vdwg.mxu0
  %v693 = vsel %vm97, %v679, -inf
  %v694 = vsel %vm97, %v682, -inf
  %v695 = vsel %vm97, %v687, -inf
  %v696 = vsel %vm97, %v690, -inf
  %v697 = vmax.f32 %v693, %v694
  %v698 = vmax.f32 %v695, %v696
  %v699 = vmax.f32 %v697, %v698
  %701 = vrot.lane.b32.xlu0 %v699, 24
  %v702 = vpop.permute.xlu0 %701
  %vm704 = vcmask 228544
  %705 = vst.msk [vmem:[%s2] sm:$0xff] %vm704, %v702
  %s706 = scalar_lea.vmem %s0, 224
  %v707 = vld [vmem:[%s706] sm:$0xff]
  %v708 = vld [vmem:[%s706 + $0x8] sm:$0xff]
  %v709 = vld [vmem:[%s706 + $0x10] sm:$0xff]
  %v710 = vld [vmem:[%s706 + $0x18] sm:$0xff]
  %s711 = scalar_lea.vmem %s1, 28
  %v712 = vld [vmem:[%s711] sm:$0xf]
  %v717 = vunpack.c.l.b16 %v707
  %v718 = vunpack.c.h.b16 %v707
  %v719 = vunpack.c.l.b16 %v708
  %v720 = vunpack.c.h.b16 %v708
  %v721 = vunpack.c.l.b16 %v709
  %v722 = vunpack.c.h.b16 %v709
  %v723 = vunpack.c.l.b16 %v710
  %v724 = vunpack.c.h.b16 %v710
  %v725 = vpack.c.b16 %v719, %v717
  %v726 = vpack.c.b16 %v720, %v718
  %v727 = vpack.c.b16 %v723, %v721
  %v728 = vpack.c.b16 %v724, %v722
  %v735 = vunpack.c.l.s4 1983009808
  %v736 = vunpack.c.0.s8 %v735
  %v737 = vlaneseq
  %v738 = vshrl.u32 %v737, 7
  %v739 = vsub.s32 %v736, %v738
  %v740 = vrot.slane %v712, %v739
  %v741 = vcombine.high %v740, %v740
  %744 = vmatprep.subr.bf16.mxu0 %v741
  %745 = vmatpush1.bf16.xpose.msra.mxu0 %v740
  %746 = vmatprep.subr.bf16.mxu0 0
  %747 = vmatpush1.bf16.xpose.msra.mxu0 0
  %748 = vmatprep.subr.bf16.mxu0 0
  %749 = vmatpush1.bf16.xpose.msra.mxu0 0
  %750 = vmatprep.subr.bf16.mxu0 0
  %751 = vmatpush1.bf16.xpose.msra.mxu0 0
  %752 = vmatprep.subr.bf16.mxu0 0
  %753 = vmatpush1.bf16.xpose.msra.mxu0 0
  %754 = vmatprep.subr.bf16.mxu0 0
  %755 = vmatpush1.bf16.xpose.msra.mxu0 0
  %756 = vmatprep.subr.bf16.mxu0 0
  %757 = vmatpush1.bf16.xpose.msra.mxu0 0
  %758 = vmatprep.subr.bf16.mxu0 0
  %759 = vmatpush1.bf16.xpose.msra.mxu0 0
  %760 = vmatprep.subr.bf16.mxu0 0
  %761 = vmatpush1.bf16.xpose.msra.mxu0 0
  %762 = vmatprep.subr.bf16.mxu0 0
  %763 = vmatpush1.bf16.xpose.msra.mxu0 0
  %764 = vmatprep.subr.bf16.mxu0 0
  %765 = vmatpush1.bf16.xpose.msra.mxu0 0
  %766 = vmatprep.subr.bf16.mxu0 0
  %767 = vmatpush1.bf16.xpose.msra.mxu0 0
  %768 = vmatprep.subr.bf16.mxu0 0
  %769 = vmatpush1.bf16.xpose.msra.mxu0 0
  %770 = vmatprep.subr.bf16.mxu0 0
  %771 = vmatpush1.bf16.xpose.msra.mxu0 0
  %772 = vmatprep.subr.bf16.mxu0 0
  %773 = vmatpush1.bf16.xpose.msra.mxu0 0
  %774 = vmatprep.subr.bf16.mxu0 0
  %775 = vmatpush1.bf16.xpose.msra.mxu0 0
  %776 = vmatprep.mubr.bf16.mxu0 %v726
  %777 = vmatmul.mubr.bf16.gmra.mrb[0].mxu0 %v725
  %v778 = vpop.f32.mrb[0].mxu0
  %v779 = vadd.f32 0.0, %v778
  %v780 = vpop.f32.mrb[0].mxu0
  %v781 = vpop.f32.mrb[0].mxu0
  %v782 = vadd.f32 0.0, %v781
  %v783 = vpop.f32.mrb[0].mxu0
  %784 = vmatprep.mubr.bf16.mxu0 %v728
  %785 = vmatmul.mubr.bf16.gmra.mrb[0].mxu0 %v727
  %v786 = vpop.f32.mrb[0].mxu0
  %v787 = vadd.f32 0.0, %v786
  %v788 = vpop.f32.mrb[0].mxu0
  %v789 = vpop.f32.mrb[0].mxu0
  %v790 = vadd.f32 0.0, %v789
  %v791 = vpop.f32.mrb[0].mxu0
  %792 = vdwg.mxu0
  %v793 = vsel %vm97, %v779, -inf
  %v794 = vsel %vm97, %v782, -inf
  %v795 = vsel %vm97, %v787, -inf
  %v796 = vsel %vm97, %v790, -inf
  %v797 = vmax.f32 %v793, %v794
  %v798 = vmax.f32 %v795, %v796
  %v799 = vmax.f32 %v797, %v798
  %801 = vrot.lane.b32.xlu0 %v799, 28
  %v802 = vpop.permute.xlu0 %801
  %vm804 = vcmask 261344
  %805 = vst.msk [vmem:[%s2] sm:$0xff] %vm804, %v802
  %s806 = scalar_lea.vmem %s0, 256
  %v807 = vld [vmem:[%s806] sm:$0xff]
  %v808 = vld [vmem:[%s806 + $0x8] sm:$0xff]
  %v809 = vld [vmem:[%s806 + $0x10] sm:$0xff]
  %v810 = vld [vmem:[%s806 + $0x18] sm:$0xff]
  %s811 = scalar_lea.vmem %s1, 32
  %v812 = vld [vmem:[%s811] sm:$0xf]
  %v817 = vunpack.c.l.b16 %v807
  %v818 = vunpack.c.h.b16 %v807
  %v819 = vunpack.c.l.b16 %v808
  %v820 = vunpack.c.h.b16 %v808
  %v821 = vunpack.c.l.b16 %v809
  %v822 = vunpack.c.h.b16 %v809
  %v823 = vunpack.c.l.b16 %v810
  %v824 = vunpack.c.h.b16 %v810
  %v825 = vpack.c.b16 %v819, %v817
  %v826 = vpack.c.b16 %v820, %v818
  %v827 = vpack.c.b16 %v823, %v821
  %v828 = vpack.c.b16 %v824, %v822
  %v835 = vunpack.c.l.s4 1983009808
  %v836 = vunpack.c.0.s8 %v835
  %v837 = vlaneseq
  %v838 = vshrl.u32 %v837, 7
  %v839 = vsub.s32 %v836, %v838
  %v840 = vrot.slane %v812, %v839
  %v841 = vcombine.high %v840, %v840
  %844 = vmatprep.subr.bf16.mxu0 %v841
  %845 = vmatpush1.bf16.xpose.msra.mxu0 %v840
  %846 = vmatprep.subr.bf16.mxu0 0
  %847 = vmatpush1.bf16.xpose.msra.mxu0 0
  %848 = vmatprep.subr.bf16.mxu0 0
  %849 = vmatpush1.bf16.xpose.msra.mxu0 0
  %850 = vmatprep.subr.bf16.mxu0 0
  %851 = vmatpush1.bf16.xpose.msra.mxu0 0
  %852 = vmatprep.subr.bf16.mxu0 0
  %853 = vmatpush1.bf16.xpose.msra.mxu0 0
  %854 = vmatprep.subr.bf16.mxu0 0
  %855 = vmatpush1.bf16.xpose.msra.mxu0 0
  %856 = vmatprep.subr.bf16.mxu0 0
  %857 = vmatpush1.bf16.xpose.msra.mxu0 0
  %858 = vmatprep.subr.bf16.mxu0 0
  %859 = vmatpush1.bf16.xpose.msra.mxu0 0
  %860 = vmatprep.subr.bf16.mxu0 0
  %861 = vmatpush1.bf16.xpose.msra.mxu0 0
  %862 = vmatprep.subr.bf16.mxu0 0
  %863 = vmatpush1.bf16.xpose.msra.mxu0 0
  %864 = vmatprep.subr.bf16.mxu0 0
  %865 = vmatpush1.bf16.xpose.msra.mxu0 0
  %866 = vmatprep.subr.bf16.mxu0 0
  %867 = vmatpush1.bf16.xpose.msra.mxu0 0
  %868 = vmatprep.subr.bf16.mxu0 0
  %869 = vmatpush1.bf16.xpose.msra.mxu0 0
  %870 = vmatprep.subr.bf16.mxu0 0
  %871 = vmatpush1.bf16.xpose.msra.mxu0 0
  %872 = vmatprep.subr.bf16.mxu0 0
  %873 = vmatpush1.bf16.xpose.msra.mxu0 0
  %874 = vmatprep.subr.bf16.mxu0 0
  %875 = vmatpush1.bf16.xpose.msra.mxu0 0
  %876 = vmatprep.mubr.bf16.mxu0 %v826
  %877 = vmatmul.mubr.bf16.gmra.mrb[0].mxu0 %v825
  %v878 = vpop.f32.mrb[0].mxu0
  %v879 = vadd.f32 0.0, %v878
  %v880 = vpop.f32.mrb[0].mxu0
  %v881 = vpop.f32.mrb[0].mxu0
  %v882 = vadd.f32 0.0, %v881
  %v883 = vpop.f32.mrb[0].mxu0
  %884 = vmatprep.mubr.bf16.mxu0 %v828
  %885 = vmatmul.mubr.bf16.gmra.mrb[0].mxu0 %v827
  %v886 = vpop.f32.mrb[0].mxu0
  %v887 = vadd.f32 0.0, %v886
  %v888 = vpop.f32.mrb[0].mxu0
  %v889 = vpop.f32.mrb[0].mxu0
  %v890 = vadd.f32 0.0, %v889
  %v891 = vpop.f32.mrb[0].mxu0
  %892 = vdwg.mxu0
  %v893 = vsel %vm97, %v879, -inf
  %v894 = vsel %vm97, %v882, -inf
  %v895 = vsel %vm97, %v887, -inf
  %v896 = vsel %vm97, %v890, -inf
  %v897 = vmax.f32 %v893, %v894
  %v898 = vmax.f32 %v895, %v896
  %v899 = vmax.f32 %v897, %v898
  %901 = vrot.lane.b32.xlu0 %v899, 32
  %v902 = vpop.permute.xlu0 %901
  %vm904 = vcmask 294144
  %905 = vst.msk [vmem:[%s2] sm:$0xff] %vm904, %v902
  %s906 = scalar_lea.vmem %s0, 288
  %v907 = vld [vmem:[%s906] sm:$0xff]
  %v908 = vld [vmem:[%s906 + $0x8] sm:$0xff]
  %v909 = vld [vmem:[%s906 + $0x10] sm:$0xff]
  %v910 = vld [vmem:[%s906 + $0x18] sm:$0xff]
  %s911 = scalar_lea.vmem %s1, 36
  %v912 = vld [vmem:[%s911] sm:$0xf]
  %v917 = vunpack.c.l.b16 %v907
  %v918 = vunpack.c.h.b16 %v907
  %v919 = vunpack.c.l.b16 %v908
  %v920 = vunpack.c.h.b16 %v908
  %v921 = vunpack.c.l.b16 %v909
  %v922 = vunpack.c.h.b16 %v909
  %v923 = vunpack.c.l.b16 %v910
  %v924 = vunpack.c.h.b16 %v910
  %v925 = vpack.c.b16 %v919, %v917
  %v926 = vpack.c.b16 %v920, %v918
  %v927 = vpack.c.b16 %v923, %v921
  %v928 = vpack.c.b16 %v924, %v922
  %v935 = vunpack.c.l.s4 1983009808
  %v936 = vunpack.c.0.s8 %v935
  %v937 = vlaneseq
  %v938 = vshrl.u32 %v937, 7
  %v939 = vsub.s32 %v936, %v938
  %v940 = vrot.slane %v912, %v939
  %v941 = vcombine.high %v940, %v940
  %944 = vmatprep.subr.bf16.mxu0 %v941
  %945 = vmatpush1.bf16.xpose.msra.mxu0 %v940
  %946 = vmatprep.subr.bf16.mxu0 0
  %947 = vmatpush1.bf16.xpose.msra.mxu0 0
  %948 = vmatprep.subr.bf16.mxu0 0
  %949 = vmatpush1.bf16.xpose.msra.mxu0 0
  %950 = vmatprep.subr.bf16.mxu0 0
  %951 = vmatpush1.bf16.xpose.msra.mxu0 0
  %952 = vmatprep.subr.bf16.mxu0 0
  %953 = vmatpush1.bf16.xpose.msra.mxu0 0
  %954 = vmatprep.subr.bf16.mxu0 0
  %955 = vmatpush1.bf16.xpose.msra.mxu0 0
  %956 = vmatprep.subr.bf16.mxu0 0
  %957 = vmatpush1.bf16.xpose.msra.mxu0 0
  %958 = vmatprep.subr.bf16.mxu0 0
  %959 = vmatpush1.bf16.xpose.msra.mxu0 0
  %960 = vmatprep.subr.bf16.mxu0 0
  %961 = vmatpush1.bf16.xpose.msra.mxu0 0
  %962 = vmatprep.subr.bf16.mxu0 0
  %963 = vmatpush1.bf16.xpose.msra.mxu0 0
  %964 = vmatprep.subr.bf16.mxu0 0
  %965 = vmatpush1.bf16.xpose.msra.mxu0 0
  %966 = vmatprep.subr.bf16.mxu0 0
  %967 = vmatpush1.bf16.xpose.msra.mxu0 0
  %968 = vmatprep.subr.bf16.mxu0 0
  %969 = vmatpush1.bf16.xpose.msra.mxu0 0
  %970 = vmatprep.subr.bf16.mxu0 0
  %971 = vmatpush1.bf16.xpose.msra.mxu0 0
  %972 = vmatprep.subr.bf16.mxu0 0
  %973 = vmatpush1.bf16.xpose.msra.mxu0 0
  %974 = vmatprep.subr.bf16.mxu0 0
  %975 = vmatpush1.bf16.xpose.msra.mxu0 0
  %976 = vmatprep.mubr.bf16.mxu0 %v926
  %977 = vmatmul.mubr.bf16.gmra.mrb[0].mxu0 %v925
  %v978 = vpop.f32.mrb[0].mxu0
  %v979 = vadd.f32 0.0, %v978
  %v980 = vpop.f32.mrb[0].mxu0
  %v981 = vpop.f32.mrb[0].mxu0
  %v982 = vadd.f32 0.0, %v981
  %v983 = vpop.f32.mrb[0].mxu0
  %984 = vmatprep.mubr.bf16.mxu0 %v928
  %985 = vmatmul.mubr.bf16.gmra.mrb[0].mxu0 %v927
  %v986 = vpop.f32.mrb[0].mxu0
  %v987 = vadd.f32 0.0, %v986
  %v988 = vpop.f32.mrb[0].mxu0
  %v989 = vpop.f32.mrb[0].mxu0
  %v990 = vadd.f32 0.0, %v989
  %v991 = vpop.f32.mrb[0].mxu0
  %992 = vdwg.mxu0
  %v993 = vsel %vm97, %v979, -inf
  %v994 = vsel %vm97, %v982, -inf
  %v995 = vsel %vm97, %v987, -inf
  %v996 = vsel %vm97, %v990, -inf
  %v997 = vmax.f32 %v993, %v994
  %v998 = vmax.f32 %v995, %v996
  %v999 = vmax.f32 %v997, %v998
  %1001 = vrot.lane.b32.xlu0 %v999, 36
  %v1002 = vpop.permute.xlu0 %1001
  %vm1004 = vcmask 326944
  %1005 = vst.msk [vmem:[%s2] sm:$0xff] %vm1004, %v1002
  %s1006 = scalar_lea.vmem %s0, 320
  %v1007 = vld [vmem:[%s1006] sm:$0xff]
  %v1008 = vld [vmem:[%s1006 + $0x8] sm:$0xff]
  %v1009 = vld [vmem:[%s1006 + $0x10] sm:$0xff]
  %v1010 = vld [vmem:[%s1006 + $0x18] sm:$0xff]
  %s1011 = scalar_lea.vmem %s1, 40
  %v1012 = vld [vmem:[%s1011] sm:$0xf]
  %v1017 = vunpack.c.l.b16 %v1007
  %v1018 = vunpack.c.h.b16 %v1007
  %v1019 = vunpack.c.l.b16 %v1008
  %v1020 = vunpack.c.h.b16 %v1008
  %v1021 = vunpack.c.l.b16 %v1009
  %v1022 = vunpack.c.h.b16 %v1009
  %v1023 = vunpack.c.l.b16 %v1010
  %v1024 = vunpack.c.h.b16 %v1010
  %v1025 = vpack.c.b16 %v1019, %v1017
  %v1026 = vpack.c.b16 %v1020, %v1018
  %v1027 = vpack.c.b16 %v1023, %v1021
  %v1028 = vpack.c.b16 %v1024, %v1022
  %v1035 = vunpack.c.l.s4 1983009808
  %v1036 = vunpack.c.0.s8 %v1035
  %v1037 = vlaneseq
  %v1038 = vshrl.u32 %v1037, 7
  %v1039 = vsub.s32 %v1036, %v1038
  %v1040 = vrot.slane %v1012, %v1039
  %v1041 = vcombine.high %v1040, %v1040
  %1044 = vmatprep.subr.bf16.mxu0 %v1041
  %1045 = vmatpush1.bf16.xpose.msra.mxu0 %v1040
  %1046 = vmatprep.subr.bf16.mxu0 0
  %1047 = vmatpush1.bf16.xpose.msra.mxu0 0
  %1048 = vmatprep.subr.bf16.mxu0 0
  %1049 = vmatpush1.bf16.xpose.msra.mxu0 0
  %1050 = vmatprep.subr.bf16.mxu0 0
  %1051 = vmatpush1.bf16.xpose.msra.mxu0 0
  %1052 = vmatprep.subr.bf16.mxu0 0
  %1053 = vmatpush1.bf16.xpose.msra.mxu0 0
  %1054 = vmatprep.subr.bf16.mxu0 0
  %1055 = vmatpush1.bf16.xpose.msra.mxu0 0
  %1056 = vmatprep.subr.bf16.mxu0 0
  %1057 = vmatpush1.bf16.xpose.msra.mxu0 0
  %1058 = vmatprep.subr.bf16.mxu0 0
  %1059 = vmatpush1.bf16.xpose.msra.mxu0 0
  %1060 = vmatprep.subr.bf16.mxu0 0
  %1061 = vmatpush1.bf16.xpose.msra.mxu0 0
  %1062 = vmatprep.subr.bf16.mxu0 0
  %1063 = vmatpush1.bf16.xpose.msra.mxu0 0
  %1064 = vmatprep.subr.bf16.mxu0 0
  %1065 = vmatpush1.bf16.xpose.msra.mxu0 0
  %1066 = vmatprep.subr.bf16.mxu0 0
  %1067 = vmatpush1.bf16.xpose.msra.mxu0 0
  %1068 = vmatprep.subr.bf16.mxu0 0
  %1069 = vmatpush1.bf16.xpose.msra.mxu0 0
  %1070 = vmatprep.subr.bf16.mxu0 0
  %1071 = vmatpush1.bf16.xpose.msra.mxu0 0
  %1072 = vmatprep.subr.bf16.mxu0 0
  %1073 = vmatpush1.bf16.xpose.msra.mxu0 0
  %1074 = vmatprep.subr.bf16.mxu0 0
  %1075 = vmatpush1.bf16.xpose.msra.mxu0 0
  %1076 = vmatprep.mubr.bf16.mxu0 %v1026
  %1077 = vmatmul.mubr.bf16.gmra.mrb[0].mxu0 %v1025
  %v1078 = vpop.f32.mrb[0].mxu0
  %v1079 = vadd.f32 0.0, %v1078
  %v1080 = vpop.f32.mrb[0].mxu0
  %v1081 = vpop.f32.mrb[0].mxu0
  %v1082 = vadd.f32 0.0, %v1081
  %v1083 = vpop.f32.mrb[0].mxu0
  %1084 = vmatprep.mubr.bf16.mxu0 %v1028
  %1085 = vmatmul.mubr.bf16.gmra.mrb[0].mxu0 %v1027
  %v1086 = vpop.f32.mrb[0].mxu0
  %v1087 = vadd.f32 0.0, %v1086
  %v1088 = vpop.f32.mrb[0].mxu0
  %v1089 = vpop.f32.mrb[0].mxu0
  %v1090 = vadd.f32 0.0, %v1089
  %v1091 = vpop.f32.mrb[0].mxu0
  %1092 = vdwg.mxu0
  %v1093 = vsel %vm97, %v1079, -inf
  %v1094 = vsel %vm97, %v1082, -inf
  %v1095 = vsel %vm97, %v1087, -inf
  %v1096 = vsel %vm97, %v1090, -inf
  %v1097 = vmax.f32 %v1093, %v1094
  %v1098 = vmax.f32 %v1095, %v1096
  %v1099 = vmax.f32 %v1097, %v1098
  %1101 = vrot.lane.b32.xlu0 %v1099, 40
  %v1102 = vpop.permute.xlu0 %1101
  %vm1104 = vcmask 359744
  %1105 = vst.msk [vmem:[%s2] sm:$0xff] %vm1104, %v1102
  %s1106 = scalar_lea.vmem %s0, 352
  %v1107 = vld [vmem:[%s1106] sm:$0xff]
  %v1108 = vld [vmem:[%s1106 + $0x8] sm:$0xff]
  %v1109 = vld [vmem:[%s1106 + $0x10] sm:$0xff]
  %v1110 = vld [vmem:[%s1106 + $0x18] sm:$0xff]
  %s1111 = scalar_lea.vmem %s1, 44
  %v1112 = vld [vmem:[%s1111] sm:$0xf]
  %v1117 = vunpack.c.l.b16 %v1107
  %v1118 = vunpack.c.h.b16 %v1107
  %v1119 = vunpack.c.l.b16 %v1108
  %v1120 = vunpack.c.h.b16 %v1108
  %v1121 = vunpack.c.l.b16 %v1109
  %v1122 = vunpack.c.h.b16 %v1109
  %v1123 = vunpack.c.l.b16 %v1110
  %v1124 = vunpack.c.h.b16 %v1110
  %v1125 = vpack.c.b16 %v1119, %v1117
  %v1126 = vpack.c.b16 %v1120, %v1118
  %v1127 = vpack.c.b16 %v1123, %v1121
  %v1128 = vpack.c.b16 %v1124, %v1122
  %v1135 = vunpack.c.l.s4 1983009808
  %v1136 = vunpack.c.0.s8 %v1135
  %v1137 = vlaneseq
  %v1138 = vshrl.u32 %v1137, 7
  %v1139 = vsub.s32 %v1136, %v1138
  %v1140 = vrot.slane %v1112, %v1139
  %v1141 = vcombine.high %v1140, %v1140
  %1144 = vmatprep.subr.bf16.mxu0 %v1141
  %1145 = vmatpush1.bf16.xpose.msra.mxu0 %v1140
  %1146 = vmatprep.subr.bf16.mxu0 0
  %1147 = vmatpush1.bf16.xpose.msra.mxu0 0
  %1148 = vmatprep.subr.bf16.mxu0 0
  %1149 = vmatpush1.bf16.xpose.msra.mxu0 0
  %1150 = vmatprep.subr.bf16.mxu0 0
  %1151 = vmatpush1.bf16.xpose.msra.mxu0 0
  %1152 = vmatprep.subr.bf16.mxu0 0
  %1153 = vmatpush1.bf16.xpose.msra.mxu0 0
  %1154 = vmatprep.subr.bf16.mxu0 0
  %1155 = vmatpush1.bf16.xpose.msra.mxu0 0
  %1156 = vmatprep.subr.bf16.mxu0 0
  %1157 = vmatpush1.bf16.xpose.msra.mxu0 0
  %1158 = vmatprep.subr.bf16.mxu0 0
  %1159 = vmatpush1.bf16.xpose.msra.mxu0 0
  %1160 = vmatprep.subr.bf16.mxu0 0
  %1161 = vmatpush1.bf16.xpose.msra.mxu0 0
  %1162 = vmatprep.subr.bf16.mxu0 0
  %1163 = vmatpush1.bf16.xpose.msra.mxu0 0
  %1164 = vmatprep.subr.bf16.mxu0 0
  %1165 = vmatpush1.bf16.xpose.msra.mxu0 0
  %1166 = vmatprep.subr.bf16.mxu0 0
  %1167 = vmatpush1.bf16.xpose.msra.mxu0 0
  %1168 = vmatprep.subr.bf16.mxu0 0
  %1169 = vmatpush1.bf16.xpose.msra.mxu0 0
  %1170 = vmatprep.subr.bf16.mxu0 0
  %1171 = vmatpush1.bf16.xpose.msra.mxu0 0
  %1172 = vmatprep.subr.bf16.mxu0 0
  %1173 = vmatpush1.bf16.xpose.msra.mxu0 0
  %1174 = vmatprep.subr.bf16.mxu0 0
  %1175 = vmatpush1.bf16.xpose.msra.mxu0 0
  %1176 = vmatprep.mubr.bf16.mxu0 %v1126
  %1177 = vmatmul.mubr.bf16.gmra.mrb[0].mxu0 %v1125
  %v1178 = vpop.f32.mrb[0].mxu0
  %v1179 = vadd.f32 0.0, %v1178
  %v1180 = vpop.f32.mrb[0].mxu0
  %v1181 = vpop.f32.mrb[0].mxu0
  %v1182 = vadd.f32 0.0, %v1181
  %v1183 = vpop.f32.mrb[0].mxu0
  %1184 = vmatprep.mubr.bf16.mxu0 %v1128
  %1185 = vmatmul.mubr.bf16.gmra.mrb[0].mxu0 %v1127
  %v1186 = vpop.f32.mrb[0].mxu0
  %v1187 = vadd.f32 0.0, %v1186
  %v1188 = vpop.f32.mrb[0].mxu0
  %v1189 = vpop.f32.mrb[0].mxu0
  %v1190 = vadd.f32 0.0, %v1189
  %v1191 = vpop.f32.mrb[0].mxu0
  %1192 = vdwg.mxu0
  %v1193 = vsel %vm97, %v1179, -inf
  %v1194 = vsel %vm97, %v1182, -inf
  %v1195 = vsel %vm97, %v1187, -inf
  %v1196 = vsel %vm97, %v1190, -inf
  %v1197 = vmax.f32 %v1193, %v1194
  %v1198 = vmax.f32 %v1195, %v1196
  %v1199 = vmax.f32 %v1197, %v1198
  %1201 = vrot.lane.b32.xlu0 %v1199, 44
  %v1202 = vpop.permute.xlu0 %1201
  %vm1204 = vcmask 392544
  %1205 = vst.msk [vmem:[%s2] sm:$0xff] %vm1204, %v1202
  %s1206 = scalar_lea.vmem %s0, 384
  %v1207 = vld [vmem:[%s1206] sm:$0xff]
  %v1208 = vld [vmem:[%s1206 + $0x8] sm:$0xff]
  %v1209 = vld [vmem:[%s1206 + $0x10] sm:$0xff]
  %v1210 = vld [vmem:[%s1206 + $0x18] sm:$0xff]
  %s1211 = scalar_lea.vmem %s1, 48
  %v1212 = vld [vmem:[%s1211] sm:$0xf]
  %v1217 = vunpack.c.l.b16 %v1207
  %v1218 = vunpack.c.h.b16 %v1207
  %v1219 = vunpack.c.l.b16 %v1208
  %v1220 = vunpack.c.h.b16 %v1208
  %v1221 = vunpack.c.l.b16 %v1209
  %v1222 = vunpack.c.h.b16 %v1209
  %v1223 = vunpack.c.l.b16 %v1210
  %v1224 = vunpack.c.h.b16 %v1210
  %v1225 = vpack.c.b16 %v1219, %v1217
  %v1226 = vpack.c.b16 %v1220, %v1218
  %v1227 = vpack.c.b16 %v1223, %v1221
  %v1228 = vpack.c.b16 %v1224, %v1222
  %v1235 = vunpack.c.l.s4 1983009808
  %v1236 = vunpack.c.0.s8 %v1235
  %v1237 = vlaneseq
  %v1238 = vshrl.u32 %v1237, 7
  %v1239 = vsub.s32 %v1236, %v1238
  %v1240 = vrot.slane %v1212, %v1239
  %v1241 = vcombine.high %v1240, %v1240
  %1244 = vmatprep.subr.bf16.mxu0 %v1241
  %1245 = vmatpush1.bf16.xpose.msra.mxu0 %v1240
  %1246 = vmatprep.subr.bf16.mxu0 0
  %1247 = vmatpush1.bf16.xpose.msra.mxu0 0
  %1248 = vmatprep.subr.bf16.mxu0 0
  %1249 = vmatpush1.bf16.xpose.msra.mxu0 0
  %1250 = vmatprep.subr.bf16.mxu0 0
  %1251 = vmatpush1.bf16.xpose.msra.mxu0 0
  %1252 = vmatprep.subr.bf16.mxu0 0
  %1253 = vmatpush1.bf16.xpose.msra.mxu0 0
  %1254 = vmatprep.subr.bf16.mxu0 0
  %1255 = vmatpush1.bf16.xpose.msra.mxu0 0
  %1256 = vmatprep.subr.bf16.mxu0 0
  %1257 = vmatpush1.bf16.xpose.msra.mxu0 0
  %1258 = vmatprep.subr.bf16.mxu0 0
  %1259 = vmatpush1.bf16.xpose.msra.mxu0 0
  %1260 = vmatprep.subr.bf16.mxu0 0
  %1261 = vmatpush1.bf16.xpose.msra.mxu0 0
  %1262 = vmatprep.subr.bf16.mxu0 0
  %1263 = vmatpush1.bf16.xpose.msra.mxu0 0
  %1264 = vmatprep.subr.bf16.mxu0 0
  %1265 = vmatpush1.bf16.xpose.msra.mxu0 0
  %1266 = vmatprep.subr.bf16.mxu0 0
  %1267 = vmatpush1.bf16.xpose.msra.mxu0 0
  %1268 = vmatprep.subr.bf16.mxu0 0
  %1269 = vmatpush1.bf16.xpose.msra.mxu0 0
  %1270 = vmatprep.subr.bf16.mxu0 0
  %1271 = vmatpush1.bf16.xpose.msra.mxu0 0
  %1272 = vmatprep.subr.bf16.mxu0 0
  %1273 = vmatpush1.bf16.xpose.msra.mxu0 0
  %1274 = vmatprep.subr.bf16.mxu0 0
  %1275 = vmatpush1.bf16.xpose.msra.mxu0 0
  %1276 = vmatprep.mubr.bf16.mxu0 %v1226
  %1277 = vmatmul.mubr.bf16.gmra.mrb[0].mxu0 %v1225
  %v1278 = vpop.f32.mrb[0].mxu0
  %v1279 = vadd.f32 0.0, %v1278
  %v1280 = vpop.f32.mrb[0].mxu0
  %v1281 = vpop.f32.mrb[0].mxu0
  %v1282 = vadd.f32 0.0, %v1281
  %v1283 = vpop.f32.mrb[0].mxu0
  %1284 = vmatprep.mubr.bf16.mxu0 %v1228
  %1285 = vmatmul.mubr.bf16.gmra.mrb[0].mxu0 %v1227
  %v1286 = vpop.f32.mrb[0].mxu0
  %v1287 = vadd.f32 0.0, %v1286
  %v1288 = vpop.f32.mrb[0].mxu0
  %v1289 = vpop.f32.mrb[0].mxu0
  %v1290 = vadd.f32 0.0, %v1289
  %v1291 = vpop.f32.mrb[0].mxu0
  %1292 = vdwg.mxu0
  %v1293 = vsel %vm97, %v1279, -inf
  %v1294 = vsel %vm97, %v1282, -inf
  %v1295 = vsel %vm97, %v1287, -inf
  %v1296 = vsel %vm97, %v1290, -inf
  %v1297 = vmax.f32 %v1293, %v1294
  %v1298 = vmax.f32 %v1295, %v1296
  %v1299 = vmax.f32 %v1297, %v1298
  %1301 = vrot.lane.b32.xlu0 %v1299, 48
  %v1302 = vpop.permute.xlu0 %1301
  %vm1304 = vcmask 425344
  %1305 = vst.msk [vmem:[%s2] sm:$0xff] %vm1304, %v1302
  %s1306 = scalar_lea.vmem %s0, 416
  %v1307 = vld [vmem:[%s1306] sm:$0xff]
  %v1308 = vld [vmem:[%s1306 + $0x8] sm:$0xff]
  %v1309 = vld [vmem:[%s1306 + $0x10] sm:$0xff]
  %v1310 = vld [vmem:[%s1306 + $0x18] sm:$0xff]
  %s1311 = scalar_lea.vmem %s1, 52
  %v1312 = vld [vmem:[%s1311] sm:$0xf]
  %v1317 = vunpack.c.l.b16 %v1307
  %v1318 = vunpack.c.h.b16 %v1307
  %v1319 = vunpack.c.l.b16 %v1308
  %v1320 = vunpack.c.h.b16 %v1308
  %v1321 = vunpack.c.l.b16 %v1309
  %v1322 = vunpack.c.h.b16 %v1309
  %v1323 = vunpack.c.l.b16 %v1310
  %v1324 = vunpack.c.h.b16 %v1310
  %v1325 = vpack.c.b16 %v1319, %v1317
  %v1326 = vpack.c.b16 %v1320, %v1318
  %v1327 = vpack.c.b16 %v1323, %v1321
  %v1328 = vpack.c.b16 %v1324, %v1322
  %v1335 = vunpack.c.l.s4 1983009808
  %v1336 = vunpack.c.0.s8 %v1335
  %v1337 = vlaneseq
  %v1338 = vshrl.u32 %v1337, 7
  %v1339 = vsub.s32 %v1336, %v1338
  %v1340 = vrot.slane %v1312, %v1339
  %v1341 = vcombine.high %v1340, %v1340
  %1344 = vmatprep.subr.bf16.mxu0 %v1341
  %1345 = vmatpush1.bf16.xpose.msra.mxu0 %v1340
  %1346 = vmatprep.subr.bf16.mxu0 0
  %1347 = vmatpush1.bf16.xpose.msra.mxu0 0
  %1348 = vmatprep.subr.bf16.mxu0 0
  %1349 = vmatpush1.bf16.xpose.msra.mxu0 0
  %1350 = vmatprep.subr.bf16.mxu0 0
  %1351 = vmatpush1.bf16.xpose.msra.mxu0 0
  %1352 = vmatprep.subr.bf16.mxu0 0
  %1353 = vmatpush1.bf16.xpose.msra.mxu0 0
  %1354 = vmatprep.subr.bf16.mxu0 0
  %1355 = vmatpush1.bf16.xpose.msra.mxu0 0
  %1356 = vmatprep.subr.bf16.mxu0 0
  %1357 = vmatpush1.bf16.xpose.msra.mxu0 0
  %1358 = vmatprep.subr.bf16.mxu0 0
  %1359 = vmatpush1.bf16.xpose.msra.mxu0 0
  %1360 = vmatprep.subr.bf16.mxu0 0
  %1361 = vmatpush1.bf16.xpose.msra.mxu0 0
  %1362 = vmatprep.subr.bf16.mxu0 0
  %1363 = vmatpush1.bf16.xpose.msra.mxu0 0
  %1364 = vmatprep.subr.bf16.mxu0 0
  %1365 = vmatpush1.bf16.xpose.msra.mxu0 0
  %1366 = vmatprep.subr.bf16.mxu0 0
  %1367 = vmatpush1.bf16.xpose.msra.mxu0 0
  %1368 = vmatprep.subr.bf16.mxu0 0
  %1369 = vmatpush1.bf16.xpose.msra.mxu0 0
  %1370 = vmatprep.subr.bf16.mxu0 0
  %1371 = vmatpush1.bf16.xpose.msra.mxu0 0
  %1372 = vmatprep.subr.bf16.mxu0 0
  %1373 = vmatpush1.bf16.xpose.msra.mxu0 0
  %1374 = vmatprep.subr.bf16.mxu0 0
  %1375 = vmatpush1.bf16.xpose.msra.mxu0 0
  %1376 = vmatprep.mubr.bf16.mxu0 %v1326
  %1377 = vmatmul.mubr.bf16.gmra.mrb[0].mxu0 %v1325
  %v1378 = vpop.f32.mrb[0].mxu0
  %v1379 = vadd.f32 0.0, %v1378
  %v1380 = vpop.f32.mrb[0].mxu0
  %v1381 = vpop.f32.mrb[0].mxu0
  %v1382 = vadd.f32 0.0, %v1381
  %v1383 = vpop.f32.mrb[0].mxu0
  %1384 = vmatprep.mubr.bf16.mxu0 %v1328
  %1385 = vmatmul.mubr.bf16.gmra.mrb[0].mxu0 %v1327
  %v1386 = vpop.f32.mrb[0].mxu0
  %v1387 = vadd.f32 0.0, %v1386
  %v1388 = vpop.f32.mrb[0].mxu0
  %v1389 = vpop.f32.mrb[0].mxu0
  %v1390 = vadd.f32 0.0, %v1389
  %v1391 = vpop.f32.mrb[0].mxu0
  %1392 = vdwg.mxu0
  %v1393 = vsel %vm97, %v1379, -inf
  %v1394 = vsel %vm97, %v1382, -inf
  %v1395 = vsel %vm97, %v1387, -inf
  %v1396 = vsel %vm97, %v1390, -inf
  %v1397 = vmax.f32 %v1393, %v1394
  %v1398 = vmax.f32 %v1395, %v1396
  %v1399 = vmax.f32 %v1397, %v1398
  %1401 = vrot.lane.b32.xlu0 %v1399, 52
  %v1402 = vpop.permute.xlu0 %1401
  %vm1404 = vcmask 458144
  %1405 = vst.msk [vmem:[%s2] sm:$0xff] %vm1404, %v1402
  %s1406 = scalar_lea.vmem %s0, 448
  %v1407 = vld [vmem:[%s1406] sm:$0xff]
  %v1408 = vld [vmem:[%s1406 + $0x8] sm:$0xff]
  %v1409 = vld [vmem:[%s1406 + $0x10] sm:$0xff]
  %v1410 = vld [vmem:[%s1406 + $0x18] sm:$0xff]
  %s1411 = scalar_lea.vmem %s1, 56
  %v1412 = vld [vmem:[%s1411] sm:$0xf]
  %v1417 = vunpack.c.l.b16 %v1407
  %v1418 = vunpack.c.h.b16 %v1407
  %v1419 = vunpack.c.l.b16 %v1408
  %v1420 = vunpack.c.h.b16 %v1408
  %v1421 = vunpack.c.l.b16 %v1409
  %v1422 = vunpack.c.h.b16 %v1409
  %v1423 = vunpack.c.l.b16 %v1410
  %v1424 = vunpack.c.h.b16 %v1410
  %v1425 = vpack.c.b16 %v1419, %v1417
  %v1426 = vpack.c.b16 %v1420, %v1418
  %v1427 = vpack.c.b16 %v1423, %v1421
  %v1428 = vpack.c.b16 %v1424, %v1422
  %v1435 = vunpack.c.l.s4 1983009808
  %v1436 = vunpack.c.0.s8 %v1435
  %v1437 = vlaneseq
  %v1438 = vshrl.u32 %v1437, 7
  %v1439 = vsub.s32 %v1436, %v1438
  %v1440 = vrot.slane %v1412, %v1439
  %v1441 = vcombine.high %v1440, %v1440
  %1444 = vmatprep.subr.bf16.mxu0 %v1441
  %1445 = vmatpush1.bf16.xpose.msra.mxu0 %v1440
  %1446 = vmatprep.subr.bf16.mxu0 0
  %1447 = vmatpush1.bf16.xpose.msra.mxu0 0
  %1448 = vmatprep.subr.bf16.mxu0 0
  %1449 = vmatpush1.bf16.xpose.msra.mxu0 0
  %1450 = vmatprep.subr.bf16.mxu0 0
  %1451 = vmatpush1.bf16.xpose.msra.mxu0 0
  %1452 = vmatprep.subr.bf16.mxu0 0
  %1453 = vmatpush1.bf16.xpose.msra.mxu0 0
  %1454 = vmatprep.subr.bf16.mxu0 0
  %1455 = vmatpush1.bf16.xpose.msra.mxu0 0
  %1456 = vmatprep.subr.bf16.mxu0 0
  %1457 = vmatpush1.bf16.xpose.msra.mxu0 0
  %1458 = vmatprep.subr.bf16.mxu0 0
  %1459 = vmatpush1.bf16.xpose.msra.mxu0 0
  %1460 = vmatprep.subr.bf16.mxu0 0
  %1461 = vmatpush1.bf16.xpose.msra.mxu0 0
  %1462 = vmatprep.subr.bf16.mxu0 0
  %1463 = vmatpush1.bf16.xpose.msra.mxu0 0
  %1464 = vmatprep.subr.bf16.mxu0 0
  %1465 = vmatpush1.bf16.xpose.msra.mxu0 0
  %1466 = vmatprep.subr.bf16.mxu0 0
  %1467 = vmatpush1.bf16.xpose.msra.mxu0 0
  %1468 = vmatprep.subr.bf16.mxu0 0
  %1469 = vmatpush1.bf16.xpose.msra.mxu0 0
  %1470 = vmatprep.subr.bf16.mxu0 0
  %1471 = vmatpush1.bf16.xpose.msra.mxu0 0
  %1472 = vmatprep.subr.bf16.mxu0 0
  %1473 = vmatpush1.bf16.xpose.msra.mxu0 0
  %1474 = vmatprep.subr.bf16.mxu0 0
  %1475 = vmatpush1.bf16.xpose.msra.mxu0 0
  %1476 = vmatprep.mubr.bf16.mxu0 %v1426
  %1477 = vmatmul.mubr.bf16.gmra.mrb[0].mxu0 %v1425
  %v1478 = vpop.f32.mrb[0].mxu0
  %v1479 = vadd.f32 0.0, %v1478
  %v1480 = vpop.f32.mrb[0].mxu0
  %v1481 = vpop.f32.mrb[0].mxu0
  %v1482 = vadd.f32 0.0, %v1481
  %v1483 = vpop.f32.mrb[0].mxu0
  %1484 = vmatprep.mubr.bf16.mxu0 %v1428
  %1485 = vmatmul.mubr.bf16.gmra.mrb[0].mxu0 %v1427
  %v1486 = vpop.f32.mrb[0].mxu0
  %v1487 = vadd.f32 0.0, %v1486
  %v1488 = vpop.f32.mrb[0].mxu0
  %v1489 = vpop.f32.mrb[0].mxu0
  %v1490 = vadd.f32 0.0, %v1489
  %v1491 = vpop.f32.mrb[0].mxu0
  %1492 = vdwg.mxu0
  %v1493 = vsel %vm97, %v1479, -inf
  %v1494 = vsel %vm97, %v1482, -inf
  %v1495 = vsel %vm97, %v1487, -inf
  %v1496 = vsel %vm97, %v1490, -inf
  %v1497 = vmax.f32 %v1493, %v1494
  %v1498 = vmax.f32 %v1495, %v1496
  %v1499 = vmax.f32 %v1497, %v1498
  %1501 = vrot.lane.b32.xlu0 %v1499, 56
  %v1502 = vpop.permute.xlu0 %1501
  %vm1504 = vcmask 490944
  %1505 = vst.msk [vmem:[%s2] sm:$0xff] %vm1504, %v1502
  %s1506 = scalar_lea.vmem %s0, 480
  %v1507 = vld [vmem:[%s1506] sm:$0xff]
  %v1508 = vld [vmem:[%s1506 + $0x8] sm:$0xff]
  %v1509 = vld [vmem:[%s1506 + $0x10] sm:$0xff]
  %v1510 = vld [vmem:[%s1506 + $0x18] sm:$0xff]
  %s1511 = scalar_lea.vmem %s1, 60
  %v1512 = vld [vmem:[%s1511] sm:$0xf]
  %v1517 = vunpack.c.l.b16 %v1507
  %v1518 = vunpack.c.h.b16 %v1507
  %v1519 = vunpack.c.l.b16 %v1508
  %v1520 = vunpack.c.h.b16 %v1508
  %v1521 = vunpack.c.l.b16 %v1509
  %v1522 = vunpack.c.h.b16 %v1509
  %v1523 = vunpack.c.l.b16 %v1510
  %v1524 = vunpack.c.h.b16 %v1510
  %v1525 = vpack.c.b16 %v1519, %v1517
  %v1526 = vpack.c.b16 %v1520, %v1518
  %v1527 = vpack.c.b16 %v1523, %v1521
  %v1528 = vpack.c.b16 %v1524, %v1522
  %v1535 = vunpack.c.l.s4 1983009808
  %v1536 = vunpack.c.0.s8 %v1535
  %v1537 = vlaneseq
  %v1538 = vshrl.u32 %v1537, 7
  %v1539 = vsub.s32 %v1536, %v1538
  %v1540 = vrot.slane %v1512, %v1539
  %v1541 = vcombine.high %v1540, %v1540
  %1544 = vmatprep.subr.bf16.mxu0 %v1541
  %1545 = vmatpush1.bf16.xpose.msra.mxu0 %v1540
  %1546 = vmatprep.subr.bf16.mxu0 0
  %1547 = vmatpush1.bf16.xpose.msra.mxu0 0
  %1548 = vmatprep.subr.bf16.mxu0 0
  %1549 = vmatpush1.bf16.xpose.msra.mxu0 0
  %1550 = vmatprep.subr.bf16.mxu0 0
  %1551 = vmatpush1.bf16.xpose.msra.mxu0 0
  %1552 = vmatprep.subr.bf16.mxu0 0
  %1553 = vmatpush1.bf16.xpose.msra.mxu0 0
  %1554 = vmatprep.subr.bf16.mxu0 0
  %1555 = vmatpush1.bf16.xpose.msra.mxu0 0
  %1556 = vmatprep.subr.bf16.mxu0 0
  %1557 = vmatpush1.bf16.xpose.msra.mxu0 0
  %1558 = vmatprep.subr.bf16.mxu0 0
  %1559 = vmatpush1.bf16.xpose.msra.mxu0 0
  %1560 = vmatprep.subr.bf16.mxu0 0
  %1561 = vmatpush1.bf16.xpose.msra.mxu0 0
  %1562 = vmatprep.subr.bf16.mxu0 0
  %1563 = vmatpush1.bf16.xpose.msra.mxu0 0
  %1564 = vmatprep.subr.bf16.mxu0 0
  %1565 = vmatpush1.bf16.xpose.msra.mxu0 0
  %1566 = vmatprep.subr.bf16.mxu0 0
  %1567 = vmatpush1.bf16.xpose.msra.mxu0 0
  %1568 = vmatprep.subr.bf16.mxu0 0
  %1569 = vmatpush1.bf16.xpose.msra.mxu0 0
  %1570 = vmatprep.subr.bf16.mxu0 0
  %1571 = vmatpush1.bf16.xpose.msra.mxu0 0
  %1572 = vmatprep.subr.bf16.mxu0 0
  %1573 = vmatpush1.bf16.xpose.msra.mxu0 0
  %1574 = vmatprep.subr.bf16.mxu0 0
  %1575 = vmatpush1.bf16.xpose.msra.mxu0 0
  %1576 = vmatprep.mubr.bf16.mxu0 %v1526
  %1577 = vmatmul.mubr.bf16.gmra.mrb[0].mxu0 %v1525
  %v1578 = vpop.f32.mrb[0].mxu0
  %v1579 = vadd.f32 0.0, %v1578
  %v1580 = vpop.f32.mrb[0].mxu0
  %v1581 = vpop.f32.mrb[0].mxu0
  %v1582 = vadd.f32 0.0, %v1581
  %v1583 = vpop.f32.mrb[0].mxu0
  %1584 = vmatprep.mubr.bf16.mxu0 %v1528
  %1585 = vmatmul.mubr.bf16.gmra.mrb[0].mxu0 %v1527
  %v1586 = vpop.f32.mrb[0].mxu0
  %v1587 = vadd.f32 0.0, %v1586
  %v1588 = vpop.f32.mrb[0].mxu0
  %v1589 = vpop.f32.mrb[0].mxu0
  %v1590 = vadd.f32 0.0, %v1589
  %v1591 = vpop.f32.mrb[0].mxu0
  %1592 = vdwg.mxu0
  %v1593 = vsel %vm97, %v1579, -inf
  %v1594 = vsel %vm97, %v1582, -inf
  %v1595 = vsel %vm97, %v1587, -inf
  %v1596 = vsel %vm97, %v1590, -inf
  %v1597 = vmax.f32 %v1593, %v1594
  %v1598 = vmax.f32 %v1595, %v1596
  %v1599 = vmax.f32 %v1597, %v1598
  %1601 = vrot.lane.b32.xlu0 %v1599, 60
  %v1602 = vpop.permute.xlu0 %1601
  %vm1604 = vcmask 523744
  %1605 = vst.msk [vmem:[%s2] sm:$0xff] %vm1604, %v1602
  %s1606 = scalar_lea.vmem %s0, 512
  %v1607 = vld [vmem:[%s1606] sm:$0xff]
  %v1608 = vld [vmem:[%s1606 + $0x8] sm:$0xff]
  %v1609 = vld [vmem:[%s1606 + $0x10] sm:$0xff]
  %v1610 = vld [vmem:[%s1606 + $0x18] sm:$0xff]
  %s1611 = scalar_lea.vmem %s1, 64
  %v1612 = vld [vmem:[%s1611] sm:$0xf]
  %v1617 = vunpack.c.l.b16 %v1607
  %v1618 = vunpack.c.h.b16 %v1607
  %v1619 = vunpack.c.l.b16 %v1608
  %v1620 = vunpack.c.h.b16 %v1608
  %v1621 = vunpack.c.l.b16 %v1609
  %v1622 = vunpack.c.h.b16 %v1609
  %v1623 = vunpack.c.l.b16 %v1610
  %v1624 = vunpack.c.h.b16 %v1610
  %v1625 = vpack.c.b16 %v1619, %v1617
  %v1626 = vpack.c.b16 %v1620, %v1618
  %v1627 = vpack.c.b16 %v1623, %v1621
  %v1628 = vpack.c.b16 %v1624, %v1622
  %v1635 = vunpack.c.l.s4 1983009808
  %v1636 = vunpack.c.0.s8 %v1635
  %v1637 = vlaneseq
  %v1638 = vshrl.u32 %v1637, 7
  %v1639 = vsub.s32 %v1636, %v1638
  %v1640 = vrot.slane %v1612, %v1639
  %v1641 = vcombine.high %v1640, %v1640
  %1644 = vmatprep.subr.bf16.mxu0 %v1641
  %1645 = vmatpush1.bf16.xpose.msra.mxu0 %v1640
  %1646 = vmatprep.subr.bf16.mxu0 0
  %1647 = vmatpush1.bf16.xpose.msra.mxu0 0
  %1648 = vmatprep.subr.bf16.mxu0 0
  %1649 = vmatpush1.bf16.xpose.msra.mxu0 0
  %1650 = vmatprep.subr.bf16.mxu0 0
  %1651 = vmatpush1.bf16.xpose.msra.mxu0 0
  %1652 = vmatprep.subr.bf16.mxu0 0
  %1653 = vmatpush1.bf16.xpose.msra.mxu0 0
  %1654 = vmatprep.subr.bf16.mxu0 0
  %1655 = vmatpush1.bf16.xpose.msra.mxu0 0
  %1656 = vmatprep.subr.bf16.mxu0 0
  %1657 = vmatpush1.bf16.xpose.msra.mxu0 0
  %1658 = vmatprep.subr.bf16.mxu0 0
  %1659 = vmatpush1.bf16.xpose.msra.mxu0 0
  %1660 = vmatprep.subr.bf16.mxu0 0
  %1661 = vmatpush1.bf16.xpose.msra.mxu0 0
  %1662 = vmatprep.subr.bf16.mxu0 0
  %1663 = vmatpush1.bf16.xpose.msra.mxu0 0
  %1664 = vmatprep.subr.bf16.mxu0 0
  %1665 = vmatpush1.bf16.xpose.msra.mxu0 0
  %1666 = vmatprep.subr.bf16.mxu0 0
  %1667 = vmatpush1.bf16.xpose.msra.mxu0 0
  %1668 = vmatprep.subr.bf16.mxu0 0
  %1669 = vmatpush1.bf16.xpose.msra.mxu0 0
  %1670 = vmatprep.subr.bf16.mxu0 0
  %1671 = vmatpush1.bf16.xpose.msra.mxu0 0
  %1672 = vmatprep.subr.bf16.mxu0 0
  %1673 = vmatpush1.bf16.xpose.msra.mxu0 0
  %1674 = vmatprep.subr.bf16.mxu0 0
  %1675 = vmatpush1.bf16.xpose.msra.mxu0 0
  %1676 = vmatprep.mubr.bf16.mxu0 %v1626
  %1677 = vmatmul.mubr.bf16.gmra.mrb[0].mxu0 %v1625
  %v1678 = vpop.f32.mrb[0].mxu0
  %v1679 = vadd.f32 0.0, %v1678
  %v1680 = vpop.f32.mrb[0].mxu0
  %v1681 = vpop.f32.mrb[0].mxu0
  %v1682 = vadd.f32 0.0, %v1681
  %v1683 = vpop.f32.mrb[0].mxu0
  %1684 = vmatprep.mubr.bf16.mxu0 %v1628
  %1685 = vmatmul.mubr.bf16.gmra.mrb[0].mxu0 %v1627
  %v1686 = vpop.f32.mrb[0].mxu0
  %v1687 = vadd.f32 0.0, %v1686
  %v1688 = vpop.f32.mrb[0].mxu0
  %v1689 = vpop.f32.mrb[0].mxu0
  %v1690 = vadd.f32 0.0, %v1689
  %v1691 = vpop.f32.mrb[0].mxu0
  %1692 = vdwg.mxu0
  %v1693 = vsel %vm97, %v1679, -inf
  %v1694 = vsel %vm97, %v1682, -inf
  %v1695 = vsel %vm97, %v1687, -inf
  %v1696 = vsel %vm97, %v1690, -inf
  %v1697 = vmax.f32 %v1693, %v1694
  %v1698 = vmax.f32 %v1695, %v1696
  %v1699 = vmax.f32 %v1697, %v1698
  %1701 = vrot.lane.b32.xlu0 %v1699, 64
  %v1702 = vpop.permute.xlu0 %1701
  %vm1704 = vcmask 556544
  %1705 = vst.msk [vmem:[%s2] sm:$0xff] %vm1704, %v1702
  %s1706 = scalar_lea.vmem %s0, 544
  %v1707 = vld [vmem:[%s1706] sm:$0xff]
  %v1708 = vld [vmem:[%s1706 + $0x8] sm:$0xff]
  %v1709 = vld [vmem:[%s1706 + $0x10] sm:$0xff]
  %v1710 = vld [vmem:[%s1706 + $0x18] sm:$0xff]
  %s1711 = scalar_lea.vmem %s1, 68
  %v1712 = vld [vmem:[%s1711] sm:$0xf]
  %v1717 = vunpack.c.l.b16 %v1707
  %v1718 = vunpack.c.h.b16 %v1707
  %v1719 = vunpack.c.l.b16 %v1708
  %v1720 = vunpack.c.h.b16 %v1708
  %v1721 = vunpack.c.l.b16 %v1709
  %v1722 = vunpack.c.h.b16 %v1709
  %v1723 = vunpack.c.l.b16 %v1710
  %v1724 = vunpack.c.h.b16 %v1710
  %v1725 = vpack.c.b16 %v1719, %v1717
  %v1726 = vpack.c.b16 %v1720, %v1718
  %v1727 = vpack.c.b16 %v1723, %v1721
  %v1728 = vpack.c.b16 %v1724, %v1722
  %v1735 = vunpack.c.l.s4 1983009808
  %v1736 = vunpack.c.0.s8 %v1735
  %v1737 = vlaneseq
  %v1738 = vshrl.u32 %v1737, 7
  %v1739 = vsub.s32 %v1736, %v1738
  %v1740 = vrot.slane %v1712, %v1739
  %v1741 = vcombine.high %v1740, %v1740
  %1744 = vmatprep.subr.bf16.mxu0 %v1741
  %1745 = vmatpush1.bf16.xpose.msra.mxu0 %v1740
  %1746 = vmatprep.subr.bf16.mxu0 0
  %1747 = vmatpush1.bf16.xpose.msra.mxu0 0
  %1748 = vmatprep.subr.bf16.mxu0 0
  %1749 = vmatpush1.bf16.xpose.msra.mxu0 0
  %1750 = vmatprep.subr.bf16.mxu0 0
  %1751 = vmatpush1.bf16.xpose.msra.mxu0 0
  %1752 = vmatprep.subr.bf16.mxu0 0
  %1753 = vmatpush1.bf16.xpose.msra.mxu0 0
  %1754 = vmatprep.subr.bf16.mxu0 0
  %1755 = vmatpush1.bf16.xpose.msra.mxu0 0
  %1756 = vmatprep.subr.bf16.mxu0 0
  %1757 = vmatpush1.bf16.xpose.msra.mxu0 0
  %1758 = vmatprep.subr.bf16.mxu0 0
  %1759 = vmatpush1.bf16.xpose.msra.mxu0 0
  %1760 = vmatprep.subr.bf16.mxu0 0
  %1761 = vmatpush1.bf16.xpose.msra.mxu0 0
  %1762 = vmatprep.subr.bf16.mxu0 0
  %1763 = vmatpush1.bf16.xpose.msra.mxu0 0
  %1764 = vmatprep.subr.bf16.mxu0 0
  %1765 = vmatpush1.bf16.xpose.msra.mxu0 0
  %1766 = vmatprep.subr.bf16.mxu0 0
  %1767 = vmatpush1.bf16.xpose.msra.mxu0 0
  %1768 = vmatprep.subr.bf16.mxu0 0
  %1769 = vmatpush1.bf16.xpose.msra.mxu0 0
  %1770 = vmatprep.subr.bf16.mxu0 0
  %1771 = vmatpush1.bf16.xpose.msra.mxu0 0
  %1772 = vmatprep.subr.bf16.mxu0 0
  %1773 = vmatpush1.bf16.xpose.msra.mxu0 0
  %1774 = vmatprep.subr.bf16.mxu0 0
  %1775 = vmatpush1.bf16.xpose.msra.mxu0 0
  %1776 = vmatprep.mubr.bf16.mxu0 %v1726
  %1777 = vmatmul.mubr.bf16.gmra.mrb[0].mxu0 %v1725
  %v1778 = vpop.f32.mrb[0].mxu0
  %v1779 = vadd.f32 0.0, %v1778
  %v1780 = vpop.f32.mrb[0].mxu0
  %v1781 = vpop.f32.mrb[0].mxu0
  %v1782 = vadd.f32 0.0, %v1781
  %v1783 = vpop.f32.mrb[0].mxu0
  %1784 = vmatprep.mubr.bf16.mxu0 %v1728
  %1785 = vmatmul.mubr.bf16.gmra.mrb[0].mxu0 %v1727
  %v1786 = vpop.f32.mrb[0].mxu0
  %v1787 = vadd.f32 0.0, %v1786
  %v1788 = vpop.f32.mrb[0].mxu0
  %v1789 = vpop.f32.mrb[0].mxu0
  %v1790 = vadd.f32 0.0, %v1789
  %v1791 = vpop.f32.mrb[0].mxu0
  %1792 = vdwg.mxu0
  %v1793 = vsel %vm97, %v1779, -inf
  %v1794 = vsel %vm97, %v1782, -inf
  %v1795 = vsel %vm97, %v1787, -inf
  %v1796 = vsel %vm97, %v1790, -inf
  %v1797 = vmax.f32 %v1793, %v1794
  %v1798 = vmax.f32 %v1795, %v1796
  %v1799 = vmax.f32 %v1797, %v1798
  %1801 = vrot.lane.b32.xlu0 %v1799, 68
  %v1802 = vpop.permute.xlu0 %1801
  %vm1804 = vcmask 589344
  %1805 = vst.msk [vmem:[%s2] sm:$0xff] %vm1804, %v1802
  %s1806 = scalar_lea.vmem %s0, 576
  %v1807 = vld [vmem:[%s1806] sm:$0xff]
  %v1808 = vld [vmem:[%s1806 + $0x8] sm:$0xff]
  %v1809 = vld [vmem:[%s1806 + $0x10] sm:$0xff]
  %v1810 = vld [vmem:[%s1806 + $0x18] sm:$0xff]
  %s1811 = scalar_lea.vmem %s1, 72
  %v1812 = vld [vmem:[%s1811] sm:$0xf]
  %v1817 = vunpack.c.l.b16 %v1807
  %v1818 = vunpack.c.h.b16 %v1807
  %v1819 = vunpack.c.l.b16 %v1808
  %v1820 = vunpack.c.h.b16 %v1808
  %v1821 = vunpack.c.l.b16 %v1809
  %v1822 = vunpack.c.h.b16 %v1809
  %v1823 = vunpack.c.l.b16 %v1810
  %v1824 = vunpack.c.h.b16 %v1810
  %v1825 = vpack.c.b16 %v1819, %v1817
  %v1826 = vpack.c.b16 %v1820, %v1818
  %v1827 = vpack.c.b16 %v1823, %v1821
  %v1828 = vpack.c.b16 %v1824, %v1822
  %v1835 = vunpack.c.l.s4 1983009808
  %v1836 = vunpack.c.0.s8 %v1835
  %v1837 = vlaneseq
  %v1838 = vshrl.u32 %v1837, 7
  %v1839 = vsub.s32 %v1836, %v1838
  %v1840 = vrot.slane %v1812, %v1839
  %v1841 = vcombine.high %v1840, %v1840
  %1844 = vmatprep.subr.bf16.mxu0 %v1841
  %1845 = vmatpush1.bf16.xpose.msra.mxu0 %v1840
  %1846 = vmatprep.subr.bf16.mxu0 0
  %1847 = vmatpush1.bf16.xpose.msra.mxu0 0
  %1848 = vmatprep.subr.bf16.mxu0 0
  %1849 = vmatpush1.bf16.xpose.msra.mxu0 0
  %1850 = vmatprep.subr.bf16.mxu0 0
  %1851 = vmatpush1.bf16.xpose.msra.mxu0 0
  %1852 = vmatprep.subr.bf16.mxu0 0
  %1853 = vmatpush1.bf16.xpose.msra.mxu0 0
  %1854 = vmatprep.subr.bf16.mxu0 0
  %1855 = vmatpush1.bf16.xpose.msra.mxu0 0
  %1856 = vmatprep.subr.bf16.mxu0 0
  %1857 = vmatpush1.bf16.xpose.msra.mxu0 0
  %1858 = vmatprep.subr.bf16.mxu0 0
  %1859 = vmatpush1.bf16.xpose.msra.mxu0 0
  %1860 = vmatprep.subr.bf16.mxu0 0
  %1861 = vmatpush1.bf16.xpose.msra.mxu0 0
  %1862 = vmatprep.subr.bf16.mxu0 0
  %1863 = vmatpush1.bf16.xpose.msra.mxu0 0
  %1864 = vmatprep.subr.bf16.mxu0 0
  %1865 = vmatpush1.bf16.xpose.msra.mxu0 0
  %1866 = vmatprep.subr.bf16.mxu0 0
  %1867 = vmatpush1.bf16.xpose.msra.mxu0 0
  %1868 = vmatprep.subr.bf16.mxu0 0
  %1869 = vmatpush1.bf16.xpose.msra.mxu0 0
  %1870 = vmatprep.subr.bf16.mxu0 0
  %1871 = vmatpush1.bf16.xpose.msra.mxu0 0
  %1872 = vmatprep.subr.bf16.mxu0 0
  %1873 = vmatpush1.bf16.xpose.msra.mxu0 0
  %1874 = vmatprep.subr.bf16.mxu0 0
  %1875 = vmatpush1.bf16.xpose.msra.mxu0 0
  %1876 = vmatprep.mubr.bf16.mxu0 %v1826
  %1877 = vmatmul.mubr.bf16.gmra.mrb[0].mxu0 %v1825
  %v1878 = vpop.f32.mrb[0].mxu0
  %v1879 = vadd.f32 0.0, %v1878
  %v1880 = vpop.f32.mrb[0].mxu0
  %v1881 = vpop.f32.mrb[0].mxu0
  %v1882 = vadd.f32 0.0, %v1881
  %v1883 = vpop.f32.mrb[0].mxu0
  %1884 = vmatprep.mubr.bf16.mxu0 %v1828
  %1885 = vmatmul.mubr.bf16.gmra.mrb[0].mxu0 %v1827
  %v1886 = vpop.f32.mrb[0].mxu0
  %v1887 = vadd.f32 0.0, %v1886
  %v1888 = vpop.f32.mrb[0].mxu0
  %v1889 = vpop.f32.mrb[0].mxu0
  %v1890 = vadd.f32 0.0, %v1889
  %v1891 = vpop.f32.mrb[0].mxu0
  %1892 = vdwg.mxu0
  %v1893 = vsel %vm97, %v1879, -inf
  %v1894 = vsel %vm97, %v1882, -inf
  %v1895 = vsel %vm97, %v1887, -inf
  %v1896 = vsel %vm97, %v1890, -inf
  %v1897 = vmax.f32 %v1893, %v1894
  %v1898 = vmax.f32 %v1895, %v1896
  %v1899 = vmax.f32 %v1897, %v1898
  %1901 = vrot.lane.b32.xlu0 %v1899, 72
  %v1902 = vpop.permute.xlu0 %1901
  %vm1904 = vcmask 622144
  %1905 = vst.msk [vmem:[%s2] sm:$0xff] %vm1904, %v1902
  %s1906 = scalar_lea.vmem %s0, 608
  %v1907 = vld [vmem:[%s1906] sm:$0xff]
  %v1908 = vld [vmem:[%s1906 + $0x8] sm:$0xff]
  %v1909 = vld [vmem:[%s1906 + $0x10] sm:$0xff]
  %v1910 = vld [vmem:[%s1906 + $0x18] sm:$0xff]
  %s1911 = scalar_lea.vmem %s1, 76
  %v1912 = vld [vmem:[%s1911] sm:$0xf]
  %v1917 = vunpack.c.l.b16 %v1907
  %v1918 = vunpack.c.h.b16 %v1907
  %v1919 = vunpack.c.l.b16 %v1908
  %v1920 = vunpack.c.h.b16 %v1908
  %v1921 = vunpack.c.l.b16 %v1909
  %v1922 = vunpack.c.h.b16 %v1909
  %v1923 = vunpack.c.l.b16 %v1910
  %v1924 = vunpack.c.h.b16 %v1910
  %v1925 = vpack.c.b16 %v1919, %v1917
  %v1926 = vpack.c.b16 %v1920, %v1918
  %v1927 = vpack.c.b16 %v1923, %v1921
  %v1928 = vpack.c.b16 %v1924, %v1922
  %v1935 = vunpack.c.l.s4 1983009808
  %v1936 = vunpack.c.0.s8 %v1935
  %v1937 = vlaneseq
  %v1938 = vshrl.u32 %v1937, 7
  %v1939 = vsub.s32 %v1936, %v1938
  %v1940 = vrot.slane %v1912, %v1939
  %v1941 = vcombine.high %v1940, %v1940
  %1944 = vmatprep.subr.bf16.mxu0 %v1941
  %1945 = vmatpush1.bf16.xpose.msra.mxu0 %v1940
  %1946 = vmatprep.subr.bf16.mxu0 0
  %1947 = vmatpush1.bf16.xpose.msra.mxu0 0
  %1948 = vmatprep.subr.bf16.mxu0 0
  %1949 = vmatpush1.bf16.xpose.msra.mxu0 0
  %1950 = vmatprep.subr.bf16.mxu0 0
  %1951 = vmatpush1.bf16.xpose.msra.mxu0 0
  %1952 = vmatprep.subr.bf16.mxu0 0
  %1953 = vmatpush1.bf16.xpose.msra.mxu0 0
  %1954 = vmatprep.subr.bf16.mxu0 0
  %1955 = vmatpush1.bf16.xpose.msra.mxu0 0
  %1956 = vmatprep.subr.bf16.mxu0 0
  %1957 = vmatpush1.bf16.xpose.msra.mxu0 0
  %1958 = vmatprep.subr.bf16.mxu0 0
  %1959 = vmatpush1.bf16.xpose.msra.mxu0 0
  %1960 = vmatprep.subr.bf16.mxu0 0
  %1961 = vmatpush1.bf16.xpose.msra.mxu0 0
  %1962 = vmatprep.subr.bf16.mxu0 0
  %1963 = vmatpush1.bf16.xpose.msra.mxu0 0
  %1964 = vmatprep.subr.bf16.mxu0 0
  %1965 = vmatpush1.bf16.xpose.msra.mxu0 0
  %1966 = vmatprep.subr.bf16.mxu0 0
  %1967 = vmatpush1.bf16.xpose.msra.mxu0 0
  %1968 = vmatprep.subr.bf16.mxu0 0
  %1969 = vmatpush1.bf16.xpose.msra.mxu0 0
  %1970 = vmatprep.subr.bf16.mxu0 0
  %1971 = vmatpush1.bf16.xpose.msra.mxu0 0
  %1972 = vmatprep.subr.bf16.mxu0 0
  %1973 = vmatpush1.bf16.xpose.msra.mxu0 0
  %1974 = vmatprep.subr.bf16.mxu0 0
  %1975 = vmatpush1.bf16.xpose.msra.mxu0 0
  %1976 = vmatprep.mubr.bf16.mxu0 %v1926
  %1977 = vmatmul.mubr.bf16.gmra.mrb[0].mxu0 %v1925
  %v1978 = vpop.f32.mrb[0].mxu0
  %v1979 = vadd.f32 0.0, %v1978
  %v1980 = vpop.f32.mrb[0].mxu0
  %v1981 = vpop.f32.mrb[0].mxu0
  %v1982 = vadd.f32 0.0, %v1981
  %v1983 = vpop.f32.mrb[0].mxu0
  %1984 = vmatprep.mubr.bf16.mxu0 %v1928
  %1985 = vmatmul.mubr.bf16.gmra.mrb[0].mxu0 %v1927
  %v1986 = vpop.f32.mrb[0].mxu0
  %v1987 = vadd.f32 0.0, %v1986
  %v1988 = vpop.f32.mrb[0].mxu0
  %v1989 = vpop.f32.mrb[0].mxu0
  %v1990 = vadd.f32 0.0, %v1989
  %v1991 = vpop.f32.mrb[0].mxu0
  %1992 = vdwg.mxu0
  %v1993 = vsel %vm97, %v1979, -inf
  %v1994 = vsel %vm97, %v1982, -inf
  %v1995 = vsel %vm97, %v1987, -inf
  %v1996 = vsel %vm97, %v1990, -inf
  %v1997 = vmax.f32 %v1993, %v1994
  %v1998 = vmax.f32 %v1995, %v1996
  %v1999 = vmax.f32 %v1997, %v1998
  %2001 = vrot.lane.b32.xlu0 %v1999, 76
  %v2002 = vpop.permute.xlu0 %2001
  %vm2004 = vcmask 654944
  %2005 = vst.msk [vmem:[%s2] sm:$0xff] %vm2004, %v2002
  %s2006 = scalar_lea.vmem %s0, 640
  %v2007 = vld [vmem:[%s2006] sm:$0xff]
  %v2008 = vld [vmem:[%s2006 + $0x8] sm:$0xff]
  %v2009 = vld [vmem:[%s2006 + $0x10] sm:$0xff]
  %v2010 = vld [vmem:[%s2006 + $0x18] sm:$0xff]
  %s2011 = scalar_lea.vmem %s1, 80
  %v2012 = vld [vmem:[%s2011] sm:$0xf]
  %v2017 = vunpack.c.l.b16 %v2007
  %v2018 = vunpack.c.h.b16 %v2007
  %v2019 = vunpack.c.l.b16 %v2008
  %v2020 = vunpack.c.h.b16 %v2008
  %v2021 = vunpack.c.l.b16 %v2009
  %v2022 = vunpack.c.h.b16 %v2009
  %v2023 = vunpack.c.l.b16 %v2010
  %v2024 = vunpack.c.h.b16 %v2010
  %v2025 = vpack.c.b16 %v2019, %v2017
  %v2026 = vpack.c.b16 %v2020, %v2018
  %v2027 = vpack.c.b16 %v2023, %v2021
  %v2028 = vpack.c.b16 %v2024, %v2022
  %v2035 = vunpack.c.l.s4 1983009808
  %v2036 = vunpack.c.0.s8 %v2035
  %v2037 = vlaneseq
  %v2038 = vshrl.u32 %v2037, 7
  %v2039 = vsub.s32 %v2036, %v2038
  %v2040 = vrot.slane %v2012, %v2039
  %v2041 = vcombine.high %v2040, %v2040
  %2044 = vmatprep.subr.bf16.mxu0 %v2041
  %2045 = vmatpush1.bf16.xpose.msra.mxu0 %v2040
  %2046 = vmatprep.subr.bf16.mxu0 0
  %2047 = vmatpush1.bf16.xpose.msra.mxu0 0
  %2048 = vmatprep.subr.bf16.mxu0 0
  %2049 = vmatpush1.bf16.xpose.msra.mxu0 0
  %2050 = vmatprep.subr.bf16.mxu0 0
  %2051 = vmatpush1.bf16.xpose.msra.mxu0 0
  %2052 = vmatprep.subr.bf16.mxu0 0
  %2053 = vmatpush1.bf16.xpose.msra.mxu0 0
  %2054 = vmatprep.subr.bf16.mxu0 0
  %2055 = vmatpush1.bf16.xpose.msra.mxu0 0
  %2056 = vmatprep.subr.bf16.mxu0 0
  %2057 = vmatpush1.bf16.xpose.msra.mxu0 0
  %2058 = vmatprep.subr.bf16.mxu0 0
  %2059 = vmatpush1.bf16.xpose.msra.mxu0 0
  %2060 = vmatprep.subr.bf16.mxu0 0
  %2061 = vmatpush1.bf16.xpose.msra.mxu0 0
  %2062 = vmatprep.subr.bf16.mxu0 0
  %2063 = vmatpush1.bf16.xpose.msra.mxu0 0
  %2064 = vmatprep.subr.bf16.mxu0 0
  %2065 = vmatpush1.bf16.xpose.msra.mxu0 0
  %2066 = vmatprep.subr.bf16.mxu0 0
  %2067 = vmatpush1.bf16.xpose.msra.mxu0 0
  %2068 = vmatprep.subr.bf16.mxu0 0
  %2069 = vmatpush1.bf16.xpose.msra.mxu0 0
  %2070 = vmatprep.subr.bf16.mxu0 0
  %2071 = vmatpush1.bf16.xpose.msra.mxu0 0
  %2072 = vmatprep.subr.bf16.mxu0 0
  %2073 = vmatpush1.bf16.xpose.msra.mxu0 0
  %2074 = vmatprep.subr.bf16.mxu0 0
  %2075 = vmatpush1.bf16.xpose.msra.mxu0 0
  %2076 = vmatprep.mubr.bf16.mxu0 %v2026
  %2077 = vmatmul.mubr.bf16.gmra.mrb[0].mxu0 %v2025
  %v2078 = vpop.f32.mrb[0].mxu0
  %v2079 = vadd.f32 0.0, %v2078
  %v2080 = vpop.f32.mrb[0].mxu0
  %v2081 = vpop.f32.mrb[0].mxu0
  %v2082 = vadd.f32 0.0, %v2081
  %v2083 = vpop.f32.mrb[0].mxu0
  %2084 = vmatprep.mubr.bf16.mxu0 %v2028
  %2085 = vmatmul.mubr.bf16.gmra.mrb[0].mxu0 %v2027
  %v2086 = vpop.f32.mrb[0].mxu0
  %v2087 = vadd.f32 0.0, %v2086
  %v2088 = vpop.f32.mrb[0].mxu0
  %v2089 = vpop.f32.mrb[0].mxu0
  %v2090 = vadd.f32 0.0, %v2089
  %v2091 = vpop.f32.mrb[0].mxu0
  %2092 = vdwg.mxu0
  %v2093 = vsel %vm97, %v2079, -inf
  %v2094 = vsel %vm97, %v2082, -inf
  %v2095 = vsel %vm97, %v2087, -inf
  %v2096 = vsel %vm97, %v2090, -inf
  %v2097 = vmax.f32 %v2093, %v2094
  %v2098 = vmax.f32 %v2095, %v2096
  %v2099 = vmax.f32 %v2097, %v2098
  %2101 = vrot.lane.b32.xlu0 %v2099, 80
  %v2102 = vpop.permute.xlu0 %2101
  %vm2104 = vcmask 687744
  %2105 = vst.msk [vmem:[%s2] sm:$0xff] %vm2104, %v2102
  %s2106 = scalar_lea.vmem %s0, 672
  %v2107 = vld [vmem:[%s2106] sm:$0xff]
  %v2108 = vld [vmem:[%s2106 + $0x8] sm:$0xff]
  %v2109 = vld [vmem:[%s2106 + $0x10] sm:$0xff]
  %v2110 = vld [vmem:[%s2106 + $0x18] sm:$0xff]
  %s2111 = scalar_lea.vmem %s1, 84
  %v2112 = vld [vmem:[%s2111] sm:$0xf]
  %v2117 = vunpack.c.l.b16 %v2107
  %v2118 = vunpack.c.h.b16 %v2107
  %v2119 = vunpack.c.l.b16 %v2108
  %v2120 = vunpack.c.h.b16 %v2108
  %v2121 = vunpack.c.l.b16 %v2109
  %v2122 = vunpack.c.h.b16 %v2109
  %v2123 = vunpack.c.l.b16 %v2110
  %v2124 = vunpack.c.h.b16 %v2110
  %v2125 = vpack.c.b16 %v2119, %v2117
  %v2126 = vpack.c.b16 %v2120, %v2118
  %v2127 = vpack.c.b16 %v2123, %v2121
  %v2128 = vpack.c.b16 %v2124, %v2122
  %v2135 = vunpack.c.l.s4 1983009808
  %v2136 = vunpack.c.0.s8 %v2135
  %v2137 = vlaneseq
  %v2138 = vshrl.u32 %v2137, 7
  %v2139 = vsub.s32 %v2136, %v2138
  %v2140 = vrot.slane %v2112, %v2139
  %v2141 = vcombine.high %v2140, %v2140
  %2144 = vmatprep.subr.bf16.mxu0 %v2141
  %2145 = vmatpush1.bf16.xpose.msra.mxu0 %v2140
  %2146 = vmatprep.subr.bf16.mxu0 0
  %2147 = vmatpush1.bf16.xpose.msra.mxu0 0
  %2148 = vmatprep.subr.bf16.mxu0 0
  %2149 = vmatpush1.bf16.xpose.msra.mxu0 0
  %2150 = vmatprep.subr.bf16.mxu0 0
  %2151 = vmatpush1.bf16.xpose.msra.mxu0 0
  %2152 = vmatprep.subr.bf16.mxu0 0
  %2153 = vmatpush1.bf16.xpose.msra.mxu0 0
  %2154 = vmatprep.subr.bf16.mxu0 0
  %2155 = vmatpush1.bf16.xpose.msra.mxu0 0
  %2156 = vmatprep.subr.bf16.mxu0 0
  %2157 = vmatpush1.bf16.xpose.msra.mxu0 0
  %2158 = vmatprep.subr.bf16.mxu0 0
  %2159 = vmatpush1.bf16.xpose.msra.mxu0 0
  %2160 = vmatprep.subr.bf16.mxu0 0
  %2161 = vmatpush1.bf16.xpose.msra.mxu0 0
  %2162 = vmatprep.subr.bf16.mxu0 0
  %2163 = vmatpush1.bf16.xpose.msra.mxu0 0
  %2164 = vmatprep.subr.bf16.mxu0 0
  %2165 = vmatpush1.bf16.xpose.msra.mxu0 0
  %2166 = vmatprep.subr.bf16.mxu0 0
  %2167 = vmatpush1.bf16.xpose.msra.mxu0 0
  %2168 = vmatprep.subr.bf16.mxu0 0
  %2169 = vmatpush1.bf16.xpose.msra.mxu0 0
  %2170 = vmatprep.subr.bf16.mxu0 0
  %2171 = vmatpush1.bf16.xpose.msra.mxu0 0
  %2172 = vmatprep.subr.bf16.mxu0 0
  %2173 = vmatpush1.bf16.xpose.msra.mxu0 0
  %2174 = vmatprep.subr.bf16.mxu0 0
  %2175 = vmatpush1.bf16.xpose.msra.mxu0 0
  %2176 = vmatprep.mubr.bf16.mxu0 %v2126
  %2177 = vmatmul.mubr.bf16.gmra.mrb[0].mxu0 %v2125
  %v2178 = vpop.f32.mrb[0].mxu0
  %v2179 = vadd.f32 0.0, %v2178
  %v2180 = vpop.f32.mrb[0].mxu0
  %v2181 = vpop.f32.mrb[0].mxu0
  %v2182 = vadd.f32 0.0, %v2181
  %v2183 = vpop.f32.mrb[0].mxu0
  %2184 = vmatprep.mubr.bf16.mxu0 %v2128
  %2185 = vmatmul.mubr.bf16.gmra.mrb[0].mxu0 %v2127
  %v2186 = vpop.f32.mrb[0].mxu0
  %v2187 = vadd.f32 0.0, %v2186
  %v2188 = vpop.f32.mrb[0].mxu0
  %v2189 = vpop.f32.mrb[0].mxu0
  %v2190 = vadd.f32 0.0, %v2189
  %v2191 = vpop.f32.mrb[0].mxu0
  %2192 = vdwg.mxu0
  %v2193 = vsel %vm97, %v2179, -inf
  %v2194 = vsel %vm97, %v2182, -inf
  %v2195 = vsel %vm97, %v2187, -inf
  %v2196 = vsel %vm97, %v2190, -inf
  %v2197 = vmax.f32 %v2193, %v2194
  %v2198 = vmax.f32 %v2195, %v2196
  %v2199 = vmax.f32 %v2197, %v2198
  %2201 = vrot.lane.b32.xlu0 %v2199, 84
  %v2202 = vpop.permute.xlu0 %2201
  %vm2204 = vcmask 720544
  %2205 = vst.msk [vmem:[%s2] sm:$0xff] %vm2204, %v2202
  %s2206 = scalar_lea.vmem %s0, 704
  %v2207 = vld [vmem:[%s2206] sm:$0xff]
  %v2208 = vld [vmem:[%s2206 + $0x8] sm:$0xff]
  %v2209 = vld [vmem:[%s2206 + $0x10] sm:$0xff]
  %v2210 = vld [vmem:[%s2206 + $0x18] sm:$0xff]
  %s2211 = scalar_lea.vmem %s1, 88
  %v2212 = vld [vmem:[%s2211] sm:$0xf]
  %v2217 = vunpack.c.l.b16 %v2207
  %v2218 = vunpack.c.h.b16 %v2207
  %v2219 = vunpack.c.l.b16 %v2208
  %v2220 = vunpack.c.h.b16 %v2208
  %v2221 = vunpack.c.l.b16 %v2209
  %v2222 = vunpack.c.h.b16 %v2209
  %v2223 = vunpack.c.l.b16 %v2210
  %v2224 = vunpack.c.h.b16 %v2210
  %v2225 = vpack.c.b16 %v2219, %v2217
  %v2226 = vpack.c.b16 %v2220, %v2218
  %v2227 = vpack.c.b16 %v2223, %v2221
  %v2228 = vpack.c.b16 %v2224, %v2222
  %v2235 = vunpack.c.l.s4 1983009808
  %v2236 = vunpack.c.0.s8 %v2235
  %v2237 = vlaneseq
  %v2238 = vshrl.u32 %v2237, 7
  %v2239 = vsub.s32 %v2236, %v2238
  %v2240 = vrot.slane %v2212, %v2239
  %v2241 = vcombine.high %v2240, %v2240
  %2244 = vmatprep.subr.bf16.mxu0 %v2241
  %2245 = vmatpush1.bf16.xpose.msra.mxu0 %v2240
  %2246 = vmatprep.subr.bf16.mxu0 0
  %2247 = vmatpush1.bf16.xpose.msra.mxu0 0
  %2248 = vmatprep.subr.bf16.mxu0 0
  %2249 = vmatpush1.bf16.xpose.msra.mxu0 0
  %2250 = vmatprep.subr.bf16.mxu0 0
  %2251 = vmatpush1.bf16.xpose.msra.mxu0 0
  %2252 = vmatprep.subr.bf16.mxu0 0
  %2253 = vmatpush1.bf16.xpose.msra.mxu0 0
  %2254 = vmatprep.subr.bf16.mxu0 0
  %2255 = vmatpush1.bf16.xpose.msra.mxu0 0
  %2256 = vmatprep.subr.bf16.mxu0 0
  %2257 = vmatpush1.bf16.xpose.msra.mxu0 0
  %2258 = vmatprep.subr.bf16.mxu0 0
  %2259 = vmatpush1.bf16.xpose.msra.mxu0 0
  %2260 = vmatprep.subr.bf16.mxu0 0
  %2261 = vmatpush1.bf16.xpose.msra.mxu0 0
  %2262 = vmatprep.subr.bf16.mxu0 0
  %2263 = vmatpush1.bf16.xpose.msra.mxu0 0
  %2264 = vmatprep.subr.bf16.mxu0 0
  %2265 = vmatpush1.bf16.xpose.msra.mxu0 0
  %2266 = vmatprep.subr.bf16.mxu0 0
  %2267 = vmatpush1.bf16.xpose.msra.mxu0 0
  %2268 = vmatprep.subr.bf16.mxu0 0
  %2269 = vmatpush1.bf16.xpose.msra.mxu0 0
  %2270 = vmatprep.subr.bf16.mxu0 0
  %2271 = vmatpush1.bf16.xpose.msra.mxu0 0
  %2272 = vmatprep.subr.bf16.mxu0 0
  %2273 = vmatpush1.bf16.xpose.msra.mxu0 0
  %2274 = vmatprep.subr.bf16.mxu0 0
  %2275 = vmatpush1.bf16.xpose.msra.mxu0 0
  %2276 = vmatprep.mubr.bf16.mxu0 %v2226
  %2277 = vmatmul.mubr.bf16.gmra.mrb[0].mxu0 %v2225
  %v2278 = vpop.f32.mrb[0].mxu0
  %v2279 = vadd.f32 0.0, %v2278
  %v2280 = vpop.f32.mrb[0].mxu0
  %v2281 = vpop.f32.mrb[0].mxu0
  %v2282 = vadd.f32 0.0, %v2281
  %v2283 = vpop.f32.mrb[0].mxu0
  %2284 = vmatprep.mubr.bf16.mxu0 %v2228
  %2285 = vmatmul.mubr.bf16.gmra.mrb[0].mxu0 %v2227
  %v2286 = vpop.f32.mrb[0].mxu0
  %v2287 = vadd.f32 0.0, %v2286
  %v2288 = vpop.f32.mrb[0].mxu0
  %v2289 = vpop.f32.mrb[0].mxu0
  %v2290 = vadd.f32 0.0, %v2289
  %v2291 = vpop.f32.mrb[0].mxu0
  %2292 = vdwg.mxu0
  %v2293 = vsel %vm97, %v2279, -inf
  %v2294 = vsel %vm97, %v2282, -inf
  %v2295 = vsel %vm97, %v2287, -inf
  %v2296 = vsel %vm97, %v2290, -inf
  %v2297 = vmax.f32 %v2293, %v2294
  %v2298 = vmax.f32 %v2295, %v2296
  %v2299 = vmax.f32 %v2297, %v2298
  %2301 = vrot.lane.b32.xlu0 %v2299, 88
  %v2302 = vpop.permute.xlu0 %2301
  %vm2304 = vcmask 753344
  %2305 = vst.msk [vmem:[%s2] sm:$0xff] %vm2304, %v2302
  %s2306 = scalar_lea.vmem %s0, 736
  %v2307 = vld [vmem:[%s2306] sm:$0xff]
  %v2308 = vld [vmem:[%s2306 + $0x8] sm:$0xff]
  %v2309 = vld [vmem:[%s2306 + $0x10] sm:$0xff]
  %v2310 = vld [vmem:[%s2306 + $0x18] sm:$0xff]
  %s2311 = scalar_lea.vmem %s1, 92
  %v2312 = vld [vmem:[%s2311] sm:$0xf]
  %v2317 = vunpack.c.l.b16 %v2307
  %v2318 = vunpack.c.h.b16 %v2307
  %v2319 = vunpack.c.l.b16 %v2308
  %v2320 = vunpack.c.h.b16 %v2308
  %v2321 = vunpack.c.l.b16 %v2309
  %v2322 = vunpack.c.h.b16 %v2309
  %v2323 = vunpack.c.l.b16 %v2310
  %v2324 = vunpack.c.h.b16 %v2310
  %v2325 = vpack.c.b16 %v2319, %v2317
  %v2326 = vpack.c.b16 %v2320, %v2318
  %v2327 = vpack.c.b16 %v2323, %v2321
  %v2328 = vpack.c.b16 %v2324, %v2322
  %v2335 = vunpack.c.l.s4 1983009808
  %v2336 = vunpack.c.0.s8 %v2335
  %v2337 = vlaneseq
  %v2338 = vshrl.u32 %v2337, 7
  %v2339 = vsub.s32 %v2336, %v2338
  %v2340 = vrot.slane %v2312, %v2339
  %v2341 = vcombine.high %v2340, %v2340
  %2344 = vmatprep.subr.bf16.mxu0 %v2341
  %2345 = vmatpush1.bf16.xpose.msra.mxu0 %v2340
  %2346 = vmatprep.subr.bf16.mxu0 0
  %2347 = vmatpush1.bf16.xpose.msra.mxu0 0
  %2348 = vmatprep.subr.bf16.mxu0 0
  %2349 = vmatpush1.bf16.xpose.msra.mxu0 0
  %2350 = vmatprep.subr.bf16.mxu0 0
  %2351 = vmatpush1.bf16.xpose.msra.mxu0 0
  %2352 = vmatprep.subr.bf16.mxu0 0
  %2353 = vmatpush1.bf16.xpose.msra.mxu0 0
  %2354 = vmatprep.subr.bf16.mxu0 0
  %2355 = vmatpush1.bf16.xpose.msra.mxu0 0
  %2356 = vmatprep.subr.bf16.mxu0 0
  %2357 = vmatpush1.bf16.xpose.msra.mxu0 0
  %2358 = vmatprep.subr.bf16.mxu0 0
  %2359 = vmatpush1.bf16.xpose.msra.mxu0 0
  %2360 = vmatprep.subr.bf16.mxu0 0
  %2361 = vmatpush1.bf16.xpose.msra.mxu0 0
  %2362 = vmatprep.subr.bf16.mxu0 0
  %2363 = vmatpush1.bf16.xpose.msra.mxu0 0
  %2364 = vmatprep.subr.bf16.mxu0 0
  %2365 = vmatpush1.bf16.xpose.msra.mxu0 0
  %2366 = vmatprep.subr.bf16.mxu0 0
  %2367 = vmatpush1.bf16.xpose.msra.mxu0 0
  %2368 = vmatprep.subr.bf16.mxu0 0
  %2369 = vmatpush1.bf16.xpose.msra.mxu0 0
  %2370 = vmatprep.subr.bf16.mxu0 0
  %2371 = vmatpush1.bf16.xpose.msra.mxu0 0
  %2372 = vmatprep.subr.bf16.mxu0 0
  %2373 = vmatpush1.bf16.xpose.msra.mxu0 0
  %2374 = vmatprep.subr.bf16.mxu0 0
  %2375 = vmatpush1.bf16.xpose.msra.mxu0 0
  %2376 = vmatprep.mubr.bf16.mxu0 %v2326
  %2377 = vmatmul.mubr.bf16.gmra.mrb[0].mxu0 %v2325
  %v2378 = vpop.f32.mrb[0].mxu0
  %v2379 = vadd.f32 0.0, %v2378
  %v2380 = vpop.f32.mrb[0].mxu0
  %v2381 = vpop.f32.mrb[0].mxu0
  %v2382 = vadd.f32 0.0, %v2381
  %v2383 = vpop.f32.mrb[0].mxu0
  %2384 = vmatprep.mubr.bf16.mxu0 %v2328
  %2385 = vmatmul.mubr.bf16.gmra.mrb[0].mxu0 %v2327
  %v2386 = vpop.f32.mrb[0].mxu0
  %v2387 = vadd.f32 0.0, %v2386
  %v2388 = vpop.f32.mrb[0].mxu0
  %v2389 = vpop.f32.mrb[0].mxu0
  %v2390 = vadd.f32 0.0, %v2389
  %v2391 = vpop.f32.mrb[0].mxu0
  %2392 = vdwg.mxu0
  %v2393 = vsel %vm97, %v2379, -inf
  %v2394 = vsel %vm97, %v2382, -inf
  %v2395 = vsel %vm97, %v2387, -inf
  %v2396 = vsel %vm97, %v2390, -inf
  %v2397 = vmax.f32 %v2393, %v2394
  %v2398 = vmax.f32 %v2395, %v2396
  %v2399 = vmax.f32 %v2397, %v2398
  %2401 = vrot.lane.b32.xlu0 %v2399, 92
  %v2402 = vpop.permute.xlu0 %2401
  %vm2404 = vcmask 786144
  %2405 = vst.msk [vmem:[%s2] sm:$0xff] %vm2404, %v2402
  %s2406 = scalar_lea.vmem %s0, 768
  %v2407 = vld [vmem:[%s2406] sm:$0xff]
  %v2408 = vld [vmem:[%s2406 + $0x8] sm:$0xff]
  %v2409 = vld [vmem:[%s2406 + $0x10] sm:$0xff]
  %v2410 = vld [vmem:[%s2406 + $0x18] sm:$0xff]
  %s2411 = scalar_lea.vmem %s1, 96
  %v2412 = vld [vmem:[%s2411] sm:$0xf]
  %v2417 = vunpack.c.l.b16 %v2407
  %v2418 = vunpack.c.h.b16 %v2407
  %v2419 = vunpack.c.l.b16 %v2408
  %v2420 = vunpack.c.h.b16 %v2408
  %v2421 = vunpack.c.l.b16 %v2409
  %v2422 = vunpack.c.h.b16 %v2409
  %v2423 = vunpack.c.l.b16 %v2410
  %v2424 = vunpack.c.h.b16 %v2410
  %v2425 = vpack.c.b16 %v2419, %v2417
  %v2426 = vpack.c.b16 %v2420, %v2418
  %v2427 = vpack.c.b16 %v2423, %v2421
  %v2428 = vpack.c.b16 %v2424, %v2422
  %v2435 = vunpack.c.l.s4 1983009808
  %v2436 = vunpack.c.0.s8 %v2435
  %v2437 = vlaneseq
  %v2438 = vshrl.u32 %v2437, 7
  %v2439 = vsub.s32 %v2436, %v2438
  %v2440 = vrot.slane %v2412, %v2439
  %v2441 = vcombine.high %v2440, %v2440
  %2444 = vmatprep.subr.bf16.mxu0 %v2441
  %2445 = vmatpush1.bf16.xpose.msra.mxu0 %v2440
  %2446 = vmatprep.subr.bf16.mxu0 0
  %2447 = vmatpush1.bf16.xpose.msra.mxu0 0
  %2448 = vmatprep.subr.bf16.mxu0 0
  %2449 = vmatpush1.bf16.xpose.msra.mxu0 0
  %2450 = vmatprep.subr.bf16.mxu0 0
  %2451 = vmatpush1.bf16.xpose.msra.mxu0 0
  %2452 = vmatprep.subr.bf16.mxu0 0
  %2453 = vmatpush1.bf16.xpose.msra.mxu0 0
  %2454 = vmatprep.subr.bf16.mxu0 0
  %2455 = vmatpush1.bf16.xpose.msra.mxu0 0
  %2456 = vmatprep.subr.bf16.mxu0 0
  %2457 = vmatpush1.bf16.xpose.msra.mxu0 0
  %2458 = vmatprep.subr.bf16.mxu0 0
  %2459 = vmatpush1.bf16.xpose.msra.mxu0 0
  %2460 = vmatprep.subr.bf16.mxu0 0
  %2461 = vmatpush1.bf16.xpose.msra.mxu0 0
  %2462 = vmatprep.subr.bf16.mxu0 0
  %2463 = vmatpush1.bf16.xpose.msra.mxu0 0
  %2464 = vmatprep.subr.bf16.mxu0 0
  %2465 = vmatpush1.bf16.xpose.msra.mxu0 0
  %2466 = vmatprep.subr.bf16.mxu0 0
  %2467 = vmatpush1.bf16.xpose.msra.mxu0 0
  %2468 = vmatprep.subr.bf16.mxu0 0
  %2469 = vmatpush1.bf16.xpose.msra.mxu0 0
  %2470 = vmatprep.subr.bf16.mxu0 0
  %2471 = vmatpush1.bf16.xpose.msra.mxu0 0
  %2472 = vmatprep.subr.bf16.mxu0 0
  %2473 = vmatpush1.bf16.xpose.msra.mxu0 0
  %2474 = vmatprep.subr.bf16.mxu0 0
  %2475 = vmatpush1.bf16.xpose.msra.mxu0 0
  %2476 = vmatprep.mubr.bf16.mxu0 %v2426
  %2477 = vmatmul.mubr.bf16.gmra.mrb[0].mxu0 %v2425
  %v2478 = vpop.f32.mrb[0].mxu0
  %v2479 = vadd.f32 0.0, %v2478
  %v2480 = vpop.f32.mrb[0].mxu0
  %v2481 = vpop.f32.mrb[0].mxu0
  %v2482 = vadd.f32 0.0, %v2481
  %v2483 = vpop.f32.mrb[0].mxu0
  %2484 = vmatprep.mubr.bf16.mxu0 %v2428
  %2485 = vmatmul.mubr.bf16.gmra.mrb[0].mxu0 %v2427
  %v2486 = vpop.f32.mrb[0].mxu0
  %v2487 = vadd.f32 0.0, %v2486
  %v2488 = vpop.f32.mrb[0].mxu0
  %v2489 = vpop.f32.mrb[0].mxu0
  %v2490 = vadd.f32 0.0, %v2489
  %v2491 = vpop.f32.mrb[0].mxu0
  %2492 = vdwg.mxu0
  %v2493 = vsel %vm97, %v2479, -inf
  %v2494 = vsel %vm97, %v2482, -inf
  %v2495 = vsel %vm97, %v2487, -inf
  %v2496 = vsel %vm97, %v2490, -inf
  %v2497 = vmax.f32 %v2493, %v2494
  %v2498 = vmax.f32 %v2495, %v2496
  %v2499 = vmax.f32 %v2497, %v2498
  %2501 = vrot.lane.b32.xlu0 %v2499, 96
  %v2502 = vpop.permute.xlu0 %2501
  %vm2504 = vcmask 818944
  %2505 = vst.msk [vmem:[%s2] sm:$0xff] %vm2504, %v2502
  %s2506 = scalar_lea.vmem %s0, 800
  %v2507 = vld [vmem:[%s2506] sm:$0xff]
  %v2508 = vld [vmem:[%s2506 + $0x8] sm:$0xff]
  %v2509 = vld [vmem:[%s2506 + $0x10] sm:$0xff]
  %v2510 = vld [vmem:[%s2506 + $0x18] sm:$0xff]
  %s2511 = scalar_lea.vmem %s1, 100
  %v2512 = vld [vmem:[%s2511] sm:$0xf]
  %v2517 = vunpack.c.l.b16 %v2507
  %v2518 = vunpack.c.h.b16 %v2507
  %v2519 = vunpack.c.l.b16 %v2508
  %v2520 = vunpack.c.h.b16 %v2508
  %v2521 = vunpack.c.l.b16 %v2509
  %v2522 = vunpack.c.h.b16 %v2509
  %v2523 = vunpack.c.l.b16 %v2510
  %v2524 = vunpack.c.h.b16 %v2510
  %v2525 = vpack.c.b16 %v2519, %v2517
  %v2526 = vpack.c.b16 %v2520, %v2518
  %v2527 = vpack.c.b16 %v2523, %v2521
  %v2528 = vpack.c.b16 %v2524, %v2522
  %v2535 = vunpack.c.l.s4 1983009808
  %v2536 = vunpack.c.0.s8 %v2535
  %v2537 = vlaneseq
  %v2538 = vshrl.u32 %v2537, 7
  %v2539 = vsub.s32 %v2536, %v2538
  %v2540 = vrot.slane %v2512, %v2539
  %v2541 = vcombine.high %v2540, %v2540
  %2544 = vmatprep.subr.bf16.mxu0 %v2541
  %2545 = vmatpush1.bf16.xpose.msra.mxu0 %v2540
  %2546 = vmatprep.subr.bf16.mxu0 0
  %2547 = vmatpush1.bf16.xpose.msra.mxu0 0
  %2548 = vmatprep.subr.bf16.mxu0 0
  %2549 = vmatpush1.bf16.xpose.msra.mxu0 0
  %2550 = vmatprep.subr.bf16.mxu0 0
  %2551 = vmatpush1.bf16.xpose.msra.mxu0 0
  %2552 = vmatprep.subr.bf16.mxu0 0
  %2553 = vmatpush1.bf16.xpose.msra.mxu0 0
  %2554 = vmatprep.subr.bf16.mxu0 0
  %2555 = vmatpush1.bf16.xpose.msra.mxu0 0
  %2556 = vmatprep.subr.bf16.mxu0 0
  %2557 = vmatpush1.bf16.xpose.msra.mxu0 0
  %2558 = vmatprep.subr.bf16.mxu0 0
  %2559 = vmatpush1.bf16.xpose.msra.mxu0 0
  %2560 = vmatprep.subr.bf16.mxu0 0
  %2561 = vmatpush1.bf16.xpose.msra.mxu0 0
  %2562 = vmatprep.subr.bf16.mxu0 0
  %2563 = vmatpush1.bf16.xpose.msra.mxu0 0
  %2564 = vmatprep.subr.bf16.mxu0 0
  %2565 = vmatpush1.bf16.xpose.msra.mxu0 0
  %2566 = vmatprep.subr.bf16.mxu0 0
  %2567 = vmatpush1.bf16.xpose.msra.mxu0 0
  %2568 = vmatprep.subr.bf16.mxu0 0
  %2569 = vmatpush1.bf16.xpose.msra.mxu0 0
  %2570 = vmatprep.subr.bf16.mxu0 0
  %2571 = vmatpush1.bf16.xpose.msra.mxu0 0
  %2572 = vmatprep.subr.bf16.mxu0 0
  %2573 = vmatpush1.bf16.xpose.msra.mxu0 0
  %2574 = vmatprep.subr.bf16.mxu0 0
  %2575 = vmatpush1.bf16.xpose.msra.mxu0 0
  %2576 = vmatprep.mubr.bf16.mxu0 %v2526
  %2577 = vmatmul.mubr.bf16.gmra.mrb[0].mxu0 %v2525
  %v2578 = vpop.f32.mrb[0].mxu0
  %v2579 = vadd.f32 0.0, %v2578
  %v2580 = vpop.f32.mrb[0].mxu0
  %v2581 = vpop.f32.mrb[0].mxu0
  %v2582 = vadd.f32 0.0, %v2581
  %v2583 = vpop.f32.mrb[0].mxu0
  %2584 = vmatprep.mubr.bf16.mxu0 %v2528
  %2585 = vmatmul.mubr.bf16.gmra.mrb[0].mxu0 %v2527
  %v2586 = vpop.f32.mrb[0].mxu0
  %v2587 = vadd.f32 0.0, %v2586
  %v2588 = vpop.f32.mrb[0].mxu0
  %v2589 = vpop.f32.mrb[0].mxu0
  %v2590 = vadd.f32 0.0, %v2589
  %v2591 = vpop.f32.mrb[0].mxu0
  %2592 = vdwg.mxu0
  %v2593 = vsel %vm97, %v2579, -inf
  %v2594 = vsel %vm97, %v2582, -inf
  %v2595 = vsel %vm97, %v2587, -inf
  %v2596 = vsel %vm97, %v2590, -inf
  %v2597 = vmax.f32 %v2593, %v2594
  %v2598 = vmax.f32 %v2595, %v2596
  %v2599 = vmax.f32 %v2597, %v2598
  %2601 = vrot.lane.b32.xlu0 %v2599, 100
  %v2602 = vpop.permute.xlu0 %2601
  %vm2604 = vcmask 851744
  %2605 = vst.msk [vmem:[%s2] sm:$0xff] %vm2604, %v2602
  %s2606 = scalar_lea.vmem %s0, 832
  %v2607 = vld [vmem:[%s2606] sm:$0xff]
  %v2608 = vld [vmem:[%s2606 + $0x8] sm:$0xff]
  %v2609 = vld [vmem:[%s2606 + $0x10] sm:$0xff]
  %v2610 = vld [vmem:[%s2606 + $0x18] sm:$0xff]
  %s2611 = scalar_lea.vmem %s1, 104
  %v2612 = vld [vmem:[%s2611] sm:$0xf]
  %v2617 = vunpack.c.l.b16 %v2607
  %v2618 = vunpack.c.h.b16 %v2607
  %v2619 = vunpack.c.l.b16 %v2608
  %v2620 = vunpack.c.h.b16 %v2608
  %v2621 = vunpack.c.l.b16 %v2609
  %v2622 = vunpack.c.h.b16 %v2609
  %v2623 = vunpack.c.l.b16 %v2610
  %v2624 = vunpack.c.h.b16 %v2610
  %v2625 = vpack.c.b16 %v2619, %v2617
  %v2626 = vpack.c.b16 %v2620, %v2618
  %v2627 = vpack.c.b16 %v2623, %v2621
  %v2628 = vpack.c.b16 %v2624, %v2622
  %v2635 = vunpack.c.l.s4 1983009808
  %v2636 = vunpack.c.0.s8 %v2635
  %v2637 = vlaneseq
  %v2638 = vshrl.u32 %v2637, 7
  %v2639 = vsub.s32 %v2636, %v2638
  %v2640 = vrot.slane %v2612, %v2639
  %v2641 = vcombine.high %v2640, %v2640
  %2644 = vmatprep.subr.bf16.mxu0 %v2641
  %2645 = vmatpush1.bf16.xpose.msra.mxu0 %v2640
  %2646 = vmatprep.subr.bf16.mxu0 0
  %2647 = vmatpush1.bf16.xpose.msra.mxu0 0
  %2648 = vmatprep.subr.bf16.mxu0 0
  %2649 = vmatpush1.bf16.xpose.msra.mxu0 0
  %2650 = vmatprep.subr.bf16.mxu0 0
  %2651 = vmatpush1.bf16.xpose.msra.mxu0 0
  %2652 = vmatprep.subr.bf16.mxu0 0
  %2653 = vmatpush1.bf16.xpose.msra.mxu0 0
  %2654 = vmatprep.subr.bf16.mxu0 0
  %2655 = vmatpush1.bf16.xpose.msra.mxu0 0
  %2656 = vmatprep.subr.bf16.mxu0 0
  %2657 = vmatpush1.bf16.xpose.msra.mxu0 0
  %2658 = vmatprep.subr.bf16.mxu0 0
  %2659 = vmatpush1.bf16.xpose.msra.mxu0 0
  %2660 = vmatprep.subr.bf16.mxu0 0
  %2661 = vmatpush1.bf16.xpose.msra.mxu0 0
  %2662 = vmatprep.subr.bf16.mxu0 0
  %2663 = vmatpush1.bf16.xpose.msra.mxu0 0
  %2664 = vmatprep.subr.bf16.mxu0 0
  %2665 = vmatpush1.bf16.xpose.msra.mxu0 0
  %2666 = vmatprep.subr.bf16.mxu0 0
  %2667 = vmatpush1.bf16.xpose.msra.mxu0 0
  %2668 = vmatprep.subr.bf16.mxu0 0
  %2669 = vmatpush1.bf16.xpose.msra.mxu0 0
  %2670 = vmatprep.subr.bf16.mxu0 0
  %2671 = vmatpush1.bf16.xpose.msra.mxu0 0
  %2672 = vmatprep.subr.bf16.mxu0 0
  %2673 = vmatpush1.bf16.xpose.msra.mxu0 0
  %2674 = vmatprep.subr.bf16.mxu0 0
  %2675 = vmatpush1.bf16.xpose.msra.mxu0 0
  %2676 = vmatprep.mubr.bf16.mxu0 %v2626
  %2677 = vmatmul.mubr.bf16.gmra.mrb[0].mxu0 %v2625
  %v2678 = vpop.f32.mrb[0].mxu0
  %v2679 = vadd.f32 0.0, %v2678
  %v2680 = vpop.f32.mrb[0].mxu0
  %v2681 = vpop.f32.mrb[0].mxu0
  %v2682 = vadd.f32 0.0, %v2681
  %v2683 = vpop.f32.mrb[0].mxu0
  %2684 = vmatprep.mubr.bf16.mxu0 %v2628
  %2685 = vmatmul.mubr.bf16.gmra.mrb[0].mxu0 %v2627
  %v2686 = vpop.f32.mrb[0].mxu0
  %v2687 = vadd.f32 0.0, %v2686
  %v2688 = vpop.f32.mrb[0].mxu0
  %v2689 = vpop.f32.mrb[0].mxu0
  %v2690 = vadd.f32 0.0, %v2689
  %v2691 = vpop.f32.mrb[0].mxu0
  %2692 = vdwg.mxu0
  %v2693 = vsel %vm97, %v2679, -inf
  %v2694 = vsel %vm97, %v2682, -inf
  %v2695 = vsel %vm97, %v2687, -inf
  %v2696 = vsel %vm97, %v2690, -inf
  %v2697 = vmax.f32 %v2693, %v2694
  %v2698 = vmax.f32 %v2695, %v2696
  %v2699 = vmax.f32 %v2697, %v2698
  %2701 = vrot.lane.b32.xlu0 %v2699, 104
  %v2702 = vpop.permute.xlu0 %2701
  %vm2704 = vcmask 884544
  %2705 = vst.msk [vmem:[%s2] sm:$0xff] %vm2704, %v2702
  %s2706 = scalar_lea.vmem %s0, 864
  %v2707 = vld [vmem:[%s2706] sm:$0xff]
  %v2708 = vld [vmem:[%s2706 + $0x8] sm:$0xff]
  %v2709 = vld [vmem:[%s2706 + $0x10] sm:$0xff]
  %v2710 = vld [vmem:[%s2706 + $0x18] sm:$0xff]
  %s2711 = scalar_lea.vmem %s1, 108
  %v2712 = vld [vmem:[%s2711] sm:$0xf]
  %v2717 = vunpack.c.l.b16 %v2707
  %v2718 = vunpack.c.h.b16 %v2707
  %v2719 = vunpack.c.l.b16 %v2708
  %v2720 = vunpack.c.h.b16 %v2708
  %v2721 = vunpack.c.l.b16 %v2709
  %v2722 = vunpack.c.h.b16 %v2709
  %v2723 = vunpack.c.l.b16 %v2710
  %v2724 = vunpack.c.h.b16 %v2710
  %v2725 = vpack.c.b16 %v2719, %v2717
  %v2726 = vpack.c.b16 %v2720, %v2718
  %v2727 = vpack.c.b16 %v2723, %v2721
  %v2728 = vpack.c.b16 %v2724, %v2722
  %v2735 = vunpack.c.l.s4 1983009808
  %v2736 = vunpack.c.0.s8 %v2735
  %v2737 = vlaneseq
  %v2738 = vshrl.u32 %v2737, 7
  %v2739 = vsub.s32 %v2736, %v2738
  %v2740 = vrot.slane %v2712, %v2739
  %v2741 = vcombine.high %v2740, %v2740
  %2744 = vmatprep.subr.bf16.mxu0 %v2741
  %2745 = vmatpush1.bf16.xpose.msra.mxu0 %v2740
  %2746 = vmatprep.subr.bf16.mxu0 0
  %2747 = vmatpush1.bf16.xpose.msra.mxu0 0
  %2748 = vmatprep.subr.bf16.mxu0 0
  %2749 = vmatpush1.bf16.xpose.msra.mxu0 0
  %2750 = vmatprep.subr.bf16.mxu0 0
  %2751 = vmatpush1.bf16.xpose.msra.mxu0 0
  %2752 = vmatprep.subr.bf16.mxu0 0
  %2753 = vmatpush1.bf16.xpose.msra.mxu0 0
  %2754 = vmatprep.subr.bf16.mxu0 0
  %2755 = vmatpush1.bf16.xpose.msra.mxu0 0
  %2756 = vmatprep.subr.bf16.mxu0 0
  %2757 = vmatpush1.bf16.xpose.msra.mxu0 0
  %2758 = vmatprep.subr.bf16.mxu0 0
  %2759 = vmatpush1.bf16.xpose.msra.mxu0 0
  %2760 = vmatprep.subr.bf16.mxu0 0
  %2761 = vmatpush1.bf16.xpose.msra.mxu0 0
  %2762 = vmatprep.subr.bf16.mxu0 0
  %2763 = vmatpush1.bf16.xpose.msra.mxu0 0
  %2764 = vmatprep.subr.bf16.mxu0 0
  %2765 = vmatpush1.bf16.xpose.msra.mxu0 0
  %2766 = vmatprep.subr.bf16.mxu0 0
  %2767 = vmatpush1.bf16.xpose.msra.mxu0 0
  %2768 = vmatprep.subr.bf16.mxu0 0
  %2769 = vmatpush1.bf16.xpose.msra.mxu0 0
  %2770 = vmatprep.subr.bf16.mxu0 0
  %2771 = vmatpush1.bf16.xpose.msra.mxu0 0
  %2772 = vmatprep.subr.bf16.mxu0 0
  %2773 = vmatpush1.bf16.xpose.msra.mxu0 0
  %2774 = vmatprep.subr.bf16.mxu0 0
  %2775 = vmatpush1.bf16.xpose.msra.mxu0 0
  %2776 = vmatprep.mubr.bf16.mxu0 %v2726
  %2777 = vmatmul.mubr.bf16.gmra.mrb[0].mxu0 %v2725
  %v2778 = vpop.f32.mrb[0].mxu0
  %v2779 = vadd.f32 0.0, %v2778
  %v2780 = vpop.f32.mrb[0].mxu0
  %v2781 = vpop.f32.mrb[0].mxu0
  %v2782 = vadd.f32 0.0, %v2781
  %v2783 = vpop.f32.mrb[0].mxu0
  %2784 = vmatprep.mubr.bf16.mxu0 %v2728
  %2785 = vmatmul.mubr.bf16.gmra.mrb[0].mxu0 %v2727
  %v2786 = vpop.f32.mrb[0].mxu0
  %v2787 = vadd.f32 0.0, %v2786
  %v2788 = vpop.f32.mrb[0].mxu0
  %v2789 = vpop.f32.mrb[0].mxu0
  %v2790 = vadd.f32 0.0, %v2789
  %v2791 = vpop.f32.mrb[0].mxu0
  %2792 = vdwg.mxu0
  %v2793 = vsel %vm97, %v2779, -inf
  %v2794 = vsel %vm97, %v2782, -inf
  %v2795 = vsel %vm97, %v2787, -inf
  %v2796 = vsel %vm97, %v2790, -inf
  %v2797 = vmax.f32 %v2793, %v2794
  %v2798 = vmax.f32 %v2795, %v2796
  %v2799 = vmax.f32 %v2797, %v2798
  %2801 = vrot.lane.b32.xlu0 %v2799, 108
  %v2802 = vpop.permute.xlu0 %2801
  %vm2804 = vcmask 917344
  %2805 = vst.msk [vmem:[%s2] sm:$0xff] %vm2804, %v2802
  %s2806 = scalar_lea.vmem %s0, 896
  %v2807 = vld [vmem:[%s2806] sm:$0xff]
  %v2808 = vld [vmem:[%s2806 + $0x8] sm:$0xff]
  %v2809 = vld [vmem:[%s2806 + $0x10] sm:$0xff]
  %v2810 = vld [vmem:[%s2806 + $0x18] sm:$0xff]
  %s2811 = scalar_lea.vmem %s1, 112
  %v2812 = vld [vmem:[%s2811] sm:$0xf]
  %v2817 = vunpack.c.l.b16 %v2807
  %v2818 = vunpack.c.h.b16 %v2807
  %v2819 = vunpack.c.l.b16 %v2808
  %v2820 = vunpack.c.h.b16 %v2808
  %v2821 = vunpack.c.l.b16 %v2809
  %v2822 = vunpack.c.h.b16 %v2809
  %v2823 = vunpack.c.l.b16 %v2810
  %v2824 = vunpack.c.h.b16 %v2810
  %v2825 = vpack.c.b16 %v2819, %v2817
  %v2826 = vpack.c.b16 %v2820, %v2818
  %v2827 = vpack.c.b16 %v2823, %v2821
  %v2828 = vpack.c.b16 %v2824, %v2822
  %v2835 = vunpack.c.l.s4 1983009808
  %v2836 = vunpack.c.0.s8 %v2835
  %v2837 = vlaneseq
  %v2838 = vshrl.u32 %v2837, 7
  %v2839 = vsub.s32 %v2836, %v2838
  %v2840 = vrot.slane %v2812, %v2839
  %v2841 = vcombine.high %v2840, %v2840
  %2844 = vmatprep.subr.bf16.mxu0 %v2841
  %2845 = vmatpush1.bf16.xpose.msra.mxu0 %v2840
  %2846 = vmatprep.subr.bf16.mxu0 0
  %2847 = vmatpush1.bf16.xpose.msra.mxu0 0
  %2848 = vmatprep.subr.bf16.mxu0 0
  %2849 = vmatpush1.bf16.xpose.msra.mxu0 0
  %2850 = vmatprep.subr.bf16.mxu0 0
  %2851 = vmatpush1.bf16.xpose.msra.mxu0 0
  %2852 = vmatprep.subr.bf16.mxu0 0
  %2853 = vmatpush1.bf16.xpose.msra.mxu0 0
  %2854 = vmatprep.subr.bf16.mxu0 0
  %2855 = vmatpush1.bf16.xpose.msra.mxu0 0
  %2856 = vmatprep.subr.bf16.mxu0 0
  %2857 = vmatpush1.bf16.xpose.msra.mxu0 0
  %2858 = vmatprep.subr.bf16.mxu0 0
  %2859 = vmatpush1.bf16.xpose.msra.mxu0 0
  %2860 = vmatprep.subr.bf16.mxu0 0
  %2861 = vmatpush1.bf16.xpose.msra.mxu0 0
  %2862 = vmatprep.subr.bf16.mxu0 0
  %2863 = vmatpush1.bf16.xpose.msra.mxu0 0
  %2864 = vmatprep.subr.bf16.mxu0 0
  %2865 = vmatpush1.bf16.xpose.msra.mxu0 0
  %2866 = vmatprep.subr.bf16.mxu0 0
  %2867 = vmatpush1.bf16.xpose.msra.mxu0 0
  %2868 = vmatprep.subr.bf16.mxu0 0
  %2869 = vmatpush1.bf16.xpose.msra.mxu0 0
  %2870 = vmatprep.subr.bf16.mxu0 0
  %2871 = vmatpush1.bf16.xpose.msra.mxu0 0
  %2872 = vmatprep.subr.bf16.mxu0 0
  %2873 = vmatpush1.bf16.xpose.msra.mxu0 0
  %2874 = vmatprep.subr.bf16.mxu0 0
  %2875 = vmatpush1.bf16.xpose.msra.mxu0 0
  %2876 = vmatprep.mubr.bf16.mxu0 %v2826
  %2877 = vmatmul.mubr.bf16.gmra.mrb[0].mxu0 %v2825
  %v2878 = vpop.f32.mrb[0].mxu0
  %v2879 = vadd.f32 0.0, %v2878
  %v2880 = vpop.f32.mrb[0].mxu0
  %v2881 = vpop.f32.mrb[0].mxu0
  %v2882 = vadd.f32 0.0, %v2881
  %v2883 = vpop.f32.mrb[0].mxu0
  %2884 = vmatprep.mubr.bf16.mxu0 %v2828
  %2885 = vmatmul.mubr.bf16.gmra.mrb[0].mxu0 %v2827
  %v2886 = vpop.f32.mrb[0].mxu0
  %v2887 = vadd.f32 0.0, %v2886
  %v2888 = vpop.f32.mrb[0].mxu0
  %v2889 = vpop.f32.mrb[0].mxu0
  %v2890 = vadd.f32 0.0, %v2889
  %v2891 = vpop.f32.mrb[0].mxu0
  %2892 = vdwg.mxu0
  %v2893 = vsel %vm97, %v2879, -inf
  %v2894 = vsel %vm97, %v2882, -inf
  %v2895 = vsel %vm97, %v2887, -inf
  %v2896 = vsel %vm97, %v2890, -inf
  %v2897 = vmax.f32 %v2893, %v2894
  %v2898 = vmax.f32 %v2895, %v2896
  %v2899 = vmax.f32 %v2897, %v2898
  %2901 = vrot.lane.b32.xlu0 %v2899, 112
  %v2902 = vpop.permute.xlu0 %2901
  %vm2904 = vcmask 950144
  %2905 = vst.msk [vmem:[%s2] sm:$0xff] %vm2904, %v2902
  %s2906 = scalar_lea.vmem %s0, 928
  %v2907 = vld [vmem:[%s2906] sm:$0xff]
  %v2908 = vld [vmem:[%s2906 + $0x8] sm:$0xff]
  %v2909 = vld [vmem:[%s2906 + $0x10] sm:$0xff]
  %v2910 = vld [vmem:[%s2906 + $0x18] sm:$0xff]
  %s2911 = scalar_lea.vmem %s1, 116
  %v2912 = vld [vmem:[%s2911] sm:$0xf]
  %v2917 = vunpack.c.l.b16 %v2907
  %v2918 = vunpack.c.h.b16 %v2907
  %v2919 = vunpack.c.l.b16 %v2908
  %v2920 = vunpack.c.h.b16 %v2908
  %v2921 = vunpack.c.l.b16 %v2909
  %v2922 = vunpack.c.h.b16 %v2909
  %v2923 = vunpack.c.l.b16 %v2910
  %v2924 = vunpack.c.h.b16 %v2910
  %v2925 = vpack.c.b16 %v2919, %v2917
  %v2926 = vpack.c.b16 %v2920, %v2918
  %v2927 = vpack.c.b16 %v2923, %v2921
  %v2928 = vpack.c.b16 %v2924, %v2922
  %v2935 = vunpack.c.l.s4 1983009808
  %v2936 = vunpack.c.0.s8 %v2935
  %v2937 = vlaneseq
  %v2938 = vshrl.u32 %v2937, 7
  %v2939 = vsub.s32 %v2936, %v2938
  %v2940 = vrot.slane %v2912, %v2939
  %v2941 = vcombine.high %v2940, %v2940
  %2944 = vmatprep.subr.bf16.mxu0 %v2941
  %2945 = vmatpush1.bf16.xpose.msra.mxu0 %v2940
  %2946 = vmatprep.subr.bf16.mxu0 0
  %2947 = vmatpush1.bf16.xpose.msra.mxu0 0
  %2948 = vmatprep.subr.bf16.mxu0 0
  %2949 = vmatpush1.bf16.xpose.msra.mxu0 0
  %2950 = vmatprep.subr.bf16.mxu0 0
  %2951 = vmatpush1.bf16.xpose.msra.mxu0 0
  %2952 = vmatprep.subr.bf16.mxu0 0
  %2953 = vmatpush1.bf16.xpose.msra.mxu0 0
  %2954 = vmatprep.subr.bf16.mxu0 0
  %2955 = vmatpush1.bf16.xpose.msra.mxu0 0
  %2956 = vmatprep.subr.bf16.mxu0 0
  %2957 = vmatpush1.bf16.xpose.msra.mxu0 0
  %2958 = vmatprep.subr.bf16.mxu0 0
  %2959 = vmatpush1.bf16.xpose.msra.mxu0 0
  %2960 = vmatprep.subr.bf16.mxu0 0
  %2961 = vmatpush1.bf16.xpose.msra.mxu0 0
  %2962 = vmatprep.subr.bf16.mxu0 0
  %2963 = vmatpush1.bf16.xpose.msra.mxu0 0
  %2964 = vmatprep.subr.bf16.mxu0 0
  %2965 = vmatpush1.bf16.xpose.msra.mxu0 0
  %2966 = vmatprep.subr.bf16.mxu0 0
  %2967 = vmatpush1.bf16.xpose.msra.mxu0 0
  %2968 = vmatprep.subr.bf16.mxu0 0
  %2969 = vmatpush1.bf16.xpose.msra.mxu0 0
  %2970 = vmatprep.subr.bf16.mxu0 0
  %2971 = vmatpush1.bf16.xpose.msra.mxu0 0
  %2972 = vmatprep.subr.bf16.mxu0 0
  %2973 = vmatpush1.bf16.xpose.msra.mxu0 0
  %2974 = vmatprep.subr.bf16.mxu0 0
  %2975 = vmatpush1.bf16.xpose.msra.mxu0 0
  %2976 = vmatprep.mubr.bf16.mxu0 %v2926
  %2977 = vmatmul.mubr.bf16.gmra.mrb[0].mxu0 %v2925
  %v2978 = vpop.f32.mrb[0].mxu0
  %v2979 = vadd.f32 0.0, %v2978
  %v2980 = vpop.f32.mrb[0].mxu0
  %v2981 = vpop.f32.mrb[0].mxu0
  %v2982 = vadd.f32 0.0, %v2981
  %v2983 = vpop.f32.mrb[0].mxu0
  %2984 = vmatprep.mubr.bf16.mxu0 %v2928
  %2985 = vmatmul.mubr.bf16.gmra.mrb[0].mxu0 %v2927
  %v2986 = vpop.f32.mrb[0].mxu0
  %v2987 = vadd.f32 0.0, %v2986
  %v2988 = vpop.f32.mrb[0].mxu0
  %v2989 = vpop.f32.mrb[0].mxu0
  %v2990 = vadd.f32 0.0, %v2989
  %v2991 = vpop.f32.mrb[0].mxu0
  %2992 = vdwg.mxu0
  %v2993 = vsel %vm97, %v2979, -inf
  %v2994 = vsel %vm97, %v2982, -inf
  %v2995 = vsel %vm97, %v2987, -inf
  %v2996 = vsel %vm97, %v2990, -inf
  %v2997 = vmax.f32 %v2993, %v2994
  %v2998 = vmax.f32 %v2995, %v2996
  %v2999 = vmax.f32 %v2997, %v2998
  %3001 = vrot.lane.b32.xlu0 %v2999, 116
  %v3002 = vpop.permute.xlu0 %3001
  %vm3004 = vcmask 982944
  %3005 = vst.msk [vmem:[%s2] sm:$0xff] %vm3004, %v3002
  %s3006 = scalar_lea.vmem %s0, 960
  %v3007 = vld [vmem:[%s3006] sm:$0xff]
  %v3008 = vld [vmem:[%s3006 + $0x8] sm:$0xff]
  %v3009 = vld [vmem:[%s3006 + $0x10] sm:$0xff]
  %v3010 = vld [vmem:[%s3006 + $0x18] sm:$0xff]
  %s3011 = scalar_lea.vmem %s1, 120
  %v3012 = vld [vmem:[%s3011] sm:$0xf]
  %v3017 = vunpack.c.l.b16 %v3007
  %v3018 = vunpack.c.h.b16 %v3007
  %v3019 = vunpack.c.l.b16 %v3008
  %v3020 = vunpack.c.h.b16 %v3008
  %v3021 = vunpack.c.l.b16 %v3009
  %v3022 = vunpack.c.h.b16 %v3009
  %v3023 = vunpack.c.l.b16 %v3010
  %v3024 = vunpack.c.h.b16 %v3010
  %v3025 = vpack.c.b16 %v3019, %v3017
  %v3026 = vpack.c.b16 %v3020, %v3018
  %v3027 = vpack.c.b16 %v3023, %v3021
  %v3028 = vpack.c.b16 %v3024, %v3022
  %v3035 = vunpack.c.l.s4 1983009808
  %v3036 = vunpack.c.0.s8 %v3035
  %v3037 = vlaneseq
  %v3038 = vshrl.u32 %v3037, 7
  %v3039 = vsub.s32 %v3036, %v3038
  %v3040 = vrot.slane %v3012, %v3039
  %v3041 = vcombine.high %v3040, %v3040
  %3044 = vmatprep.subr.bf16.mxu0 %v3041
  %3045 = vmatpush1.bf16.xpose.msra.mxu0 %v3040
  %3046 = vmatprep.subr.bf16.mxu0 0
  %3047 = vmatpush1.bf16.xpose.msra.mxu0 0
  %3048 = vmatprep.subr.bf16.mxu0 0
  %3049 = vmatpush1.bf16.xpose.msra.mxu0 0
  %3050 = vmatprep.subr.bf16.mxu0 0
  %3051 = vmatpush1.bf16.xpose.msra.mxu0 0
  %3052 = vmatprep.subr.bf16.mxu0 0
  %3053 = vmatpush1.bf16.xpose.msra.mxu0 0
  %3054 = vmatprep.subr.bf16.mxu0 0
  %3055 = vmatpush1.bf16.xpose.msra.mxu0 0
  %3056 = vmatprep.subr.bf16.mxu0 0
  %3057 = vmatpush1.bf16.xpose.msra.mxu0 0
  %3058 = vmatprep.subr.bf16.mxu0 0
  %3059 = vmatpush1.bf16.xpose.msra.mxu0 0
  %3060 = vmatprep.subr.bf16.mxu0 0
  %3061 = vmatpush1.bf16.xpose.msra.mxu0 0
  %3062 = vmatprep.subr.bf16.mxu0 0
  %3063 = vmatpush1.bf16.xpose.msra.mxu0 0
  %3064 = vmatprep.subr.bf16.mxu0 0
  %3065 = vmatpush1.bf16.xpose.msra.mxu0 0
  %3066 = vmatprep.subr.bf16.mxu0 0
  %3067 = vmatpush1.bf16.xpose.msra.mxu0 0
  %3068 = vmatprep.subr.bf16.mxu0 0
  %3069 = vmatpush1.bf16.xpose.msra.mxu0 0
  %3070 = vmatprep.subr.bf16.mxu0 0
  %3071 = vmatpush1.bf16.xpose.msra.mxu0 0
  %3072 = vmatprep.subr.bf16.mxu0 0
  %3073 = vmatpush1.bf16.xpose.msra.mxu0 0
  %3074 = vmatprep.subr.bf16.mxu0 0
  %3075 = vmatpush1.bf16.xpose.msra.mxu0 0
  %3076 = vmatprep.mubr.bf16.mxu0 %v3026
  %3077 = vmatmul.mubr.bf16.gmra.mrb[0].mxu0 %v3025
  %v3078 = vpop.f32.mrb[0].mxu0
  %v3079 = vadd.f32 0.0, %v3078
  %v3080 = vpop.f32.mrb[0].mxu0
  %v3081 = vpop.f32.mrb[0].mxu0
  %v3082 = vadd.f32 0.0, %v3081
  %v3083 = vpop.f32.mrb[0].mxu0
  %3084 = vmatprep.mubr.bf16.mxu0 %v3028
  %3085 = vmatmul.mubr.bf16.gmra.mrb[0].mxu0 %v3027
  %v3086 = vpop.f32.mrb[0].mxu0
  %v3087 = vadd.f32 0.0, %v3086
  %v3088 = vpop.f32.mrb[0].mxu0
  %v3089 = vpop.f32.mrb[0].mxu0
  %v3090 = vadd.f32 0.0, %v3089
  %v3091 = vpop.f32.mrb[0].mxu0
  %3092 = vdwg.mxu0
  %v3093 = vsel %vm97, %v3079, -inf
  %v3094 = vsel %vm97, %v3082, -inf
  %v3095 = vsel %vm97, %v3087, -inf
  %v3096 = vsel %vm97, %v3090, -inf
  %v3097 = vmax.f32 %v3093, %v3094
  %v3098 = vmax.f32 %v3095, %v3096
  %v3099 = vmax.f32 %v3097, %v3098
  %3101 = vrot.lane.b32.xlu0 %v3099, 120
  %v3102 = vpop.permute.xlu0 %3101
  %vm3104 = vcmask 1015744
  %3105 = vst.msk [vmem:[%s2] sm:$0xff] %vm3104, %v3102
  %s3106 = scalar_lea.vmem %s0, 992
  %v3107 = vld [vmem:[%s3106] sm:$0xff]
  %v3108 = vld [vmem:[%s3106 + $0x8] sm:$0xff]
  %v3109 = vld [vmem:[%s3106 + $0x10] sm:$0xff]
  %v3110 = vld [vmem:[%s3106 + $0x18] sm:$0xff]
  %s3111 = scalar_lea.vmem %s1, 124
  %v3112 = vld [vmem:[%s3111] sm:$0xf]
  %v3117 = vunpack.c.l.b16 %v3107
  %v3118 = vunpack.c.h.b16 %v3107
  %v3119 = vunpack.c.l.b16 %v3108
  %v3120 = vunpack.c.h.b16 %v3108
  %v3121 = vunpack.c.l.b16 %v3109
  %v3122 = vunpack.c.h.b16 %v3109
  %v3123 = vunpack.c.l.b16 %v3110
  %v3124 = vunpack.c.h.b16 %v3110
  %v3125 = vpack.c.b16 %v3119, %v3117
  %v3126 = vpack.c.b16 %v3120, %v3118
  %v3127 = vpack.c.b16 %v3123, %v3121
  %v3128 = vpack.c.b16 %v3124, %v3122
  %v3135 = vunpack.c.l.s4 1983009808
  %v3136 = vunpack.c.0.s8 %v3135
  %v3137 = vlaneseq
  %v3138 = vshrl.u32 %v3137, 7
  %v3139 = vsub.s32 %v3136, %v3138
  %v3140 = vrot.slane %v3112, %v3139
  %v3141 = vcombine.high %v3140, %v3140
  %3144 = vmatprep.subr.bf16.mxu0 %v3141
  %3145 = vmatpush1.bf16.xpose.msra.mxu0 %v3140
  %3146 = vmatprep.subr.bf16.mxu0 0
  %3147 = vmatpush1.bf16.xpose.msra.mxu0 0
  %3148 = vmatprep.subr.bf16.mxu0 0
  %3149 = vmatpush1.bf16.xpose.msra.mxu0 0
  %3150 = vmatprep.subr.bf16.mxu0 0
  %3151 = vmatpush1.bf16.xpose.msra.mxu0 0
  %3152 = vmatprep.subr.bf16.mxu0 0
  %3153 = vmatpush1.bf16.xpose.msra.mxu0 0
  %3154 = vmatprep.subr.bf16.mxu0 0
  %3155 = vmatpush1.bf16.xpose.msra.mxu0 0
  %3156 = vmatprep.subr.bf16.mxu0 0
  %3157 = vmatpush1.bf16.xpose.msra.mxu0 0
  %3158 = vmatprep.subr.bf16.mxu0 0
  %3159 = vmatpush1.bf16.xpose.msra.mxu0 0
  %3160 = vmatprep.subr.bf16.mxu0 0
  %3161 = vmatpush1.bf16.xpose.msra.mxu0 0
  %3162 = vmatprep.subr.bf16.mxu0 0
  %3163 = vmatpush1.bf16.xpose.msra.mxu0 0
  %3164 = vmatprep.subr.bf16.mxu0 0
  %3165 = vmatpush1.bf16.xpose.msra.mxu0 0
  %3166 = vmatprep.subr.bf16.mxu0 0
  %3167 = vmatpush1.bf16.xpose.msra.mxu0 0
  %3168 = vmatprep.subr.bf16.mxu0 0
  %3169 = vmatpush1.bf16.xpose.msra.mxu0 0
  %3170 = vmatprep.subr.bf16.mxu0 0
  %3171 = vmatpush1.bf16.xpose.msra.mxu0 0
  %3172 = vmatprep.subr.bf16.mxu0 0
  %3173 = vmatpush1.bf16.xpose.msra.mxu0 0
  %3174 = vmatprep.subr.bf16.mxu0 0
  %3175 = vmatpush1.bf16.xpose.msra.mxu0 0
  %3176 = vmatprep.mubr.bf16.mxu0 %v3126
  %3177 = vmatmul.mubr.bf16.gmra.mrb[0].mxu0 %v3125
  %v3178 = vpop.f32.mrb[0].mxu0
  %v3179 = vadd.f32 0.0, %v3178
  %v3180 = vpop.f32.mrb[0].mxu0
  %v3181 = vpop.f32.mrb[0].mxu0
  %v3182 = vadd.f32 0.0, %v3181
  %v3183 = vpop.f32.mrb[0].mxu0
  %3184 = vmatprep.mubr.bf16.mxu0 %v3128
  %3185 = vmatmul.mubr.bf16.gmra.mrb[0].mxu0 %v3127
  %v3186 = vpop.f32.mrb[0].mxu0
  %v3187 = vadd.f32 0.0, %v3186
  %v3188 = vpop.f32.mrb[0].mxu0
  %v3189 = vpop.f32.mrb[0].mxu0
  %v3190 = vadd.f32 0.0, %v3189
  %v3191 = vpop.f32.mrb[0].mxu0
  %3192 = vdwg.mxu0
  %v3193 = vsel %vm97, %v3179, -inf
  %v3194 = vsel %vm97, %v3182, -inf
  %v3195 = vsel %vm97, %v3187, -inf
  %v3196 = vsel %vm97, %v3190, -inf
  %v3197 = vmax.f32 %v3193, %v3194
  %v3198 = vmax.f32 %v3195, %v3196
  %v3199 = vmax.f32 %v3197, %v3198
  %3201 = vrot.lane.b32.xlu0 %v3199, 124
  %v3202 = vpop.permute.xlu0 %3201
  %vm3204 = vcmask 1048544
  %3205 = vst.msk [vmem:[%s2] sm:$0xff] %vm3204, %v3202
  %s3206 = scalar_lea.vmem %s0, 1024
  %v3207 = vld [vmem:[%s3206] sm:$0xff]
  %v3208 = vld [vmem:[%s3206 + $0x8] sm:$0xff]
  %v3209 = vld [vmem:[%s3206 + $0x10] sm:$0xff]
  %v3210 = vld [vmem:[%s3206 + $0x18] sm:$0xff]
  %s3211 = scalar_lea.vmem %s1, 128
  %v3212 = vld [vmem:[%s3211] sm:$0xf]
  %v3217 = vunpack.c.l.b16 %v3207
  %v3218 = vunpack.c.h.b16 %v3207
  %v3219 = vunpack.c.l.b16 %v3208
  %v3220 = vunpack.c.h.b16 %v3208
  %v3221 = vunpack.c.l.b16 %v3209
  %v3222 = vunpack.c.h.b16 %v3209
  %v3223 = vunpack.c.l.b16 %v3210
  %v3224 = vunpack.c.h.b16 %v3210
  %v3225 = vpack.c.b16 %v3219, %v3217
  %v3226 = vpack.c.b16 %v3220, %v3218
  %v3227 = vpack.c.b16 %v3223, %v3221
  %v3228 = vpack.c.b16 %v3224, %v3222
  %v3235 = vunpack.c.l.s4 1983009808
  %v3236 = vunpack.c.0.s8 %v3235
  %v3237 = vlaneseq
  %v3238 = vshrl.u32 %v3237, 7
  %v3239 = vsub.s32 %v3236, %v3238
  %v3240 = vrot.slane %v3212, %v3239
  %v3241 = vcombine.high %v3240, %v3240
  %3244 = vmatprep.subr.bf16.mxu0 %v3241
  %3245 = vmatpush1.bf16.xpose.msra.mxu0 %v3240
  %3246 = vmatprep.subr.bf16.mxu0 0
  %3247 = vmatpush1.bf16.xpose.msra.mxu0 0
  %3248 = vmatprep.subr.bf16.mxu0 0
  %3249 = vmatpush1.bf16.xpose.msra.mxu0 0
  %3250 = vmatprep.subr.bf16.mxu0 0
  %3251 = vmatpush1.bf16.xpose.msra.mxu0 0
  %3252 = vmatprep.subr.bf16.mxu0 0
  %3253 = vmatpush1.bf16.xpose.msra.mxu0 0
  %3254 = vmatprep.subr.bf16.mxu0 0
  %3255 = vmatpush1.bf16.xpose.msra.mxu0 0
  %3256 = vmatprep.subr.bf16.mxu0 0
  %3257 = vmatpush1.bf16.xpose.msra.mxu0 0
  %3258 = vmatprep.subr.bf16.mxu0 0
  %3259 = vmatpush1.bf16.xpose.msra.mxu0 0
  %3260 = vmatprep.subr.bf16.mxu0 0
  %3261 = vmatpush1.bf16.xpose.msra.mxu0 0
  %3262 = vmatprep.subr.bf16.mxu0 0
  %3263 = vmatpush1.bf16.xpose.msra.mxu0 0
  %3264 = vmatprep.subr.bf16.mxu0 0
  %3265 = vmatpush1.bf16.xpose.msra.mxu0 0
  %3266 = vmatprep.subr.bf16.mxu0 0
  %3267 = vmatpush1.bf16.xpose.msra.mxu0 0
  %3268 = vmatprep.subr.bf16.mxu0 0
  %3269 = vmatpush1.bf16.xpose.msra.mxu0 0
  %3270 = vmatprep.subr.bf16.mxu0 0
  %3271 = vmatpush1.bf16.xpose.msra.mxu0 0
  %3272 = vmatprep.subr.bf16.mxu0 0
  %3273 = vmatpush1.bf16.xpose.msra.mxu0 0
  %3274 = vmatprep.subr.bf16.mxu0 0
  %3275 = vmatpush1.bf16.xpose.msra.mxu0 0
  %3276 = vmatprep.mubr.bf16.mxu0 %v3226
  %3277 = vmatmul.mubr.bf16.gmra.mrb[0].mxu0 %v3225
  %v3278 = vpop.f32.mrb[0].mxu0
  %v3279 = vadd.f32 0.0, %v3278
  %v3280 = vpop.f32.mrb[0].mxu0
  %v3281 = vpop.f32.mrb[0].mxu0
  %v3282 = vadd.f32 0.0, %v3281
  %v3283 = vpop.f32.mrb[0].mxu0
  %3284 = vmatprep.mubr.bf16.mxu0 %v3228
  %3285 = vmatmul.mubr.bf16.gmra.mrb[0].mxu0 %v3227
  %v3286 = vpop.f32.mrb[0].mxu0
  %v3287 = vadd.f32 0.0, %v3286
  %v3288 = vpop.f32.mrb[0].mxu0
  %v3289 = vpop.f32.mrb[0].mxu0
  %v3290 = vadd.f32 0.0, %v3289
  %v3291 = vpop.f32.mrb[0].mxu0
  %3292 = vdwg.mxu0
  %v3293 = vsel %vm97, %v3279, -inf
  %v3294 = vsel %vm97, %v3282, -inf
  %v3295 = vsel %vm97, %v3287, -inf
  %v3296 = vsel %vm97, %v3290, -inf
  %v3297 = vmax.f32 %v3293, %v3294
  %v3298 = vmax.f32 %v3295, %v3296
  %v3299 = vmax.f32 %v3297, %v3298
  %3300 = vst.msk [vmem:[%s2 + $0x8] sm:$0xff] %vm97, %v3299
  %s3301 = scalar_lea.vmem %s0, 1056
  %v3302 = vld [vmem:[%s3301] sm:$0xff]
  %v3303 = vld [vmem:[%s3301 + $0x8] sm:$0xff]
  %v3304 = vld [vmem:[%s3301 + $0x10] sm:$0xff]
  %v3305 = vld [vmem:[%s3301 + $0x18] sm:$0xff]
  %s3306 = scalar_lea.vmem %s1, 132
  %v3307 = vld [vmem:[%s3306] sm:$0xf]
  %v3312 = vunpack.c.l.b16 %v3302
  %v3313 = vunpack.c.h.b16 %v3302
  %v3314 = vunpack.c.l.b16 %v3303
  %v3315 = vunpack.c.h.b16 %v3303
  %v3316 = vunpack.c.l.b16 %v3304
  %v3317 = vunpack.c.h.b16 %v3304
  %v3318 = vunpack.c.l.b16 %v3305
  %v3319 = vunpack.c.h.b16 %v3305
  %v3320 = vpack.c.b16 %v3314, %v3312
  %v3321 = vpack.c.b16 %v3315, %v3313
  %v3322 = vpack.c.b16 %v3318, %v3316
  %v3323 = vpack.c.b16 %v3319, %v3317
  %v3330 = vunpack.c.l.s4 1983009808
  %v3331 = vunpack.c.0.s8 %v3330
  %v3332 = vlaneseq
  %v3333 = vshrl.u32 %v3332, 7
  %v3334 = vsub.s32 %v3331, %v3333
  %v3335 = vrot.slane %v3307, %v3334
  %v3336 = vcombine.high %v3335, %v3335
  %3339 = vmatprep.subr.bf16.mxu0 %v3336
  %3340 = vmatpush1.bf16.xpose.msra.mxu0 %v3335
  %3341 = vmatprep.subr.bf16.mxu0 0
  %3342 = vmatpush1.bf16.xpose.msra.mxu0 0
  %3343 = vmatprep.subr.bf16.mxu0 0
  %3344 = vmatpush1.bf16.xpose.msra.mxu0 0
  %3345 = vmatprep.subr.bf16.mxu0 0
  %3346 = vmatpush1.bf16.xpose.msra.mxu0 0
  %3347 = vmatprep.subr.bf16.mxu0 0
  %3348 = vmatpush1.bf16.xpose.msra.mxu0 0
  %3349 = vmatprep.subr.bf16.mxu0 0
  %3350 = vmatpush1.bf16.xpose.msra.mxu0 0
  %3351 = vmatprep.subr.bf16.mxu0 0
  %3352 = vmatpush1.bf16.xpose.msra.mxu0 0
  %3353 = vmatprep.subr.bf16.mxu0 0
  %3354 = vmatpush1.bf16.xpose.msra.mxu0 0
  %3355 = vmatprep.subr.bf16.mxu0 0
  %3356 = vmatpush1.bf16.xpose.msra.mxu0 0
  %3357 = vmatprep.subr.bf16.mxu0 0
  %3358 = vmatpush1.bf16.xpose.msra.mxu0 0
  %3359 = vmatprep.subr.bf16.mxu0 0
  %3360 = vmatpush1.bf16.xpose.msra.mxu0 0
  %3361 = vmatprep.subr.bf16.mxu0 0
  %3362 = vmatpush1.bf16.xpose.msra.mxu0 0
  %3363 = vmatprep.subr.bf16.mxu0 0
  %3364 = vmatpush1.bf16.xpose.msra.mxu0 0
  %3365 = vmatprep.subr.bf16.mxu0 0
  %3366 = vmatpush1.bf16.xpose.msra.mxu0 0
  %3367 = vmatprep.subr.bf16.mxu0 0
  %3368 = vmatpush1.bf16.xpose.msra.mxu0 0
  %3369 = vmatprep.subr.bf16.mxu0 0
  %3370 = vmatpush1.bf16.xpose.msra.mxu0 0
  %3371 = vmatprep.mubr.bf16.mxu0 %v3321
  %3372 = vmatmul.mubr.bf16.gmra.mrb[0].mxu0 %v3320
  %v3373 = vpop.f32.mrb[0].mxu0
  %v3374 = vadd.f32 0.0, %v3373
  %v3375 = vpop.f32.mrb[0].mxu0
  %v3376 = vpop.f32.mrb[0].mxu0
  %v3377 = vadd.f32 0.0, %v3376
  %v3378 = vpop.f32.mrb[0].mxu0
  %3379 = vmatprep.mubr.bf16.mxu0 %v3323
  %3380 = vmatmul.mubr.bf16.gmra.mrb[0].mxu0 %v3322
  %v3381 = vpop.f32.mrb[0].mxu0
  %v3382 = vadd.f32 0.0, %v3381
  %v3383 = vpop.f32.mrb[0].mxu0
  %v3384 = vpop.f32.mrb[0].mxu0
  %v3385 = vadd.f32 0.0, %v3384
  %v3386 = vpop.f32.mrb[0].mxu0
  %3387 = vdwg.mxu0
  %v3388 = vsel %vm97, %v3374, -inf
  %v3389 = vsel %vm97, %v3377, -inf
  %v3390 = vsel %vm97, %v3382, -inf
  %v3391 = vsel %vm97, %v3385, -inf
  %v3392 = vmax.f32 %v3388, %v3389
  %v3393 = vmax.f32 %v3390, %v3391
  %v3394 = vmax.f32 %v3392, %v3393
  %3396 = vrot.lane.b32.xlu0 %v3394, 4
  %v3397 = vpop.permute.xlu0 %3396
  %3399 = vst.msk [vmem:[%s2 + $0x8] sm:$0xff] %vm204, %v3397
  %s3400 = scalar_lea.vmem %s0, 1088
  %v3401 = vld [vmem:[%s3400] sm:$0xff]
  %v3402 = vld [vmem:[%s3400 + $0x8] sm:$0xff]
  %v3403 = vld [vmem:[%s3400 + $0x10] sm:$0xff]
  %v3404 = vld [vmem:[%s3400 + $0x18] sm:$0xff]
  %s3405 = scalar_lea.vmem %s1, 136
  %v3406 = vld [vmem:[%s3405] sm:$0xf]
  %v3411 = vunpack.c.l.b16 %v3401
  %v3412 = vunpack.c.h.b16 %v3401
  %v3413 = vunpack.c.l.b16 %v3402
  %v3414 = vunpack.c.h.b16 %v3402
  %v3415 = vunpack.c.l.b16 %v3403
  %v3416 = vunpack.c.h.b16 %v3403
  %v3417 = vunpack.c.l.b16 %v3404
  %v3418 = vunpack.c.h.b16 %v3404
  %v3419 = vpack.c.b16 %v3413, %v3411
  %v3420 = vpack.c.b16 %v3414, %v3412
  %v3421 = vpack.c.b16 %v3417, %v3415
  %v3422 = vpack.c.b16 %v3418, %v3416
  %v3429 = vunpack.c.l.s4 1983009808
  %v3430 = vunpack.c.0.s8 %v3429
  %v3431 = vlaneseq
  %v3432 = vshrl.u32 %v3431, 7
  %v3433 = vsub.s32 %v3430, %v3432
  %v3434 = vrot.slane %v3406, %v3433
  %v3435 = vcombine.high %v3434, %v3434
  %3438 = vmatprep.subr.bf16.mxu0 %v3435
  %3439 = vmatpush1.bf16.xpose.msra.mxu0 %v3434
  %3440 = vmatprep.subr.bf16.mxu0 0
  %3441 = vmatpush1.bf16.xpose.msra.mxu0 0
  %3442 = vmatprep.subr.bf16.mxu0 0
  %3443 = vmatpush1.bf16.xpose.msra.mxu0 0
  %3444 = vmatprep.subr.bf16.mxu0 0
  %3445 = vmatpush1.bf16.xpose.msra.mxu0 0
  %3446 = vmatprep.subr.bf16.mxu0 0
  %3447 = vmatpush1.bf16.xpose.msra.mxu0 0
  %3448 = vmatprep.subr.bf16.mxu0 0
  %3449 = vmatpush1.bf16.xpose.msra.mxu0 0
  %3450 = vmatprep.subr.bf16.mxu0 0
  %3451 = vmatpush1.bf16.xpose.msra.mxu0 0
  %3452 = vmatprep.subr.bf16.mxu0 0
  %3453 = vmatpush1.bf16.xpose.msra.mxu0 0
  %3454 = vmatprep.subr.bf16.mxu0 0
  %3455 = vmatpush1.bf16.xpose.msra.mxu0 0
  %3456 = vmatprep.subr.bf16.mxu0 0
  %3457 = vmatpush1.bf16.xpose.msra.mxu0 0
  %3458 = vmatprep.subr.bf16.mxu0 0
  %3459 = vmatpush1.bf16.xpose.msra.mxu0 0
  %3460 = vmatprep.subr.bf16.mxu0 0
  %3461 = vmatpush1.bf16.xpose.msra.mxu0 0
  %3462 = vmatprep.subr.bf16.mxu0 0
  %3463 = vmatpush1.bf16.xpose.msra.mxu0 0
  %3464 = vmatprep.subr.bf16.mxu0 0
  %3465 = vmatpush1.bf16.xpose.msra.mxu0 0
  %3466 = vmatprep.subr.bf16.mxu0 0
  %3467 = vmatpush1.bf16.xpose.msra.mxu0 0
  %3468 = vmatprep.subr.bf16.mxu0 0
  %3469 = vmatpush1.bf16.xpose.msra.mxu0 0
  %3470 = vmatprep.mubr.bf16.mxu0 %v3420
  %3471 = vmatmul.mubr.bf16.gmra.mrb[0].mxu0 %v3419
  %v3472 = vpop.f32.mrb[0].mxu0
  %v3473 = vadd.f32 0.0, %v3472
  %v3474 = vpop.f32.mrb[0].mxu0
  %v3475 = vpop.f32.mrb[0].mxu0
  %v3476 = vadd.f32 0.0, %v3475
  %v3477 = vpop.f32.mrb[0].mxu0
  %3478 = vmatprep.mubr.bf16.mxu0 %v3422
  %3479 = vmatmul.mubr.bf16.gmra.mrb[0].mxu0 %v3421
  %v3480 = vpop.f32.mrb[0].mxu0
  %v3481 = vadd.f32 0.0, %v3480
  %v3482 = vpop.f32.mrb[0].mxu0
  %v3483 = vpop.f32.mrb[0].mxu0
  %v3484 = vadd.f32 0.0, %v3483
  %v3485 = vpop.f32.mrb[0].mxu0
  %3486 = vdwg.mxu0
  %v3487 = vsel %vm97, %v3473, -inf
  %v3488 = vsel %vm97, %v3476, -inf
  %v3489 = vsel %vm97, %v3481, -inf
  %v3490 = vsel %vm97, %v3484, -inf
  %v3491 = vmax.f32 %v3487, %v3488
  %v3492 = vmax.f32 %v3489, %v3490
  %v3493 = vmax.f32 %v3491, %v3492
  %3495 = vrot.lane.b32.xlu0 %v3493, 8
  %v3496 = vpop.permute.xlu0 %3495
  %3498 = vst.msk [vmem:[%s2 + $0x8] sm:$0xff] %vm304, %v3496
  %s3499 = scalar_lea.vmem %s0, 1120
  %v3500 = vld [vmem:[%s3499] sm:$0xff]
  %v3501 = vld [vmem:[%s3499 + $0x8] sm:$0xff]
  %v3502 = vld [vmem:[%s3499 + $0x10] sm:$0xff]
  %v3503 = vld [vmem:[%s3499 + $0x18] sm:$0xff]
  %s3504 = scalar_lea.vmem %s1, 140
  %v3505 = vld [vmem:[%s3504] sm:$0xf]
  %v3510 = vunpack.c.l.b16 %v3500
  %v3511 = vunpack.c.h.b16 %v3500
  %v3512 = vunpack.c.l.b16 %v3501
  %v3513 = vunpack.c.h.b16 %v3501
  %v3514 = vunpack.c.l.b16 %v3502
  %v3515 = vunpack.c.h.b16 %v3502
  %v3516 = vunpack.c.l.b16 %v3503
  %v3517 = vunpack.c.h.b16 %v3503
  %v3518 = vpack.c.b16 %v3512, %v3510
  %v3519 = vpack.c.b16 %v3513, %v3511
  %v3520 = vpack.c.b16 %v3516, %v3514
  %v3521 = vpack.c.b16 %v3517, %v3515
  %v3528 = vunpack.c.l.s4 1983009808
  %v3529 = vunpack.c.0.s8 %v3528
  %v3530 = vlaneseq
  %v3531 = vshrl.u32 %v3530, 7
  %v3532 = vsub.s32 %v3529, %v3531
  %v3533 = vrot.slane %v3505, %v3532
  %v3534 = vcombine.high %v3533, %v3533
  %3537 = vmatprep.subr.bf16.mxu0 %v3534
  %3538 = vmatpush1.bf16.xpose.msra.mxu0 %v3533
  %3539 = vmatprep.subr.bf16.mxu0 0
  %3540 = vmatpush1.bf16.xpose.msra.mxu0 0
  %3541 = vmatprep.subr.bf16.mxu0 0
  %3542 = vmatpush1.bf16.xpose.msra.mxu0 0
  %3543 = vmatprep.subr.bf16.mxu0 0
  %3544 = vmatpush1.bf16.xpose.msra.mxu0 0
  %3545 = vmatprep.subr.bf16.mxu0 0
  %3546 = vmatpush1.bf16.xpose.msra.mxu0 0
  %3547 = vmatprep.subr.bf16.mxu0 0
  %3548 = vmatpush1.bf16.xpose.msra.mxu0 0
  %3549 = vmatprep.subr.bf16.mxu0 0
  %3550 = vmatpush1.bf16.xpose.msra.mxu0 0
  %3551 = vmatprep.subr.bf16.mxu0 0
  %3552 = vmatpush1.bf16.xpose.msra.mxu0 0
  %3553 = vmatprep.subr.bf16.mxu0 0
  %3554 = vmatpush1.bf16.xpose.msra.mxu0 0
  %3555 = vmatprep.subr.bf16.mxu0 0
  %3556 = vmatpush1.bf16.xpose.msra.mxu0 0
  %3557 = vmatprep.subr.bf16.mxu0 0
  %3558 = vmatpush1.bf16.xpose.msra.mxu0 0
  %3559 = vmatprep.subr.bf16.mxu0 0
  %3560 = vmatpush1.bf16.xpose.msra.mxu0 0
  %3561 = vmatprep.subr.bf16.mxu0 0
  %3562 = vmatpush1.bf16.xpose.msra.mxu0 0
  %3563 = vmatprep.subr.bf16.mxu0 0
  %3564 = vmatpush1.bf16.xpose.msra.mxu0 0
  %3565 = vmatprep.subr.bf16.mxu0 0
  %3566 = vmatpush1.bf16.xpose.msra.mxu0 0
  %3567 = vmatprep.subr.bf16.mxu0 0
  %3568 = vmatpush1.bf16.xpose.msra.mxu0 0
  %3569 = vmatprep.mubr.bf16.mxu0 %v3519
  %3570 = vmatmul.mubr.bf16.gmra.mrb[0].mxu0 %v3518
  %v3571 = vpop.f32.mrb[0].mxu0
  %v3572 = vadd.f32 0.0, %v3571
  %v3573 = vpop.f32.mrb[0].mxu0
  %v3574 = vpop.f32.mrb[0].mxu0
  %v3575 = vadd.f32 0.0, %v3574
  %v3576 = vpop.f32.mrb[0].mxu0
  %3577 = vmatprep.mubr.bf16.mxu0 %v3521
  %3578 = vmatmul.mubr.bf16.gmra.mrb[0].mxu0 %v3520
  %v3579 = vpop.f32.mrb[0].mxu0
  %v3580 = vadd.f32 0.0, %v3579
  %v3581 = vpop.f32.mrb[0].mxu0
  %v3582 = vpop.f32.mrb[0].mxu0
  %v3583 = vadd.f32 0.0, %v3582
  %v3584 = vpop.f32.mrb[0].mxu0
  %3585 = vdwg.mxu0
  %v3586 = vsel %vm97, %v3572, -inf
  %v3587 = vsel %vm97, %v3575, -inf
  %v3588 = vsel %vm97, %v3580, -inf
  %v3589 = vsel %vm97, %v3583, -inf
  %v3590 = vmax.f32 %v3586, %v3587
  %v3591 = vmax.f32 %v3588, %v3589
  %v3592 = vmax.f32 %v3590, %v3591
  %3594 = vrot.lane.b32.xlu0 %v3592, 12
  %v3595 = vpop.permute.xlu0 %3594
  %3597 = vst.msk [vmem:[%s2 + $0x8] sm:$0xff] %vm404, %v3595
  %s3598 = scalar_lea.vmem %s0, 1152
  %v3599 = vld [vmem:[%s3598] sm:$0xff]
  %v3600 = vld [vmem:[%s3598 + $0x8] sm:$0xff]
  %v3601 = vld [vmem:[%s3598 + $0x10] sm:$0xff]
  %v3602 = vld [vmem:[%s3598 + $0x18] sm:$0xff]
  %s3603 = scalar_lea.vmem %s1, 144
  %v3604 = vld [vmem:[%s3603] sm:$0xf]
  %v3609 = vunpack.c.l.b16 %v3599
  %v3610 = vunpack.c.h.b16 %v3599
  %v3611 = vunpack.c.l.b16 %v3600
  %v3612 = vunpack.c.h.b16 %v3600
  %v3613 = vunpack.c.l.b16 %v3601
  %v3614 = vunpack.c.h.b16 %v3601
  %v3615 = vunpack.c.l.b16 %v3602
  %v3616 = vunpack.c.h.b16 %v3602
  %v3617 = vpack.c.b16 %v3611, %v3609
  %v3618 = vpack.c.b16 %v3612, %v3610
  %v3619 = vpack.c.b16 %v3615, %v3613
  %v3620 = vpack.c.b16 %v3616, %v3614
  %v3627 = vunpack.c.l.s4 1983009808
  %v3628 = vunpack.c.0.s8 %v3627
  %v3629 = vlaneseq
  %v3630 = vshrl.u32 %v3629, 7
  %v3631 = vsub.s32 %v3628, %v3630
  %v3632 = vrot.slane %v3604, %v3631
  %v3633 = vcombine.high %v3632, %v3632
  %3636 = vmatprep.subr.bf16.mxu0 %v3633
  %3637 = vmatpush1.bf16.xpose.msra.mxu0 %v3632
  %3638 = vmatprep.subr.bf16.mxu0 0
  %3639 = vmatpush1.bf16.xpose.msra.mxu0 0
  %3640 = vmatprep.subr.bf16.mxu0 0
  %3641 = vmatpush1.bf16.xpose.msra.mxu0 0
  %3642 = vmatprep.subr.bf16.mxu0 0
  %3643 = vmatpush1.bf16.xpose.msra.mxu0 0
  %3644 = vmatprep.subr.bf16.mxu0 0
  %3645 = vmatpush1.bf16.xpose.msra.mxu0 0
  %3646 = vmatprep.subr.bf16.mxu0 0
  %3647 = vmatpush1.bf16.xpose.msra.mxu0 0
  %3648 = vmatprep.subr.bf16.mxu0 0
  %3649 = vmatpush1.bf16.xpose.msra.mxu0 0
  %3650 = vmatprep.subr.bf16.mxu0 0
  %3651 = vmatpush1.bf16.xpose.msra.mxu0 0
  %3652 = vmatprep.subr.bf16.mxu0 0
  %3653 = vmatpush1.bf16.xpose.msra.mxu0 0
  %3654 = vmatprep.subr.bf16.mxu0 0
  %3655 = vmatpush1.bf16.xpose.msra.mxu0 0
  %3656 = vmatprep.subr.bf16.mxu0 0
  %3657 = vmatpush1.bf16.xpose.msra.mxu0 0
  %3658 = vmatprep.subr.bf16.mxu0 0
  %3659 = vmatpush1.bf16.xpose.msra.mxu0 0
  %3660 = vmatprep.subr.bf16.mxu0 0
  %3661 = vmatpush1.bf16.xpose.msra.mxu0 0
  %3662 = vmatprep.subr.bf16.mxu0 0
  %3663 = vmatpush1.bf16.xpose.msra.mxu0 0
  %3664 = vmatprep.subr.bf16.mxu0 0
  %3665 = vmatpush1.bf16.xpose.msra.mxu0 0
  %3666 = vmatprep.subr.bf16.mxu0 0
  %3667 = vmatpush1.bf16.xpose.msra.mxu0 0
  %3668 = vmatprep.mubr.bf16.mxu0 %v3618
  %3669 = vmatmul.mubr.bf16.gmra.mrb[0].mxu0 %v3617
  %v3670 = vpop.f32.mrb[0].mxu0
  %v3671 = vadd.f32 0.0, %v3670
  %v3672 = vpop.f32.mrb[0].mxu0
  %v3673 = vpop.f32.mrb[0].mxu0
  %v3674 = vadd.f32 0.0, %v3673
  %v3675 = vpop.f32.mrb[0].mxu0
  %3676 = vmatprep.mubr.bf16.mxu0 %v3620
  %3677 = vmatmul.mubr.bf16.gmra.mrb[0].mxu0 %v3619
  %v3678 = vpop.f32.mrb[0].mxu0
  %v3679 = vadd.f32 0.0, %v3678
  %v3680 = vpop.f32.mrb[0].mxu0
  %v3681 = vpop.f32.mrb[0].mxu0
  %v3682 = vadd.f32 0.0, %v3681
  %v3683 = vpop.f32.mrb[0].mxu0
  %3684 = vdwg.mxu0
  %v3685 = vsel %vm97, %v3671, -inf
  %v3686 = vsel %vm97, %v3674, -inf
  %v3687 = vsel %vm97, %v3679, -inf
  %v3688 = vsel %vm97, %v3682, -inf
  %v3689 = vmax.f32 %v3685, %v3686
  %v3690 = vmax.f32 %v3687, %v3688
  %v3691 = vmax.f32 %v3689, %v3690
  %3693 = vrot.lane.b32.xlu0 %v3691, 16
  %v3694 = vpop.permute.xlu0 %3693
  %3696 = vst.msk [vmem:[%s2 + $0x8] sm:$0xff] %vm504, %v3694
  %s3697 = scalar_lea.vmem %s0, 1184
  %v3698 = vld [vmem:[%s3697] sm:$0xff]
  %v3699 = vld [vmem:[%s3697 + $0x8] sm:$0xff]
  %v3700 = vld [vmem:[%s3697 + $0x10] sm:$0xff]
  %v3701 = vld [vmem:[%s3697 + $0x18] sm:$0xff]
  %s3702 = scalar_lea.vmem %s1, 148
  %v3703 = vld [vmem:[%s3702] sm:$0xf]
  %v3708 = vunpack.c.l.b16 %v3698
  %v3709 = vunpack.c.h.b16 %v3698
  %v3710 = vunpack.c.l.b16 %v3699
  %v3711 = vunpack.c.h.b16 %v3699
  %v3712 = vunpack.c.l.b16 %v3700
  %v3713 = vunpack.c.h.b16 %v3700
  %v3714 = vunpack.c.l.b16 %v3701
  %v3715 = vunpack.c.h.b16 %v3701
  %v3716 = vpack.c.b16 %v3710, %v3708
  %v3717 = vpack.c.b16 %v3711, %v3709
  %v3718 = vpack.c.b16 %v3714, %v3712
  %v3719 = vpack.c.b16 %v3715, %v3713
  %v3726 = vunpack.c.l.s4 1983009808
  %v3727 = vunpack.c.0.s8 %v3726
  %v3728 = vlaneseq
  %v3729 = vshrl.u32 %v3728, 7
  %v3730 = vsub.s32 %v3727, %v3729
  %v3731 = vrot.slane %v3703, %v3730
  %v3732 = vcombine.high %v3731, %v3731
  %3735 = vmatprep.subr.bf16.mxu0 %v3732
  %3736 = vmatpush1.bf16.xpose.msra.mxu0 %v3731
  %3737 = vmatprep.subr.bf16.mxu0 0
  %3738 = vmatpush1.bf16.xpose.msra.mxu0 0
  %3739 = vmatprep.subr.bf16.mxu0 0
  %3740 = vmatpush1.bf16.xpose.msra.mxu0 0
  %3741 = vmatprep.subr.bf16.mxu0 0
  %3742 = vmatpush1.bf16.xpose.msra.mxu0 0
  %3743 = vmatprep.subr.bf16.mxu0 0
  %3744 = vmatpush1.bf16.xpose.msra.mxu0 0
  %3745 = vmatprep.subr.bf16.mxu0 0
  %3746 = vmatpush1.bf16.xpose.msra.mxu0 0
  %3747 = vmatprep.subr.bf16.mxu0 0
  %3748 = vmatpush1.bf16.xpose.msra.mxu0 0
  %3749 = vmatprep.subr.bf16.mxu0 0
  %3750 = vmatpush1.bf16.xpose.msra.mxu0 0
  %3751 = vmatprep.subr.bf16.mxu0 0
  %3752 = vmatpush1.bf16.xpose.msra.mxu0 0
  %3753 = vmatprep.subr.bf16.mxu0 0
  %3754 = vmatpush1.bf16.xpose.msra.mxu0 0
  %3755 = vmatprep.subr.bf16.mxu0 0
  %3756 = vmatpush1.bf16.xpose.msra.mxu0 0
  %3757 = vmatprep.subr.bf16.mxu0 0
  %3758 = vmatpush1.bf16.xpose.msra.mxu0 0
  %3759 = vmatprep.subr.bf16.mxu0 0
  %3760 = vmatpush1.bf16.xpose.msra.mxu0 0
  %3761 = vmatprep.subr.bf16.mxu0 0
  %3762 = vmatpush1.bf16.xpose.msra.mxu0 0
  %3763 = vmatprep.subr.bf16.mxu0 0
  %3764 = vmatpush1.bf16.xpose.msra.mxu0 0
  %3765 = vmatprep.subr.bf16.mxu0 0
  %3766 = vmatpush1.bf16.xpose.msra.mxu0 0
  %3767 = vmatprep.mubr.bf16.mxu0 %v3717
  %3768 = vmatmul.mubr.bf16.gmra.mrb[0].mxu0 %v3716
  %v3769 = vpop.f32.mrb[0].mxu0
  %v3770 = vadd.f32 0.0, %v3769
  %v3771 = vpop.f32.mrb[0].mxu0
  %v3772 = vpop.f32.mrb[0].mxu0
  %v3773 = vadd.f32 0.0, %v3772
  %v3774 = vpop.f32.mrb[0].mxu0
  %3775 = vmatprep.mubr.bf16.mxu0 %v3719
  %3776 = vmatmul.mubr.bf16.gmra.mrb[0].mxu0 %v3718
  %v3777 = vpop.f32.mrb[0].mxu0
  %v3778 = vadd.f32 0.0, %v3777
  %v3779 = vpop.f32.mrb[0].mxu0
  %v3780 = vpop.f32.mrb[0].mxu0
  %v3781 = vadd.f32 0.0, %v3780
  %v3782 = vpop.f32.mrb[0].mxu0
  %3783 = vdwg.mxu0
  %v3784 = vsel %vm97, %v3770, -inf
  %v3785 = vsel %vm97, %v3773, -inf
  %v3786 = vsel %vm97, %v3778, -inf
  %v3787 = vsel %vm97, %v3781, -inf
  %v3788 = vmax.f32 %v3784, %v3785
  %v3789 = vmax.f32 %v3786, %v3787
  %v3790 = vmax.f32 %v3788, %v3789
  %3792 = vrot.lane.b32.xlu0 %v3790, 20
  %v3793 = vpop.permute.xlu0 %3792
  %3795 = vst.msk [vmem:[%s2 + $0x8] sm:$0xff] %vm604, %v3793
  %s3796 = scalar_lea.vmem %s0, 1216
  %v3797 = vld [vmem:[%s3796] sm:$0xff]
  %v3798 = vld [vmem:[%s3796 + $0x8] sm:$0xff]
  %v3799 = vld [vmem:[%s3796 + $0x10] sm:$0xff]
  %v3800 = vld [vmem:[%s3796 + $0x18] sm:$0xff]
  %s3801 = scalar_lea.vmem %s1, 152
  %v3802 = vld [vmem:[%s3801] sm:$0xf]
  %v3807 = vunpack.c.l.b16 %v3797
  %v3808 = vunpack.c.h.b16 %v3797
  %v3809 = vunpack.c.l.b16 %v3798
  %v3810 = vunpack.c.h.b16 %v3798
  %v3811 = vunpack.c.l.b16 %v3799
  %v3812 = vunpack.c.h.b16 %v3799
  %v3813 = vunpack.c.l.b16 %v3800
  %v3814 = vunpack.c.h.b16 %v3800
  %v3815 = vpack.c.b16 %v3809, %v3807
  %v3816 = vpack.c.b16 %v3810, %v3808
  %v3817 = vpack.c.b16 %v3813, %v3811
  %v3818 = vpack.c.b16 %v3814, %v3812
  %v3825 = vunpack.c.l.s4 1983009808
  %v3826 = vunpack.c.0.s8 %v3825
  %v3827 = vlaneseq
  %v3828 = vshrl.u32 %v3827, 7
  %v3829 = vsub.s32 %v3826, %v3828
  %v3830 = vrot.slane %v3802, %v3829
  %v3831 = vcombine.high %v3830, %v3830
  %3834 = vmatprep.subr.bf16.mxu0 %v3831
  %3835 = vmatpush1.bf16.xpose.msra.mxu0 %v3830
  %3836 = vmatprep.subr.bf16.mxu0 0
  %3837 = vmatpush1.bf16.xpose.msra.mxu0 0
  %3838 = vmatprep.subr.bf16.mxu0 0
  %3839 = vmatpush1.bf16.xpose.msra.mxu0 0
  %3840 = vmatprep.subr.bf16.mxu0 0
  %3841 = vmatpush1.bf16.xpose.msra.mxu0 0
  %3842 = vmatprep.subr.bf16.mxu0 0
  %3843 = vmatpush1.bf16.xpose.msra.mxu0 0
  %3844 = vmatprep.subr.bf16.mxu0 0
  %3845 = vmatpush1.bf16.xpose.msra.mxu0 0
  %3846 = vmatprep.subr.bf16.mxu0 0
  %3847 = vmatpush1.bf16.xpose.msra.mxu0 0
  %3848 = vmatprep.subr.bf16.mxu0 0
  %3849 = vmatpush1.bf16.xpose.msra.mxu0 0
  %3850 = vmatprep.subr.bf16.mxu0 0
  %3851 = vmatpush1.bf16.xpose.msra.mxu0 0
  %3852 = vmatprep.subr.bf16.mxu0 0
  %3853 = vmatpush1.bf16.xpose.msra.mxu0 0
  %3854 = vmatprep.subr.bf16.mxu0 0
  %3855 = vmatpush1.bf16.xpose.msra.mxu0 0
  %3856 = vmatprep.subr.bf16.mxu0 0
  %3857 = vmatpush1.bf16.xpose.msra.mxu0 0
  %3858 = vmatprep.subr.bf16.mxu0 0
  %3859 = vmatpush1.bf16.xpose.msra.mxu0 0
  %3860 = vmatprep.subr.bf16.mxu0 0
  %3861 = vmatpush1.bf16.xpose.msra.mxu0 0
  %3862 = vmatprep.subr.bf16.mxu0 0
  %3863 = vmatpush1.bf16.xpose.msra.mxu0 0
  %3864 = vmatprep.subr.bf16.mxu0 0
  %3865 = vmatpush1.bf16.xpose.msra.mxu0 0
  %3866 = vmatprep.mubr.bf16.mxu0 %v3816
  %3867 = vmatmul.mubr.bf16.gmra.mrb[0].mxu0 %v3815
  %v3868 = vpop.f32.mrb[0].mxu0
  %v3869 = vadd.f32 0.0, %v3868
  %v3870 = vpop.f32.mrb[0].mxu0
  %v3871 = vpop.f32.mrb[0].mxu0
  %v3872 = vadd.f32 0.0, %v3871
  %v3873 = vpop.f32.mrb[0].mxu0
  %3874 = vmatprep.mubr.bf16.mxu0 %v3818
  %3875 = vmatmul.mubr.bf16.gmra.mrb[0].mxu0 %v3817
  %v3876 = vpop.f32.mrb[0].mxu0
  %v3877 = vadd.f32 0.0, %v3876
  %v3878 = vpop.f32.mrb[0].mxu0
  %v3879 = vpop.f32.mrb[0].mxu0
  %v3880 = vadd.f32 0.0, %v3879
  %v3881 = vpop.f32.mrb[0].mxu0
  %3882 = vdwg.mxu0
  %v3883 = vsel %vm97, %v3869, -inf
  %v3884 = vsel %vm97, %v3872, -inf
  %v3885 = vsel %vm97, %v3877, -inf
  %v3886 = vsel %vm97, %v3880, -inf
  %v3887 = vmax.f32 %v3883, %v3884
  %v3888 = vmax.f32 %v3885, %v3886
  %v3889 = vmax.f32 %v3887, %v3888
  %3891 = vrot.lane.b32.xlu0 %v3889, 24
  %v3892 = vpop.permute.xlu0 %3891
  %3894 = vst.msk [vmem:[%s2 + $0x8] sm:$0xff] %vm704, %v3892
  %s3895 = scalar_lea.vmem %s0, 1248
  %v3896 = vld [vmem:[%s3895] sm:$0xff]
  %v3897 = vld [vmem:[%s3895 + $0x8] sm:$0xff]
  %v3898 = vld [vmem:[%s3895 + $0x10] sm:$0xff]
  %v3899 = vld [vmem:[%s3895 + $0x18] sm:$0xff]
  %s3900 = scalar_lea.vmem %s1, 156
  %v3901 = vld [vmem:[%s3900] sm:$0xf]
  %v3906 = vunpack.c.l.b16 %v3896
  %v3907 = vunpack.c.h.b16 %v3896
  %v3908 = vunpack.c.l.b16 %v3897
  %v3909 = vunpack.c.h.b16 %v3897
  %v3910 = vunpack.c.l.b16 %v3898
  %v3911 = vunpack.c.h.b16 %v3898
  %v3912 = vunpack.c.l.b16 %v3899
  %v3913 = vunpack.c.h.b16 %v3899
  %v3914 = vpack.c.b16 %v3908, %v3906
  %v3915 = vpack.c.b16 %v3909, %v3907
  %v3916 = vpack.c.b16 %v3912, %v3910
  %v3917 = vpack.c.b16 %v3913, %v3911
  %v3924 = vunpack.c.l.s4 1983009808
  %v3925 = vunpack.c.0.s8 %v3924
  %v3926 = vlaneseq
  %v3927 = vshrl.u32 %v3926, 7
  %v3928 = vsub.s32 %v3925, %v3927
  %v3929 = vrot.slane %v3901, %v3928
  %v3930 = vcombine.high %v3929, %v3929
  %3933 = vmatprep.subr.bf16.mxu0 %v3930
  %3934 = vmatpush1.bf16.xpose.msra.mxu0 %v3929
  %3935 = vmatprep.subr.bf16.mxu0 0
  %3936 = vmatpush1.bf16.xpose.msra.mxu0 0
  %3937 = vmatprep.subr.bf16.mxu0 0
  %3938 = vmatpush1.bf16.xpose.msra.mxu0 0
  %3939 = vmatprep.subr.bf16.mxu0 0
  %3940 = vmatpush1.bf16.xpose.msra.mxu0 0
  %3941 = vmatprep.subr.bf16.mxu0 0
  %3942 = vmatpush1.bf16.xpose.msra.mxu0 0
  %3943 = vmatprep.subr.bf16.mxu0 0
  %3944 = vmatpush1.bf16.xpose.msra.mxu0 0
  %3945 = vmatprep.subr.bf16.mxu0 0
  %3946 = vmatpush1.bf16.xpose.msra.mxu0 0
  %3947 = vmatprep.subr.bf16.mxu0 0
  %3948 = vmatpush1.bf16.xpose.msra.mxu0 0
  %3949 = vmatprep.subr.bf16.mxu0 0
  %3950 = vmatpush1.bf16.xpose.msra.mxu0 0
  %3951 = vmatprep.subr.bf16.mxu0 0
  %3952 = vmatpush1.bf16.xpose.msra.mxu0 0
  %3953 = vmatprep.subr.bf16.mxu0 0
  %3954 = vmatpush1.bf16.xpose.msra.mxu0 0
  %3955 = vmatprep.subr.bf16.mxu0 0
  %3956 = vmatpush1.bf16.xpose.msra.mxu0 0
  %3957 = vmatprep.subr.bf16.mxu0 0
  %3958 = vmatpush1.bf16.xpose.msra.mxu0 0
  %3959 = vmatprep.subr.bf16.mxu0 0
  %3960 = vmatpush1.bf16.xpose.msra.mxu0 0
  %3961 = vmatprep.subr.bf16.mxu0 0
  %3962 = vmatpush1.bf16.xpose.msra.mxu0 0
  %3963 = vmatprep.subr.bf16.mxu0 0
  %3964 = vmatpush1.bf16.xpose.msra.mxu0 0
  %3965 = vmatprep.mubr.bf16.mxu0 %v3915
  %3966 = vmatmul.mubr.bf16.gmra.mrb[0].mxu0 %v3914
  %v3967 = vpop.f32.mrb[0].mxu0
  %v3968 = vadd.f32 0.0, %v3967
  %v3969 = vpop.f32.mrb[0].mxu0
  %v3970 = vpop.f32.mrb[0].mxu0
  %v3971 = vadd.f32 0.0, %v3970
  %v3972 = vpop.f32.mrb[0].mxu0
  %3973 = vmatprep.mubr.bf16.mxu0 %v3917
  %3974 = vmatmul.mubr.bf16.gmra.mrb[0].mxu0 %v3916
  %v3975 = vpop.f32.mrb[0].mxu0
  %v3976 = vadd.f32 0.0, %v3975
  %v3977 = vpop.f32.mrb[0].mxu0
  %v3978 = vpop.f32.mrb[0].mxu0
  %v3979 = vadd.f32 0.0, %v3978
  %v3980 = vpop.f32.mrb[0].mxu0
  %3981 = vdwg.mxu0
  %v3982 = vsel %vm97, %v3968, -inf
  %v3983 = vsel %vm97, %v3971, -inf
  %v3984 = vsel %vm97, %v3976, -inf
  %v3985 = vsel %vm97, %v3979, -inf
  %v3986 = vmax.f32 %v3982, %v3983
  %v3987 = vmax.f32 %v3984, %v3985
  %v3988 = vmax.f32 %v3986, %v3987
  %3990 = vrot.lane.b32.xlu0 %v3988, 28
  %v3991 = vpop.permute.xlu0 %3990
  %3993 = vst.msk [vmem:[%s2 + $0x8] sm:$0xff] %vm804, %v3991
  %s3994 = scalar_lea.vmem %s0, 1280
  %v3995 = vld [vmem:[%s3994] sm:$0xff]
  %v3996 = vld [vmem:[%s3994 + $0x8] sm:$0xff]
  %v3997 = vld [vmem:[%s3994 + $0x10] sm:$0xff]
  %v3998 = vld [vmem:[%s3994 + $0x18] sm:$0xff]
  %s3999 = scalar_lea.vmem %s1, 160
  %v4000 = vld [vmem:[%s3999] sm:$0xf]
  %v4005 = vunpack.c.l.b16 %v3995
  %v4006 = vunpack.c.h.b16 %v3995
  %v4007 = vunpack.c.l.b16 %v3996
  %v4008 = vunpack.c.h.b16 %v3996
  %v4009 = vunpack.c.l.b16 %v3997
  %v4010 = vunpack.c.h.b16 %v3997
  %v4011 = vunpack.c.l.b16 %v3998
  %v4012 = vunpack.c.h.b16 %v3998
  %v4013 = vpack.c.b16 %v4007, %v4005
  %v4014 = vpack.c.b16 %v4008, %v4006
  %v4015 = vpack.c.b16 %v4011, %v4009
  %v4016 = vpack.c.b16 %v4012, %v4010
  %v4023 = vunpack.c.l.s4 1983009808
  %v4024 = vunpack.c.0.s8 %v4023
  %v4025 = vlaneseq
  %v4026 = vshrl.u32 %v4025, 7
  %v4027 = vsub.s32 %v4024, %v4026
  %v4028 = vrot.slane %v4000, %v4027
  %v4029 = vcombine.high %v4028, %v4028
  %4032 = vmatprep.subr.bf16.mxu0 %v4029
  %4033 = vmatpush1.bf16.xpose.msra.mxu0 %v4028
  %4034 = vmatprep.subr.bf16.mxu0 0
  %4035 = vmatpush1.bf16.xpose.msra.mxu0 0
  %4036 = vmatprep.subr.bf16.mxu0 0
  %4037 = vmatpush1.bf16.xpose.msra.mxu0 0
  %4038 = vmatprep.subr.bf16.mxu0 0
  %4039 = vmatpush1.bf16.xpose.msra.mxu0 0
  %4040 = vmatprep.subr.bf16.mxu0 0
  %4041 = vmatpush1.bf16.xpose.msra.mxu0 0
  %4042 = vmatprep.subr.bf16.mxu0 0
  %4043 = vmatpush1.bf16.xpose.msra.mxu0 0
  %4044 = vmatprep.subr.bf16.mxu0 0
  %4045 = vmatpush1.bf16.xpose.msra.mxu0 0
  %4046 = vmatprep.subr.bf16.mxu0 0
  %4047 = vmatpush1.bf16.xpose.msra.mxu0 0
  %4048 = vmatprep.subr.bf16.mxu0 0
  %4049 = vmatpush1.bf16.xpose.msra.mxu0 0
  %4050 = vmatprep.subr.bf16.mxu0 0
  %4051 = vmatpush1.bf16.xpose.msra.mxu0 0
  %4052 = vmatprep.subr.bf16.mxu0 0
  %4053 = vmatpush1.bf16.xpose.msra.mxu0 0
  %4054 = vmatprep.subr.bf16.mxu0 0
  %4055 = vmatpush1.bf16.xpose.msra.mxu0 0
  %4056 = vmatprep.subr.bf16.mxu0 0
  %4057 = vmatpush1.bf16.xpose.msra.mxu0 0
  %4058 = vmatprep.subr.bf16.mxu0 0
  %4059 = vmatpush1.bf16.xpose.msra.mxu0 0
  %4060 = vmatprep.subr.bf16.mxu0 0
  %4061 = vmatpush1.bf16.xpose.msra.mxu0 0
  %4062 = vmatprep.subr.bf16.mxu0 0
  %4063 = vmatpush1.bf16.xpose.msra.mxu0 0
  %4064 = vmatprep.mubr.bf16.mxu0 %v4014
  %4065 = vmatmul.mubr.bf16.gmra.mrb[0].mxu0 %v4013
  %v4066 = vpop.f32.mrb[0].mxu0
  %v4067 = vadd.f32 0.0, %v4066
  %v4068 = vpop.f32.mrb[0].mxu0
  %v4069 = vpop.f32.mrb[0].mxu0
  %v4070 = vadd.f32 0.0, %v4069
  %v4071 = vpop.f32.mrb[0].mxu0
  %4072 = vmatprep.mubr.bf16.mxu0 %v4016
  %4073 = vmatmul.mubr.bf16.gmra.mrb[0].mxu0 %v4015
  %v4074 = vpop.f32.mrb[0].mxu0
  %v4075 = vadd.f32 0.0, %v4074
  %v4076 = vpop.f32.mrb[0].mxu0
  %v4077 = vpop.f32.mrb[0].mxu0
  %v4078 = vadd.f32 0.0, %v4077
  %v4079 = vpop.f32.mrb[0].mxu0
  %4080 = vdwg.mxu0
  %v4081 = vsel %vm97, %v4067, -inf
  %v4082 = vsel %vm97, %v4070, -inf
  %v4083 = vsel %vm97, %v4075, -inf
  %v4084 = vsel %vm97, %v4078, -inf
  %v4085 = vmax.f32 %v4081, %v4082
  %v4086 = vmax.f32 %v4083, %v4084
  %v4087 = vmax.f32 %v4085, %v4086
  %4089 = vrot.lane.b32.xlu0 %v4087, 32
  %v4090 = vpop.permute.xlu0 %4089
  %4092 = vst.msk [vmem:[%s2 + $0x8] sm:$0xff] %vm904, %v4090
  %s4093 = scalar_lea.vmem %s0, 1312
  %v4094 = vld [vmem:[%s4093] sm:$0xff]
  %v4095 = vld [vmem:[%s4093 + $0x8] sm:$0xff]
  %v4096 = vld [vmem:[%s4093 + $0x10] sm:$0xff]
  %v4097 = vld [vmem:[%s4093 + $0x18] sm:$0xff]
  %s4098 = scalar_lea.vmem %s1, 164
  %v4099 = vld [vmem:[%s4098] sm:$0xf]
  %v4104 = vunpack.c.l.b16 %v4094
  %v4105 = vunpack.c.h.b16 %v4094
  %v4106 = vunpack.c.l.b16 %v4095
  %v4107 = vunpack.c.h.b16 %v4095
  %v4108 = vunpack.c.l.b16 %v4096
  %v4109 = vunpack.c.h.b16 %v4096
  %v4110 = vunpack.c.l.b16 %v4097
  %v4111 = vunpack.c.h.b16 %v4097
  %v4112 = vpack.c.b16 %v4106, %v4104
  %v4113 = vpack.c.b16 %v4107, %v4105
  %v4114 = vpack.c.b16 %v4110, %v4108
  %v4115 = vpack.c.b16 %v4111, %v4109
  %v4122 = vunpack.c.l.s4 1983009808
  %v4123 = vunpack.c.0.s8 %v4122
  %v4124 = vlaneseq
  %v4125 = vshrl.u32 %v4124, 7
  %v4126 = vsub.s32 %v4123, %v4125
  %v4127 = vrot.slane %v4099, %v4126
  %v4128 = vcombine.high %v4127, %v4127
  %4131 = vmatprep.subr.bf16.mxu0 %v4128
  %4132 = vmatpush1.bf16.xpose.msra.mxu0 %v4127
  %4133 = vmatprep.subr.bf16.mxu0 0
  %4134 = vmatpush1.bf16.xpose.msra.mxu0 0
  %4135 = vmatprep.subr.bf16.mxu0 0
  %4136 = vmatpush1.bf16.xpose.msra.mxu0 0
  %4137 = vmatprep.subr.bf16.mxu0 0
  %4138 = vmatpush1.bf16.xpose.msra.mxu0 0
  %4139 = vmatprep.subr.bf16.mxu0 0
  %4140 = vmatpush1.bf16.xpose.msra.mxu0 0
  %4141 = vmatprep.subr.bf16.mxu0 0
  %4142 = vmatpush1.bf16.xpose.msra.mxu0 0
  %4143 = vmatprep.subr.bf16.mxu0 0
  %4144 = vmatpush1.bf16.xpose.msra.mxu0 0
  %4145 = vmatprep.subr.bf16.mxu0 0
  %4146 = vmatpush1.bf16.xpose.msra.mxu0 0
  %4147 = vmatprep.subr.bf16.mxu0 0
  %4148 = vmatpush1.bf16.xpose.msra.mxu0 0
  %4149 = vmatprep.subr.bf16.mxu0 0
  %4150 = vmatpush1.bf16.xpose.msra.mxu0 0
  %4151 = vmatprep.subr.bf16.mxu0 0
  %4152 = vmatpush1.bf16.xpose.msra.mxu0 0
  %4153 = vmatprep.subr.bf16.mxu0 0
  %4154 = vmatpush1.bf16.xpose.msra.mxu0 0
  %4155 = vmatprep.subr.bf16.mxu0 0
  %4156 = vmatpush1.bf16.xpose.msra.mxu0 0
  %4157 = vmatprep.subr.bf16.mxu0 0
  %4158 = vmatpush1.bf16.xpose.msra.mxu0 0
  %4159 = vmatprep.subr.bf16.mxu0 0
  %4160 = vmatpush1.bf16.xpose.msra.mxu0 0
  %4161 = vmatprep.subr.bf16.mxu0 0
  %4162 = vmatpush1.bf16.xpose.msra.mxu0 0
  %4163 = vmatprep.mubr.bf16.mxu0 %v4113
  %4164 = vmatmul.mubr.bf16.gmra.mrb[0].mxu0 %v4112
  %v4165 = vpop.f32.mrb[0].mxu0
  %v4166 = vadd.f32 0.0, %v4165
  %v4167 = vpop.f32.mrb[0].mxu0
  %v4168 = vpop.f32.mrb[0].mxu0
  %v4169 = vadd.f32 0.0, %v4168
  %v4170 = vpop.f32.mrb[0].mxu0
  %4171 = vmatprep.mubr.bf16.mxu0 %v4115
  %4172 = vmatmul.mubr.bf16.gmra.mrb[0].mxu0 %v4114
  %v4173 = vpop.f32.mrb[0].mxu0
  %v4174 = vadd.f32 0.0, %v4173
  %v4175 = vpop.f32.mrb[0].mxu0
  %v4176 = vpop.f32.mrb[0].mxu0
  %v4177 = vadd.f32 0.0, %v4176
  %v4178 = vpop.f32.mrb[0].mxu0
  %4179 = vdwg.mxu0
  %v4180 = vsel %vm97, %v4166, -inf
  %v4181 = vsel %vm97, %v4169, -inf
  %v4182 = vsel %vm97, %v4174, -inf
  %v4183 = vsel %vm97, %v4177, -inf
  %v4184 = vmax.f32 %v4180, %v4181
  %v4185 = vmax.f32 %v4182, %v4183
  %v4186 = vmax.f32 %v4184, %v4185
  %4188 = vrot.lane.b32.xlu0 %v4186, 36
  %v4189 = vpop.permute.xlu0 %4188
  %4191 = vst.msk [vmem:[%s2 + $0x8] sm:$0xff] %vm1004, %v4189
  %s4192 = scalar_lea.vmem %s0, 1344
  %v4193 = vld [vmem:[%s4192] sm:$0xff]
  %v4194 = vld [vmem:[%s4192 + $0x8] sm:$0xff]
  %v4195 = vld [vmem:[%s4192 + $0x10] sm:$0xff]
  %v4196 = vld [vmem:[%s4192 + $0x18] sm:$0xff]
  %s4197 = scalar_lea.vmem %s1, 168
  %v4198 = vld [vmem:[%s4197] sm:$0xf]
  %v4203 = vunpack.c.l.b16 %v4193
  %v4204 = vunpack.c.h.b16 %v4193
  %v4205 = vunpack.c.l.b16 %v4194
  %v4206 = vunpack.c.h.b16 %v4194
  %v4207 = vunpack.c.l.b16 %v4195
  %v4208 = vunpack.c.h.b16 %v4195
  %v4209 = vunpack.c.l.b16 %v4196
  %v4210 = vunpack.c.h.b16 %v4196
  %v4211 = vpack.c.b16 %v4205, %v4203
  %v4212 = vpack.c.b16 %v4206, %v4204
  %v4213 = vpack.c.b16 %v4209, %v4207
  %v4214 = vpack.c.b16 %v4210, %v4208
  %v4221 = vunpack.c.l.s4 1983009808
  %v4222 = vunpack.c.0.s8 %v4221
  %v4223 = vlaneseq
  %v4224 = vshrl.u32 %v4223, 7
  %v4225 = vsub.s32 %v4222, %v4224
  %v4226 = vrot.slane %v4198, %v4225
  %v4227 = vcombine.high %v4226, %v4226
  %4230 = vmatprep.subr.bf16.mxu0 %v4227
  %4231 = vmatpush1.bf16.xpose.msra.mxu0 %v4226
  %4232 = vmatprep.subr.bf16.mxu0 0
  %4233 = vmatpush1.bf16.xpose.msra.mxu0 0
  %4234 = vmatprep.subr.bf16.mxu0 0
  %4235 = vmatpush1.bf16.xpose.msra.mxu0 0
  %4236 = vmatprep.subr.bf16.mxu0 0
  %4237 = vmatpush1.bf16.xpose.msra.mxu0 0
  %4238 = vmatprep.subr.bf16.mxu0 0
  %4239 = vmatpush1.bf16.xpose.msra.mxu0 0
  %4240 = vmatprep.subr.bf16.mxu0 0
  %4241 = vmatpush1.bf16.xpose.msra.mxu0 0
  %4242 = vmatprep.subr.bf16.mxu0 0
  %4243 = vmatpush1.bf16.xpose.msra.mxu0 0
  %4244 = vmatprep.subr.bf16.mxu0 0
  %4245 = vmatpush1.bf16.xpose.msra.mxu0 0
  %4246 = vmatprep.subr.bf16.mxu0 0
  %4247 = vmatpush1.bf16.xpose.msra.mxu0 0
  %4248 = vmatprep.subr.bf16.mxu0 0
  %4249 = vmatpush1.bf16.xpose.msra.mxu0 0
  %4250 = vmatprep.subr.bf16.mxu0 0
  %4251 = vmatpush1.bf16.xpose.msra.mxu0 0
  %4252 = vmatprep.subr.bf16.mxu0 0
  %4253 = vmatpush1.bf16.xpose.msra.mxu0 0
  %4254 = vmatprep.subr.bf16.mxu0 0
  %4255 = vmatpush1.bf16.xpose.msra.mxu0 0
  %4256 = vmatprep.subr.bf16.mxu0 0
  %4257 = vmatpush1.bf16.xpose.msra.mxu0 0
  %4258 = vmatprep.subr.bf16.mxu0 0
  %4259 = vmatpush1.bf16.xpose.msra.mxu0 0
  %4260 = vmatprep.subr.bf16.mxu0 0
  %4261 = vmatpush1.bf16.xpose.msra.mxu0 0
  %4262 = vmatprep.mubr.bf16.mxu0 %v4212
  %4263 = vmatmul.mubr.bf16.gmra.mrb[0].mxu0 %v4211
  %v4264 = vpop.f32.mrb[0].mxu0
  %v4265 = vadd.f32 0.0, %v4264
  %v4266 = vpop.f32.mrb[0].mxu0
  %v4267 = vpop.f32.mrb[0].mxu0
  %v4268 = vadd.f32 0.0, %v4267
  %v4269 = vpop.f32.mrb[0].mxu0
  %4270 = vmatprep.mubr.bf16.mxu0 %v4214
  %4271 = vmatmul.mubr.bf16.gmra.mrb[0].mxu0 %v4213
  %v4272 = vpop.f32.mrb[0].mxu0
  %v4273 = vadd.f32 0.0, %v4272
  %v4274 = vpop.f32.mrb[0].mxu0
  %v4275 = vpop.f32.mrb[0].mxu0
  %v4276 = vadd.f32 0.0, %v4275
  %v4277 = vpop.f32.mrb[0].mxu0
  %4278 = vdwg.mxu0
  %v4279 = vsel %vm97, %v4265, -inf
  %v4280 = vsel %vm97, %v4268, -inf
  %v4281 = vsel %vm97, %v4273, -inf
  %v4282 = vsel %vm97, %v4276, -inf
  %v4283 = vmax.f32 %v4279, %v4280
  %v4284 = vmax.f32 %v4281, %v4282
  %v4285 = vmax.f32 %v4283, %v4284
  %4287 = vrot.lane.b32.xlu0 %v4285, 40
  %v4288 = vpop.permute.xlu0 %4287
  %4290 = vst.msk [vmem:[%s2 + $0x8] sm:$0xff] %vm1104, %v4288
  %s4291 = scalar_lea.vmem %s0, 1376
  %v4292 = vld [vmem:[%s4291] sm:$0xff]
  %v4293 = vld [vmem:[%s4291 + $0x8] sm:$0xff]
  %v4294 = vld [vmem:[%s4291 + $0x10] sm:$0xff]
  %v4295 = vld [vmem:[%s4291 + $0x18] sm:$0xff]
  %s4296 = scalar_lea.vmem %s1, 172
  %v4297 = vld [vmem:[%s4296] sm:$0xf]
  %v4302 = vunpack.c.l.b16 %v4292
  %v4303 = vunpack.c.h.b16 %v4292
  %v4304 = vunpack.c.l.b16 %v4293
  %v4305 = vunpack.c.h.b16 %v4293
  %v4306 = vunpack.c.l.b16 %v4294
  %v4307 = vunpack.c.h.b16 %v4294
  %v4308 = vunpack.c.l.b16 %v4295
  %v4309 = vunpack.c.h.b16 %v4295
  %v4310 = vpack.c.b16 %v4304, %v4302
  %v4311 = vpack.c.b16 %v4305, %v4303
  %v4312 = vpack.c.b16 %v4308, %v4306
  %v4313 = vpack.c.b16 %v4309, %v4307
  %v4320 = vunpack.c.l.s4 1983009808
  %v4321 = vunpack.c.0.s8 %v4320
  %v4322 = vlaneseq
  %v4323 = vshrl.u32 %v4322, 7
  %v4324 = vsub.s32 %v4321, %v4323
  %v4325 = vrot.slane %v4297, %v4324
  %v4326 = vcombine.high %v4325, %v4325
  %4329 = vmatprep.subr.bf16.mxu0 %v4326
  %4330 = vmatpush1.bf16.xpose.msra.mxu0 %v4325
  %4331 = vmatprep.subr.bf16.mxu0 0
  %4332 = vmatpush1.bf16.xpose.msra.mxu0 0
  %4333 = vmatprep.subr.bf16.mxu0 0
  %4334 = vmatpush1.bf16.xpose.msra.mxu0 0
  %4335 = vmatprep.subr.bf16.mxu0 0
  %4336 = vmatpush1.bf16.xpose.msra.mxu0 0
  %4337 = vmatprep.subr.bf16.mxu0 0
  %4338 = vmatpush1.bf16.xpose.msra.mxu0 0
  %4339 = vmatprep.subr.bf16.mxu0 0
  %4340 = vmatpush1.bf16.xpose.msra.mxu0 0
  %4341 = vmatprep.subr.bf16.mxu0 0
  %4342 = vmatpush1.bf16.xpose.msra.mxu0 0
  %4343 = vmatprep.subr.bf16.mxu0 0
  %4344 = vmatpush1.bf16.xpose.msra.mxu0 0
  %4345 = vmatprep.subr.bf16.mxu0 0
  %4346 = vmatpush1.bf16.xpose.msra.mxu0 0
  %4347 = vmatprep.subr.bf16.mxu0 0
  %4348 = vmatpush1.bf16.xpose.msra.mxu0 0
  %4349 = vmatprep.subr.bf16.mxu0 0
  %4350 = vmatpush1.bf16.xpose.msra.mxu0 0
  %4351 = vmatprep.subr.bf16.mxu0 0
  %4352 = vmatpush1.bf16.xpose.msra.mxu0 0
  %4353 = vmatprep.subr.bf16.mxu0 0
  %4354 = vmatpush1.bf16.xpose.msra.mxu0 0
  %4355 = vmatprep.subr.bf16.mxu0 0
  %4356 = vmatpush1.bf16.xpose.msra.mxu0 0
  %4357 = vmatprep.subr.bf16.mxu0 0
  %4358 = vmatpush1.bf16.xpose.msra.mxu0 0
  %4359 = vmatprep.subr.bf16.mxu0 0
  %4360 = vmatpush1.bf16.xpose.msra.mxu0 0
  %4361 = vmatprep.mubr.bf16.mxu0 %v4311
  %4362 = vmatmul.mubr.bf16.gmra.mrb[0].mxu0 %v4310
  %v4363 = vpop.f32.mrb[0].mxu0
  %v4364 = vadd.f32 0.0, %v4363
  %v4365 = vpop.f32.mrb[0].mxu0
  %v4366 = vpop.f32.mrb[0].mxu0
  %v4367 = vadd.f32 0.0, %v4366
  %v4368 = vpop.f32.mrb[0].mxu0
  %4369 = vmatprep.mubr.bf16.mxu0 %v4313
  %4370 = vmatmul.mubr.bf16.gmra.mrb[0].mxu0 %v4312
  %v4371 = vpop.f32.mrb[0].mxu0
  %v4372 = vadd.f32 0.0, %v4371
  %v4373 = vpop.f32.mrb[0].mxu0
  %v4374 = vpop.f32.mrb[0].mxu0
  %v4375 = vadd.f32 0.0, %v4374
  %v4376 = vpop.f32.mrb[0].mxu0
  %4377 = vdwg.mxu0
  %v4378 = vsel %vm97, %v4364, -inf
  %v4379 = vsel %vm97, %v4367, -inf
  %v4380 = vsel %vm97, %v4372, -inf
  %v4381 = vsel %vm97, %v4375, -inf
  %v4382 = vmax.f32 %v4378, %v4379
  %v4383 = vmax.f32 %v4380, %v4381
  %v4384 = vmax.f32 %v4382, %v4383
  %4386 = vrot.lane.b32.xlu0 %v4384, 44
  %v4387 = vpop.permute.xlu0 %4386
  %4389 = vst.msk [vmem:[%s2 + $0x8] sm:$0xff] %vm1204, %v4387
  %s4390 = scalar_lea.vmem %s0, 1408
  %v4391 = vld [vmem:[%s4390] sm:$0xff]
  %v4392 = vld [vmem:[%s4390 + $0x8] sm:$0xff]
  %v4393 = vld [vmem:[%s4390 + $0x10] sm:$0xff]
  %v4394 = vld [vmem:[%s4390 + $0x18] sm:$0xff]
  %s4395 = scalar_lea.vmem %s1, 176
  %v4396 = vld [vmem:[%s4395] sm:$0xf]
  %v4401 = vunpack.c.l.b16 %v4391
  %v4402 = vunpack.c.h.b16 %v4391
  %v4403 = vunpack.c.l.b16 %v4392
  %v4404 = vunpack.c.h.b16 %v4392
  %v4405 = vunpack.c.l.b16 %v4393
  %v4406 = vunpack.c.h.b16 %v4393
  %v4407 = vunpack.c.l.b16 %v4394
  %v4408 = vunpack.c.h.b16 %v4394
  %v4409 = vpack.c.b16 %v4403, %v4401
  %v4410 = vpack.c.b16 %v4404, %v4402
  %v4411 = vpack.c.b16 %v4407, %v4405
  %v4412 = vpack.c.b16 %v4408, %v4406
  %v4419 = vunpack.c.l.s4 1983009808
  %v4420 = vunpack.c.0.s8 %v4419
  %v4421 = vlaneseq
  %v4422 = vshrl.u32 %v4421, 7
  %v4423 = vsub.s32 %v4420, %v4422
  %v4424 = vrot.slane %v4396, %v4423
  %v4425 = vcombine.high %v4424, %v4424
  %4428 = vmatprep.subr.bf16.mxu0 %v4425
  %4429 = vmatpush1.bf16.xpose.msra.mxu0 %v4424
  %4430 = vmatprep.subr.bf16.mxu0 0
  %4431 = vmatpush1.bf16.xpose.msra.mxu0 0
  %4432 = vmatprep.subr.bf16.mxu0 0
  %4433 = vmatpush1.bf16.xpose.msra.mxu0 0
  %4434 = vmatprep.subr.bf16.mxu0 0
  %4435 = vmatpush1.bf16.xpose.msra.mxu0 0
  %4436 = vmatprep.subr.bf16.mxu0 0
  %4437 = vmatpush1.bf16.xpose.msra.mxu0 0
  %4438 = vmatprep.subr.bf16.mxu0 0
  %4439 = vmatpush1.bf16.xpose.msra.mxu0 0
  %4440 = vmatprep.subr.bf16.mxu0 0
  %4441 = vmatpush1.bf16.xpose.msra.mxu0 0
  %4442 = vmatprep.subr.bf16.mxu0 0
  %4443 = vmatpush1.bf16.xpose.msra.mxu0 0
  %4444 = vmatprep.subr.bf16.mxu0 0
  %4445 = vmatpush1.bf16.xpose.msra.mxu0 0
  %4446 = vmatprep.subr.bf16.mxu0 0
  %4447 = vmatpush1.bf16.xpose.msra.mxu0 0
  %4448 = vmatprep.subr.bf16.mxu0 0
  %4449 = vmatpush1.bf16.xpose.msra.mxu0 0
  %4450 = vmatprep.subr.bf16.mxu0 0
  %4451 = vmatpush1.bf16.xpose.msra.mxu0 0
  %4452 = vmatprep.subr.bf16.mxu0 0
  %4453 = vmatpush1.bf16.xpose.msra.mxu0 0
  %4454 = vmatprep.subr.bf16.mxu0 0
  %4455 = vmatpush1.bf16.xpose.msra.mxu0 0
  %4456 = vmatprep.subr.bf16.mxu0 0
  %4457 = vmatpush1.bf16.xpose.msra.mxu0 0
  %4458 = vmatprep.subr.bf16.mxu0 0
  %4459 = vmatpush1.bf16.xpose.msra.mxu0 0
  %4460 = vmatprep.mubr.bf16.mxu0 %v4410
  %4461 = vmatmul.mubr.bf16.gmra.mrb[0].mxu0 %v4409
  %v4462 = vpop.f32.mrb[0].mxu0
  %v4463 = vadd.f32 0.0, %v4462
  %v4464 = vpop.f32.mrb[0].mxu0
  %v4465 = vpop.f32.mrb[0].mxu0
  %v4466 = vadd.f32 0.0, %v4465
  %v4467 = vpop.f32.mrb[0].mxu0
  %4468 = vmatprep.mubr.bf16.mxu0 %v4412
  %4469 = vmatmul.mubr.bf16.gmra.mrb[0].mxu0 %v4411
  %v4470 = vpop.f32.mrb[0].mxu0
  %v4471 = vadd.f32 0.0, %v4470
  %v4472 = vpop.f32.mrb[0].mxu0
  %v4473 = vpop.f32.mrb[0].mxu0
  %v4474 = vadd.f32 0.0, %v4473
  %v4475 = vpop.f32.mrb[0].mxu0
  %4476 = vdwg.mxu0
  %v4477 = vsel %vm97, %v4463, -inf
  %v4478 = vsel %vm97, %v4466, -inf
  %v4479 = vsel %vm97, %v4471, -inf
  %v4480 = vsel %vm97, %v4474, -inf
  %v4481 = vmax.f32 %v4477, %v4478
  %v4482 = vmax.f32 %v4479, %v4480
  %v4483 = vmax.f32 %v4481, %v4482
  %4485 = vrot.lane.b32.xlu0 %v4483, 48
  %v4486 = vpop.permute.xlu0 %4485
  %4488 = vst.msk [vmem:[%s2 + $0x8] sm:$0xff] %vm1304, %v4486
  %s4489 = scalar_lea.vmem %s0, 1440
  %v4490 = vld [vmem:[%s4489] sm:$0xff]
  %v4491 = vld [vmem:[%s4489 + $0x8] sm:$0xff]
  %v4492 = vld [vmem:[%s4489 + $0x10] sm:$0xff]
  %v4493 = vld [vmem:[%s4489 + $0x18] sm:$0xff]
  %s4494 = scalar_lea.vmem %s1, 180
  %v4495 = vld [vmem:[%s4494] sm:$0xf]
  %v4500 = vunpack.c.l.b16 %v4490
  %v4501 = vunpack.c.h.b16 %v4490
  %v4502 = vunpack.c.l.b16 %v4491
  %v4503 = vunpack.c.h.b16 %v4491
  %v4504 = vunpack.c.l.b16 %v4492
  %v4505 = vunpack.c.h.b16 %v4492
  %v4506 = vunpack.c.l.b16 %v4493
  %v4507 = vunpack.c.h.b16 %v4493
  %v4508 = vpack.c.b16 %v4502, %v4500
  %v4509 = vpack.c.b16 %v4503, %v4501
  %v4510 = vpack.c.b16 %v4506, %v4504
  %v4511 = vpack.c.b16 %v4507, %v4505
  %v4518 = vunpack.c.l.s4 1983009808
  %v4519 = vunpack.c.0.s8 %v4518
  %v4520 = vlaneseq
  %v4521 = vshrl.u32 %v4520, 7
  %v4522 = vsub.s32 %v4519, %v4521
  %v4523 = vrot.slane %v4495, %v4522
  %v4524 = vcombine.high %v4523, %v4523
  %4527 = vmatprep.subr.bf16.mxu0 %v4524
  %4528 = vmatpush1.bf16.xpose.msra.mxu0 %v4523
  %4529 = vmatprep.subr.bf16.mxu0 0
  %4530 = vmatpush1.bf16.xpose.msra.mxu0 0
  %4531 = vmatprep.subr.bf16.mxu0 0
  %4532 = vmatpush1.bf16.xpose.msra.mxu0 0
  %4533 = vmatprep.subr.bf16.mxu0 0
  %4534 = vmatpush1.bf16.xpose.msra.mxu0 0
  %4535 = vmatprep.subr.bf16.mxu0 0
  %4536 = vmatpush1.bf16.xpose.msra.mxu0 0
  %4537 = vmatprep.subr.bf16.mxu0 0
  %4538 = vmatpush1.bf16.xpose.msra.mxu0 0
  %4539 = vmatprep.subr.bf16.mxu0 0
  %4540 = vmatpush1.bf16.xpose.msra.mxu0 0
  %4541 = vmatprep.subr.bf16.mxu0 0
  %4542 = vmatpush1.bf16.xpose.msra.mxu0 0
  %4543 = vmatprep.subr.bf16.mxu0 0
  %4544 = vmatpush1.bf16.xpose.msra.mxu0 0
  %4545 = vmatprep.subr.bf16.mxu0 0
  %4546 = vmatpush1.bf16.xpose.msra.mxu0 0
  %4547 = vmatprep.subr.bf16.mxu0 0
  %4548 = vmatpush1.bf16.xpose.msra.mxu0 0
  %4549 = vmatprep.subr.bf16.mxu0 0
  %4550 = vmatpush1.bf16.xpose.msra.mxu0 0
  %4551 = vmatprep.subr.bf16.mxu0 0
  %4552 = vmatpush1.bf16.xpose.msra.mxu0 0
  %4553 = vmatprep.subr.bf16.mxu0 0
  %4554 = vmatpush1.bf16.xpose.msra.mxu0 0
  %4555 = vmatprep.subr.bf16.mxu0 0
  %4556 = vmatpush1.bf16.xpose.msra.mxu0 0
  %4557 = vmatprep.subr.bf16.mxu0 0
  %4558 = vmatpush1.bf16.xpose.msra.mxu0 0
  %4559 = vmatprep.mubr.bf16.mxu0 %v4509
  %4560 = vmatmul.mubr.bf16.gmra.mrb[0].mxu0 %v4508
  %v4561 = vpop.f32.mrb[0].mxu0
  %v4562 = vadd.f32 0.0, %v4561
  %v4563 = vpop.f32.mrb[0].mxu0
  %v4564 = vpop.f32.mrb[0].mxu0
  %v4565 = vadd.f32 0.0, %v4564
  %v4566 = vpop.f32.mrb[0].mxu0
  %4567 = vmatprep.mubr.bf16.mxu0 %v4511
  %4568 = vmatmul.mubr.bf16.gmra.mrb[0].mxu0 %v4510
  %v4569 = vpop.f32.mrb[0].mxu0
  %v4570 = vadd.f32 0.0, %v4569
  %v4571 = vpop.f32.mrb[0].mxu0
  %v4572 = vpop.f32.mrb[0].mxu0
  %v4573 = vadd.f32 0.0, %v4572
  %v4574 = vpop.f32.mrb[0].mxu0
  %4575 = vdwg.mxu0
  %v4576 = vsel %vm97, %v4562, -inf
  %v4577 = vsel %vm97, %v4565, -inf
  %v4578 = vsel %vm97, %v4570, -inf
  %v4579 = vsel %vm97, %v4573, -inf
  %v4580 = vmax.f32 %v4576, %v4577
  %v4581 = vmax.f32 %v4578, %v4579
  %v4582 = vmax.f32 %v4580, %v4581
  %4584 = vrot.lane.b32.xlu0 %v4582, 52
  %v4585 = vpop.permute.xlu0 %4584
  %4587 = vst.msk [vmem:[%s2 + $0x8] sm:$0xff] %vm1404, %v4585
  %s4588 = scalar_lea.vmem %s0, 1472
  %v4589 = vld [vmem:[%s4588] sm:$0xff]
  %v4590 = vld [vmem:[%s4588 + $0x8] sm:$0xff]
  %v4591 = vld [vmem:[%s4588 + $0x10] sm:$0xff]
  %v4592 = vld [vmem:[%s4588 + $0x18] sm:$0xff]
  %s4593 = scalar_lea.vmem %s1, 184
  %v4594 = vld [vmem:[%s4593] sm:$0xf]
  %v4599 = vunpack.c.l.b16 %v4589
  %v4600 = vunpack.c.h.b16 %v4589
  %v4601 = vunpack.c.l.b16 %v4590
  %v4602 = vunpack.c.h.b16 %v4590
  %v4603 = vunpack.c.l.b16 %v4591
  %v4604 = vunpack.c.h.b16 %v4591
  %v4605 = vunpack.c.l.b16 %v4592
  %v4606 = vunpack.c.h.b16 %v4592
  %v4607 = vpack.c.b16 %v4601, %v4599
  %v4608 = vpack.c.b16 %v4602, %v4600
  %v4609 = vpack.c.b16 %v4605, %v4603
  %v4610 = vpack.c.b16 %v4606, %v4604
  %v4617 = vunpack.c.l.s4 1983009808
  %v4618 = vunpack.c.0.s8 %v4617
  %v4619 = vlaneseq
  %v4620 = vshrl.u32 %v4619, 7
  %v4621 = vsub.s32 %v4618, %v4620
  %v4622 = vrot.slane %v4594, %v4621
  %v4623 = vcombine.high %v4622, %v4622
  %4626 = vmatprep.subr.bf16.mxu0 %v4623
  %4627 = vmatpush1.bf16.xpose.msra.mxu0 %v4622
  %4628 = vmatprep.subr.bf16.mxu0 0
  %4629 = vmatpush1.bf16.xpose.msra.mxu0 0
  %4630 = vmatprep.subr.bf16.mxu0 0
  %4631 = vmatpush1.bf16.xpose.msra.mxu0 0
  %4632 = vmatprep.subr.bf16.mxu0 0
  %4633 = vmatpush1.bf16.xpose.msra.mxu0 0
  %4634 = vmatprep.subr.bf16.mxu0 0
  %4635 = vmatpush1.bf16.xpose.msra.mxu0 0
  %4636 = vmatprep.subr.bf16.mxu0 0
  %4637 = vmatpush1.bf16.xpose.msra.mxu0 0
  %4638 = vmatprep.subr.bf16.mxu0 0
  %4639 = vmatpush1.bf16.xpose.msra.mxu0 0
  %4640 = vmatprep.subr.bf16.mxu0 0
  %4641 = vmatpush1.bf16.xpose.msra.mxu0 0
  %4642 = vmatprep.subr.bf16.mxu0 0
  %4643 = vmatpush1.bf16.xpose.msra.mxu0 0
  %4644 = vmatprep.subr.bf16.mxu0 0
  %4645 = vmatpush1.bf16.xpose.msra.mxu0 0
  %4646 = vmatprep.subr.bf16.mxu0 0
  %4647 = vmatpush1.bf16.xpose.msra.mxu0 0
  %4648 = vmatprep.subr.bf16.mxu0 0
  %4649 = vmatpush1.bf16.xpose.msra.mxu0 0
  %4650 = vmatprep.subr.bf16.mxu0 0
  %4651 = vmatpush1.bf16.xpose.msra.mxu0 0
  %4652 = vmatprep.subr.bf16.mxu0 0
  %4653 = vmatpush1.bf16.xpose.msra.mxu0 0
  %4654 = vmatprep.subr.bf16.mxu0 0
  %4655 = vmatpush1.bf16.xpose.msra.mxu0 0
  %4656 = vmatprep.subr.bf16.mxu0 0
  %4657 = vmatpush1.bf16.xpose.msra.mxu0 0
  %4658 = vmatprep.mubr.bf16.mxu0 %v4608
  %4659 = vmatmul.mubr.bf16.gmra.mrb[0].mxu0 %v4607
  %v4660 = vpop.f32.mrb[0].mxu0
  %v4661 = vadd.f32 0.0, %v4660
  %v4662 = vpop.f32.mrb[0].mxu0
  %v4663 = vpop.f32.mrb[0].mxu0
  %v4664 = vadd.f32 0.0, %v4663
  %v4665 = vpop.f32.mrb[0].mxu0
  %4666 = vmatprep.mubr.bf16.mxu0 %v4610
  %4667 = vmatmul.mubr.bf16.gmra.mrb[0].mxu0 %v4609
  %v4668 = vpop.f32.mrb[0].mxu0
  %v4669 = vadd.f32 0.0, %v4668
  %v4670 = vpop.f32.mrb[0].mxu0
  %v4671 = vpop.f32.mrb[0].mxu0
  %v4672 = vadd.f32 0.0, %v4671
  %v4673 = vpop.f32.mrb[0].mxu0
  %4674 = vdwg.mxu0
  %v4675 = vsel %vm97, %v4661, -inf
  %v4676 = vsel %vm97, %v4664, -inf
  %v4677 = vsel %vm97, %v4669, -inf
  %v4678 = vsel %vm97, %v4672, -inf
  %v4679 = vmax.f32 %v4675, %v4676
  %v4680 = vmax.f32 %v4677, %v4678
  %v4681 = vmax.f32 %v4679, %v4680
  %4683 = vrot.lane.b32.xlu0 %v4681, 56
  %v4684 = vpop.permute.xlu0 %4683
  %4686 = vst.msk [vmem:[%s2 + $0x8] sm:$0xff] %vm1504, %v4684
  %s4687 = scalar_lea.vmem %s0, 1504
  %v4688 = vld [vmem:[%s4687] sm:$0xff]
  %v4689 = vld [vmem:[%s4687 + $0x8] sm:$0xff]
  %v4690 = vld [vmem:[%s4687 + $0x10] sm:$0xff]
  %v4691 = vld [vmem:[%s4687 + $0x18] sm:$0xff]
  %s4692 = scalar_lea.vmem %s1, 188
  %v4693 = vld [vmem:[%s4692] sm:$0xf]
  %v4698 = vunpack.c.l.b16 %v4688
  %v4699 = vunpack.c.h.b16 %v4688
  %v4700 = vunpack.c.l.b16 %v4689
  %v4701 = vunpack.c.h.b16 %v4689
  %v4702 = vunpack.c.l.b16 %v4690
  %v4703 = vunpack.c.h.b16 %v4690
  %v4704 = vunpack.c.l.b16 %v4691
  %v4705 = vunpack.c.h.b16 %v4691
  %v4706 = vpack.c.b16 %v4700, %v4698
  %v4707 = vpack.c.b16 %v4701, %v4699
  %v4708 = vpack.c.b16 %v4704, %v4702
  %v4709 = vpack.c.b16 %v4705, %v4703
  %v4716 = vunpack.c.l.s4 1983009808
  %v4717 = vunpack.c.0.s8 %v4716
  %v4718 = vlaneseq
  %v4719 = vshrl.u32 %v4718, 7
  %v4720 = vsub.s32 %v4717, %v4719
  %v4721 = vrot.slane %v4693, %v4720
  %v4722 = vcombine.high %v4721, %v4721
  %4725 = vmatprep.subr.bf16.mxu0 %v4722
  %4726 = vmatpush1.bf16.xpose.msra.mxu0 %v4721
  %4727 = vmatprep.subr.bf16.mxu0 0
  %4728 = vmatpush1.bf16.xpose.msra.mxu0 0
  %4729 = vmatprep.subr.bf16.mxu0 0
  %4730 = vmatpush1.bf16.xpose.msra.mxu0 0
  %4731 = vmatprep.subr.bf16.mxu0 0
  %4732 = vmatpush1.bf16.xpose.msra.mxu0 0
  %4733 = vmatprep.subr.bf16.mxu0 0
  %4734 = vmatpush1.bf16.xpose.msra.mxu0 0
  %4735 = vmatprep.subr.bf16.mxu0 0
  %4736 = vmatpush1.bf16.xpose.msra.mxu0 0
  %4737 = vmatprep.subr.bf16.mxu0 0
  %4738 = vmatpush1.bf16.xpose.msra.mxu0 0
  %4739 = vmatprep.subr.bf16.mxu0 0
  %4740 = vmatpush1.bf16.xpose.msra.mxu0 0
  %4741 = vmatprep.subr.bf16.mxu0 0
  %4742 = vmatpush1.bf16.xpose.msra.mxu0 0
  %4743 = vmatprep.subr.bf16.mxu0 0
  %4744 = vmatpush1.bf16.xpose.msra.mxu0 0
  %4745 = vmatprep.subr.bf16.mxu0 0
  %4746 = vmatpush1.bf16.xpose.msra.mxu0 0
  %4747 = vmatprep.subr.bf16.mxu0 0
  %4748 = vmatpush1.bf16.xpose.msra.mxu0 0
  %4749 = vmatprep.subr.bf16.mxu0 0
  %4750 = vmatpush1.bf16.xpose.msra.mxu0 0
  %4751 = vmatprep.subr.bf16.mxu0 0
  %4752 = vmatpush1.bf16.xpose.msra.mxu0 0
  %4753 = vmatprep.subr.bf16.mxu0 0
  %4754 = vmatpush1.bf16.xpose.msra.mxu0 0
  %4755 = vmatprep.subr.bf16.mxu0 0
  %4756 = vmatpush1.bf16.xpose.msra.mxu0 0
  %4757 = vmatprep.mubr.bf16.mxu0 %v4707
  %4758 = vmatmul.mubr.bf16.gmra.mrb[0].mxu0 %v4706
  %v4759 = vpop.f32.mrb[0].mxu0
  %v4760 = vadd.f32 0.0, %v4759
  %v4761 = vpop.f32.mrb[0].mxu0
  %v4762 = vpop.f32.mrb[0].mxu0
  %v4763 = vadd.f32 0.0, %v4762
  %v4764 = vpop.f32.mrb[0].mxu0
  %4765 = vmatprep.mubr.bf16.mxu0 %v4709
  %4766 = vmatmul.mubr.bf16.gmra.mrb[0].mxu0 %v4708
  %v4767 = vpop.f32.mrb[0].mxu0
  %v4768 = vadd.f32 0.0, %v4767
  %v4769 = vpop.f32.mrb[0].mxu0
  %v4770 = vpop.f32.mrb[0].mxu0
  %v4771 = vadd.f32 0.0, %v4770
  %v4772 = vpop.f32.mrb[0].mxu0
  %4773 = vdwg.mxu0
  %v4774 = vsel %vm97, %v4760, -inf
  %v4775 = vsel %vm97, %v4763, -inf
  %v4776 = vsel %vm97, %v4768, -inf
  %v4777 = vsel %vm97, %v4771, -inf
  %v4778 = vmax.f32 %v4774, %v4775
  %v4779 = vmax.f32 %v4776, %v4777
  %v4780 = vmax.f32 %v4778, %v4779
  %4782 = vrot.lane.b32.xlu0 %v4780, 60
  %v4783 = vpop.permute.xlu0 %4782
  %4785 = vst.msk [vmem:[%s2 + $0x8] sm:$0xff] %vm1604, %v4783
  %s4786 = scalar_lea.vmem %s0, 1536
  %v4787 = vld [vmem:[%s4786] sm:$0xff]
  %v4788 = vld [vmem:[%s4786 + $0x8] sm:$0xff]
  %v4789 = vld [vmem:[%s4786 + $0x10] sm:$0xff]
  %v4790 = vld [vmem:[%s4786 + $0x18] sm:$0xff]
  %s4791 = scalar_lea.vmem %s1, 192
  %v4792 = vld [vmem:[%s4791] sm:$0xf]
  %v4797 = vunpack.c.l.b16 %v4787
  %v4798 = vunpack.c.h.b16 %v4787
  %v4799 = vunpack.c.l.b16 %v4788
  %v4800 = vunpack.c.h.b16 %v4788
  %v4801 = vunpack.c.l.b16 %v4789
  %v4802 = vunpack.c.h.b16 %v4789
  %v4803 = vunpack.c.l.b16 %v4790
  %v4804 = vunpack.c.h.b16 %v4790
  %v4805 = vpack.c.b16 %v4799, %v4797
  %v4806 = vpack.c.b16 %v4800, %v4798
  %v4807 = vpack.c.b16 %v4803, %v4801
  %v4808 = vpack.c.b16 %v4804, %v4802
  %v4815 = vunpack.c.l.s4 1983009808
  %v4816 = vunpack.c.0.s8 %v4815
  %v4817 = vlaneseq
  %v4818 = vshrl.u32 %v4817, 7
  %v4819 = vsub.s32 %v4816, %v4818
  %v4820 = vrot.slane %v4792, %v4819
  %v4821 = vcombine.high %v4820, %v4820
  %4824 = vmatprep.subr.bf16.mxu0 %v4821
  %4825 = vmatpush1.bf16.xpose.msra.mxu0 %v4820
  %4826 = vmatprep.subr.bf16.mxu0 0
  %4827 = vmatpush1.bf16.xpose.msra.mxu0 0
  %4828 = vmatprep.subr.bf16.mxu0 0
  %4829 = vmatpush1.bf16.xpose.msra.mxu0 0
  %4830 = vmatprep.subr.bf16.mxu0 0
  %4831 = vmatpush1.bf16.xpose.msra.mxu0 0
  %4832 = vmatprep.subr.bf16.mxu0 0
  %4833 = vmatpush1.bf16.xpose.msra.mxu0 0
  %4834 = vmatprep.subr.bf16.mxu0 0
  %4835 = vmatpush1.bf16.xpose.msra.mxu0 0
  %4836 = vmatprep.subr.bf16.mxu0 0
  %4837 = vmatpush1.bf16.xpose.msra.mxu0 0
  %4838 = vmatprep.subr.bf16.mxu0 0
  %4839 = vmatpush1.bf16.xpose.msra.mxu0 0
  %4840 = vmatprep.subr.bf16.mxu0 0
  %4841 = vmatpush1.bf16.xpose.msra.mxu0 0
  %4842 = vmatprep.subr.bf16.mxu0 0
  %4843 = vmatpush1.bf16.xpose.msra.mxu0 0
  %4844 = vmatprep.subr.bf16.mxu0 0
  %4845 = vmatpush1.bf16.xpose.msra.mxu0 0
  %4846 = vmatprep.subr.bf16.mxu0 0
  %4847 = vmatpush1.bf16.xpose.msra.mxu0 0
  %4848 = vmatprep.subr.bf16.mxu0 0
  %4849 = vmatpush1.bf16.xpose.msra.mxu0 0
  %4850 = vmatprep.subr.bf16.mxu0 0
  %4851 = vmatpush1.bf16.xpose.msra.mxu0 0
  %4852 = vmatprep.subr.bf16.mxu0 0
  %4853 = vmatpush1.bf16.xpose.msra.mxu0 0
  %4854 = vmatprep.subr.bf16.mxu0 0
  %4855 = vmatpush1.bf16.xpose.msra.mxu0 0
  %4856 = vmatprep.mubr.bf16.mxu0 %v4806
  %4857 = vmatmul.mubr.bf16.gmra.mrb[0].mxu0 %v4805
  %v4858 = vpop.f32.mrb[0].mxu0
  %v4859 = vadd.f32 0.0, %v4858
  %v4860 = vpop.f32.mrb[0].mxu0
  %v4861 = vpop.f32.mrb[0].mxu0
  %v4862 = vadd.f32 0.0, %v4861
  %v4863 = vpop.f32.mrb[0].mxu0
  %4864 = vmatprep.mubr.bf16.mxu0 %v4808
  %4865 = vmatmul.mubr.bf16.gmra.mrb[0].mxu0 %v4807
  %v4866 = vpop.f32.mrb[0].mxu0
  %v4867 = vadd.f32 0.0, %v4866
  %v4868 = vpop.f32.mrb[0].mxu0
  %v4869 = vpop.f32.mrb[0].mxu0
  %v4870 = vadd.f32 0.0, %v4869
  %v4871 = vpop.f32.mrb[0].mxu0
  %4872 = vdwg.mxu0
  %v4873 = vsel %vm97, %v4859, -inf
  %v4874 = vsel %vm97, %v4862, -inf
  %v4875 = vsel %vm97, %v4867, -inf
  %v4876 = vsel %vm97, %v4870, -inf
  %v4877 = vmax.f32 %v4873, %v4874
  %v4878 = vmax.f32 %v4875, %v4876
  %v4879 = vmax.f32 %v4877, %v4878
  %4881 = vrot.lane.b32.xlu0 %v4879, 64
  %v4882 = vpop.permute.xlu0 %4881
  %4884 = vst.msk [vmem:[%s2 + $0x8] sm:$0xff] %vm1704, %v4882
  // Predicated region
  $region10: #{ps_roi_align_pool.1} parent=0 // pred_check
    _
  $region11: #{ps_roi_align_pool.1} parent=0 // pred_check_branch
    %4886 = sbr.rel (0) target = $region13
  $region12: #{ps_roi_align_pool.1} parent=0 // pred_region
    _
  $region13: #{ps_roi_align_pool.1} parent=0 // pred_fallthru
    _
  // Predicated region
  $region14: #{ps_roi_align_pool.1} parent=0 // pred_check
    _
  $region15: #{ps_roi_align_pool.1} parent=0 // pred_check_branch
    %4888 = sbr.rel (0) target = $region17
  $region16: #{ps_roi_align_pool.1} parent=0 // pred_region
    _
  $region17: #{ps_roi_align_pool.1} parent=0 // pred_fallthru
    _

</llo_original>
